<compile_context>
chip_gen: v7x
topology: tpu7x:2x2x1
jax: 0.10.0
libtpu: 0.0.40
codegen_flags: <defaults>
</compile_context>

<pallas_src>
import numpy as np
import jax
import jax.numpy as jnp
from jax import lax
from jax.experimental import pallas as pl
from jax.experimental.pallas import tpu as pltpu


# ------------------------------ config -------------------------------------
class Config:
    sr = 16000
    mel = 80
    mel_win = 1024
    mel_hop = 256
    cutoff_lowpass = 60
    cutoff_highpass = 10000
    q_min = 2
    q_max = 5
    num_peak = 8
    formant_shift = 1.4
    pitch_shift = 2.0
    pitch_range = 1.5
    g_min = -12
    g_max = 12


def _round_up(x, m):
    return ((x + m - 1) // m) * m


# -------------------- parametric equalizer (tiny glue) ----------------------
def _biquad(a, b, n_fft):
    """Frequency response of a biquad (b0+b1 z+b2 z^2)/(a0+a1 z+a2 z^2), z=e^{-iw}."""
    nfreq = n_fft // 2 + 1
    resp = jnp.asarray(
        np.exp(-1j * 2.0 * np.pi * np.arange(nfreq) / n_fft).astype(np.complex64))
    a = a.astype(jnp.complex64)
    b = b.astype(jnp.complex64)
    num = b[..., 0:1] + b[..., 1:2] * resp + b[..., 2:3] * resp ** 2
    den = a[..., 0:1] + a[..., 1:2] * resp + a[..., 2:3] * resp ** 2
    return num / den


def _peaking(center, gain, q, sr, n_fft):
    omega = 2.0 * np.pi * center / sr
    cos, sin = jnp.cos(omega), jnp.sin(omega)
    A = jnp.exp(gain / 40.0 * np.log(10.0))
    alpha = sin / (2.0 * q)
    a = jnp.stack([1.0 + alpha / A, -2.0 * cos, 1.0 - alpha / A], axis=-1)
    b = jnp.stack([1.0 + alpha * A, -2.0 * cos, 1.0 - alpha * A], axis=-1)
    return _biquad(a, b, n_fft)


def _low_shelving(cutoff, gain, q, sr, n_fft):
    omega = 2.0 * np.pi * cutoff / sr
    cos, sin = np.cos(omega), np.sin(omega)
    A = jnp.exp(gain / 40.0 * np.log(10.0))
    alpha = sin / (2.0 * q)
    s2a = 2.0 * jnp.sqrt(A) * alpha
    a = jnp.stack([(A + 1) + (A - 1) * cos + s2a,
                   -2.0 * ((A - 1) + (A + 1) * cos),
                   (A + 1) + (A - 1) * cos - s2a], axis=-1)
    b = jnp.stack([A * ((A + 1) - (A - 1) * cos + s2a),
                   2.0 * A * ((A - 1) - (A + 1) * cos),
                   A * ((A + 1) - (A - 1) * cos - s2a)], axis=-1)
    return _biquad(a, b, n_fft)


def _high_shelving(cutoff, gain, q, sr, n_fft):
    omega = 2.0 * np.pi * cutoff / sr
    cos, sin = np.cos(omega), np.sin(omega)
    A = jnp.exp(gain / 40.0 * np.log(10.0))
    alpha = sin / (2.0 * q)
    s2a = 2.0 * jnp.sqrt(A) * alpha
    a = jnp.stack([(A + 1) - (A - 1) * cos + s2a,
                   2.0 * ((A - 1) - (A + 1) * cos),
                   (A + 1) - (A - 1) * cos - s2a], axis=-1)
    b = jnp.stack([A * ((A + 1) + (A - 1) * cos + s2a),
                   -2.0 * A * ((A - 1) + (A + 1) * cos),
                   A * ((A + 1) + (A - 1) * cos - s2a)], axis=-1)
    return _biquad(a, b, n_fft)


# ------------------------------ wrapper -------------------------------------
def augment(wavs, quality_power, gain, cfg=Config):
    wavs = wavs.astype(jnp.float32)
    B, T = wavs.shape
    n_fft, hop, sr = cfg.mel_win, cfg.mel_hop, cfg.sr
    nfreq = n_fft // 2 + 1
    n_chunks = n_fft // hop                       # 4 overlapping hop-chunks per frame

    # ---- PEQ frequency-domain filters (tiny: B x 513 complex) --------------
    peaks = cfg.num_peak
    expo = np.arange(peaks + 2)[1:-1] / (peaks + 1)
    peak_centers = (cfg.cutoff_lowpass *
                    (cfg.cutoff_highpass / cfg.cutoff_lowpass) ** expo).astype(np.float32)
    q = cfg.q_min * (cfg.q_max / cfg.q_min) ** quality_power          # [B, num_peak+2]
    center = jnp.broadcast_to(jnp.asarray(peak_centers)[None], (B, peaks))
    peak_resp = jnp.prod(_peaking(center, gain[:, :-2], q[:, :-2], sr, n_fft), axis=1)
    low = _low_shelving(cfg.cutoff_lowpass, gain[:, -2], q[:, -2], sr, n_fft)
    high = _high_shelving(cfg.cutoff_highpass, gain[:, -1], q[:, -1], sr, n_fft)
    filters = peak_resp * high * low                                  # [B, 513] complex64
    fr = jnp.real(filters).astype(jnp.float32)
    fi = jnp.imag(filters).astype(jnp.float32)

    # ---- fused per-batch frame->frame matrix M_b = Fwd @ Filter @ Inv ------
    window_np = (0.5 - 0.5 * np.cos(2.0 * np.pi * np.arange(n_fft) / n_fft)).astype(np.float64)
    m_idx = np.arange(n_fft)[:, None]
    k_idx = np.arange(nfreq)[None, :]
    ang = 2.0 * np.pi * m_idx * k_idx / n_fft                         # [W, F]
    fwd_np = np.concatenate([window_np[:, None] * np.cos(ang),
                             -window_np[:, None] * np.sin(ang)], axis=1)  # [W, 2F]
    wk = np.full((nfreq,), 2.0, np.float64); wk[0] = 1.0; wk[-1] = 1.0
    inv_re_np = (wk[:, None] * np.cos(ang.T) / n_fft) * window_np[None, :]   # [F, W]
    inv_im_np = (-wk[:, None] * np.sin(ang.T) / n_fft) * window_np[None, :]
    fwd_c = jnp.asarray(fwd_np, jnp.float32)
    inv_re = jnp.asarray(inv_re_np, jnp.float32)
    inv_im = jnp.asarray(inv_im_np, jnp.float32)
    # fold the complex filter into the inverse matrix rows, then fuse with fwd
    inv_b = jnp.concatenate(
        [fr[:, :, None] * inv_re[None] + fi[:, :, None] * inv_im[None],
         -fi[:, :, None] * inv_re[None] + fr[:, :, None] * inv_im[None]],
        axis=1)                                                       # [B, 2F, W]
    mat_b = jnp.einsum('mk,bkw->bmw', fwd_c, inv_b,
                       precision=lax.Precision.HIGHEST)               # [B, W, W] f32
    mat_b = mat_b.astype(jnp.bfloat16)                                # MXU-native, 2 MiB/batch

    # ---- framing / tiling geometry ------------------------------------------
    pad = n_fft // 2
    padded = jnp.pad(wavs, ((0, 0), (pad, pad)), mode='reflect')      # [B, L]
    L = padded.shape[1]
    n_frames = 1 + (L - n_fft) // hop
    target = 512                                  # frames per tile (balanced, mult of 8)
    nt0 = max(1, -(-n_frames // target))
    tile = _round_up(-(-n_frames // nt0), 8)
    n_tiles = -(-(n_frames + 1) // tile)          # need OLA rows up to n_frames
    nf_pad = n_tiles * tile
    rows = _round_up(max(nf_pad + 8, -(-L // hop)), 8)
    wave3 = jnp.pad(padded, ((0, 0), (0, rows * hop - L))).reshape(B, rows, hop)

    # ---- Pallas kernel: frames -> one bf16 matmul (M_b) -> in-kernel OLA ----
    def kernel(main_ref, halo_ref, mat_ref, out_ref, acc_ref):
        t = pl.program_id(1)

        @pl.when(t == 0)
        def _():
            acc_ref[...] = jnp.zeros_like(acc_ref)

        @pl.when(t > 0)
        def _():
            carry = acc_ref[tile:tile + 8, :]     # spill rows from previous tile
            acc_ref[...] = jnp.concatenate(
                [carry, jnp.zeros((tile, hop), jnp.float32)], axis=0)

        # waveform rows [t*tile, (t+1)*tile + 8): tile block + 8-row halo
        buf = jnp.concatenate([main_ref[0], halo_ref[0]], axis=0)     # [tile+8, hop]

        # forward: frame_f @ M_b, K-split into 4 hop-wide dots of shifted rows
        # (avoids materializing the [tile, 1024] frame tensor)
        y = None
        for s in range(n_chunks):
            xs = buf[s:s + tile, :].astype(jnp.bfloat16)              # [tile, hop]
            part = jnp.dot(xs, mat_ref[0, s * hop:(s + 1) * hop, :],
                           preferred_element_type=jnp.float32)        # [tile, W]
            y = part if y is None else y + part

        # zero frames past n_frames (padded tail of the last tile)
        fidx = lax.broadcasted_iota(jnp.int32, (tile, 1), 0) + t * tile
        y = jnp.where(fidx < n_frames, y, 0.0)

        # in-kernel overlap-add: chunk s of frame i lands on output row i + s
        yz = jnp.concatenate([jnp.zeros((8, n_fft), jnp.float32), y,
                              jnp.zeros((8, n_fft), jnp.float32)], axis=0)   # [tile+16, W]
        add = None
        for s in range(n_chunks):
            sl = yz[8 - s: 8 - s + tile + 8, s * hop:(s + 1) * hop]   # [tile+8, hop]
            add = sl if add is None else add + sl
        acc_ref[...] += add
        out_ref[0] = acc_ref[0:tile, :]           # non-overlapping, lane-dense block

    ola = pl.pallas_call(
        kernel,
        out_shape=jax.ShapeDtypeStruct((B, nf_pad, hop), jnp.float32),
        grid_spec=pltpu.PrefetchScalarGridSpec(
            num_scalar_prefetch=0,
            grid=(B, n_tiles),
            in_specs=[
                pl.BlockSpec((1, tile, hop), lambda b, t: (b, t, 0)),         # tile rows
                pl.BlockSpec((1, 8, hop),
                             lambda b, t: (b, (t + 1) * (tile // 8), 0)),     # 8-row halo
                pl.BlockSpec((1, n_fft, n_fft), lambda b, t: (b, 0, 0)),      # fused M_b
            ],
            out_specs=pl.BlockSpec((1, tile, hop), lambda b, t: (b, t, 0)),
            scratch_shapes=[pltpu.VMEM((tile + 8, hop), jnp.float32)],
        ),
        compiler_params=pltpu.CompilerParams(
            dimension_semantics=("parallel", "arbitrary"),
            vmem_limit_bytes=48 << 20),
    )(wave3, wave3, mat_b)

    # ---- epilogue (cheap elementwise; XLA fuses) ----------------------------
    wsq = window_np ** 2
    env_len = max((n_frames + 3) * hop, nf_pad * hop)
    env_np = np.zeros((env_len,), np.float64)
    for f in range(n_frames):
        env_np[f * hop: f * hop + n_fft] += wsq
    env_np = env_np[:nf_pad * hop]
    env = jnp.asarray(np.where(env_np > 1e-11, env_np, 1.0).astype(np.float32))

    out_len = (n_frames - 1) * hop                # == torch.istft default output length
    sig = (ola.reshape(B, nf_pad * hop) / env)[:, pad: pad + out_len]
    sig = jnp.clip(sig, -1.0, 1.0)
    out = sig / jnp.maximum(jnp.max(jnp.abs(sig), axis=-1, keepdims=True), 1e-7)

    # TODO(synk): Praat (parselmouth) pitch/formant augmentation is a host-side
    # library call with no Pallas equivalent; the None-branch of forward is used.
    return out


# ------------------------------ main ----------------------------------------
if __name__ == "__main__":
    cfg = Config
    B, T = 2, 4096                      # T divisible by hop (256)
    key = jax.random.PRNGKey(0)
    k1, k2, k3 = jax.random.split(key, 3)
    wavs = jax.random.uniform(k1, (B, T), jnp.float32, -0.5, 0.5)
    quality_power = jax.random.uniform(k2, (B, cfg.num_peak + 2), jnp.float32, 0.0, 1.0)
    gain = jax.random.uniform(k3, (B, cfg.num_peak + 2), jnp.float32,
                              float(cfg.g_min), float(cfg.g_max))

    fn = jax.jit(lambda w, qp, g: augment(w, qp, g, cfg))
    out = jax.block_until_ready(fn(wavs, quality_power, gain))
    assert out.shape == (B, T) and out.dtype == jnp.float32
    assert bool(jnp.all(jnp.isfinite(out)))
    print("KERNEL_OK")
</pallas_src>

<mosaic_0001>
module attributes {stable_mosaic.version = 11 : i64} {
  func.func @kernel(%arg0: i32, %arg1: i32, %arg2: memref<1x24x256xf32, #tpu.memory_space<vmem>>, %arg3: memref<1x8x256xf32, #tpu.memory_space<vmem>>, %arg4: memref<1x1024x1024xbf16, #tpu.memory_space<vmem>>, %arg5: memref<1x24x256xf32, #tpu.memory_space<vmem>>, %arg6: memref<32x256xf32, #tpu.memory_space<vmem>>) attributes {dimension_semantics = [#tpu.dimension_semantics<parallel>, #tpu.dimension_semantics<arbitrary>], iteration_bounds = array<i64: 2, 1>, scalar_prefetch = 0 : i64, scratch_operands = 1 : i64, tpu.core_type = #tpu.core_type<tc>, window_params = [{transform_indices = @transform_0, window_bounds = array<i64: 1, 24, 256>}, {transform_indices = @transform_1, window_bounds = array<i64: 1, 8, 256>}, {transform_indices = @transform_2, window_bounds = array<i64: 1, 1024, 1024>}, {transform_indices = @transform_3, window_bounds = array<i64: 1, 24, 256>}]} {
    %c0_i32 = arith.constant 0 : i32
    %0 = arith.cmpi eq, %arg1, %c0_i32 : i32
    %1 = arith.extui %0 : i1 to i32
    %c0_i32_0 = arith.constant 0 : i32
    %2 = arith.cmpi ne, %1, %c0_i32_0 : i32
    scf.if %2 {
      %cst_32 = arith.constant 0.000000e+00 : f32
      %61 = vector.broadcast %cst_32 : f32 to vector<32x256xf32>
      %c0_33 = arith.constant 0 : index
      %c0_34 = arith.constant 0 : index
      %62 = vector.load %arg6[%c0_33, %c0_34] : memref<32x256xf32, #tpu.memory_space<vmem>>, vector<32x256xf32>
      tpu.vector_store %arg6[%c0_33, %c0_34], %61 {strides = array<i32>} : memref<32x256xf32, #tpu.memory_space<vmem>>, vector<32x256xf32>,
    } else {
    }
    %c0_i32_1 = arith.constant 0 : i32
    %3 = arith.cmpi sgt, %arg1, %c0_i32_1 : i32
    %4 = arith.extui %3 : i1 to i32
    %c0_i32_2 = arith.constant 0 : i32
    %5 = arith.cmpi ne, %4, %c0_i32_2 : i32
    scf.if %5 {
      %c24 = arith.constant 24 : index
      %c0_32 = arith.constant 0 : index
      %61 = vector.load %arg6[%c24, %c0_32] : memref<32x256xf32, #tpu.memory_space<vmem>>, vector<8x256xf32>
      %cst_33 = arith.constant 0.000000e+00 : f32
      %62 = vector.broadcast %cst_33 : f32 to vector<24x256xf32>
      %63 = tpu.concatenate %61, %62 in 0 : vector<8x256xf32>, vector<24x256xf32> -> vector<32x256xf32>
      %c0_34 = arith.constant 0 : index
      %c0_35 = arith.constant 0 : index
      %64 = vector.load %arg6[%c0_34, %c0_35] : memref<32x256xf32, #tpu.memory_space<vmem>>, vector<32x256xf32>
      tpu.vector_store %arg6[%c0_34, %c0_35], %63 {strides = array<i32>} : memref<32x256xf32, #tpu.memory_space<vmem>>, vector<32x256xf32>,
    } else {
    }
    %c0 = arith.constant 0 : index
    %c0_3 = arith.constant 0 : index
    %c0_4 = arith.constant 0 : index
    %6 = vector.load %arg2[%c0, %c0_3, %c0_4] : memref<1x24x256xf32, #tpu.memory_space<vmem>>, vector<1x24x256xf32>
    %7 = vector.shape_cast %6 : vector<1x24x256xf32> to vector<24x256xf32>
    %c0_5 = arith.constant 0 : index
    %c0_6 = arith.constant 0 : index
    %c0_7 = arith.constant 0 : index
    %8 = vector.load %arg3[%c0_5, %c0_6, %c0_7] : memref<1x8x256xf32, #tpu.memory_space<vmem>>, vector<1x8x256xf32>
    %9 = vector.shape_cast %8 : vector<1x8x256xf32> to vector<8x256xf32>
    %10 = tpu.concatenate %7, %9 in 0 : vector<24x256xf32>, vector<8x256xf32> -> vector<32x256xf32>
    %11 = vector.extract_strided_slice %10 {offsets = [0, 0], sizes = [24, 256], strides = [1, 1]} : vector<32x256xf32> to vector<24x256xf32>
    %12 = arith.truncf %11 : vector<24x256xf32> to vector<24x256xbf16>
    %c0_8 = arith.constant 0 : index
    %c0_9 = arith.constant 0 : index
    %c0_10 = arith.constant 0 : index
    %13 = vector.load %arg4[%c0_8, %c0_9, %c0_10] : memref<1x1024x1024xbf16, #tpu.memory_space<vmem>>, vector<1x256x1024xbf16>
    %14 = vector.shape_cast %13 : vector<1x256x1024xbf16> to vector<256x1024xbf16>
    %cst = arith.constant dense<0.000000e+00> : vector<24x1024xf32>
    %15 = tpu.matmul %12, %14, %cst {dimension_numbers = #tpu.dot_dimension_numbers<[1], [0], [0], [1], [0, 0, 1, 1], [], []>} : vector<24x256xbf16>, vector<256x1024xbf16>, vector<24x1024xf32> -> vector<24x1024xf32>
    %16 = vector.extract_strided_slice %10 {offsets = [1, 0], sizes = [24, 256], strides = [1, 1]} : vector<32x256xf32> to vector<24x256xf32>
    %17 = arith.truncf %16 : vector<24x256xf32> to vector<24x256xbf16>
    %c0_11 = arith.constant 0 : index
    %c256 = arith.constant 256 : index
    %c0_12 = arith.constant 0 : index
    %18 = vector.load %arg4[%c0_11, %c256, %c0_12] : memref<1x1024x1024xbf16, #tpu.memory_space<vmem>>, vector<1x256x1024xbf16>
    %19 = vector.shape_cast %18 : vector<1x256x1024xbf16> to vector<256x1024xbf16>
    %cst_13 = arith.constant dense<0.000000e+00> : vector<24x1024xf32>
    %20 = tpu.matmul %17, %19, %cst_13 {dimension_numbers = #tpu.dot_dimension_numbers<[1], [0], [0], [1], [0, 0, 1, 1], [], []>} : vector<24x256xbf16>, vector<256x1024xbf16>, vector<24x1024xf32> -> vector<24x1024xf32>
    %21 = arith.addf %15, %20 : vector<24x1024xf32>
    %22 = vector.extract_strided_slice %10 {offsets = [2, 0], sizes = [24, 256], strides = [1, 1]} : vector<32x256xf32> to vector<24x256xf32>
    %23 = arith.truncf %22 : vector<24x256xf32> to vector<24x256xbf16>
    %c0_14 = arith.constant 0 : index
    %c512 = arith.constant 512 : index
    %c0_15 = arith.constant 0 : index
    %24 = vector.load %arg4[%c0_14, %c512, %c0_15] : memref<1x1024x1024xbf16, #tpu.memory_space<vmem>>, vector<1x256x1024xbf16>
    %25 = vector.shape_cast %24 : vector<1x256x1024xbf16> to vector<256x1024xbf16>
    %cst_16 = arith.constant dense<0.000000e+00> : vector<24x1024xf32>
    %26 = tpu.matmul %23, %25, %cst_16 {dimension_numbers = #tpu.dot_dimension_numbers<[1], [0], [0], [1], [0, 0, 1, 1], [], []>} : vector<24x256xbf16>, vector<256x1024xbf16>, vector<24x1024xf32> -> vector<24x1024xf32>
    %27 = arith.addf %21, %26 : vector<24x1024xf32>
    %28 = vector.extract_strided_slice %10 {offsets = [3, 0], sizes = [24, 256], strides = [1, 1]} : vector<32x256xf32> to vector<24x256xf32>
    %29 = arith.truncf %28 : vector<24x256xf32> to vector<24x256xbf16>
    %c0_17 = arith.constant 0 : index
    %c768 = arith.constant 768 : index
    %c0_18 = arith.constant 0 : index
    %30 = vector.load %arg4[%c0_17, %c768, %c0_18] : memref<1x1024x1024xbf16, #tpu.memory_space<vmem>>, vector<1x256x1024xbf16>
    %31 = vector.shape_cast %30 : vector<1x256x1024xbf16> to vector<256x1024xbf16>
    %cst_19 = arith.constant dense<0.000000e+00> : vector<24x1024xf32>
    %32 = tpu.matmul %29, %31, %cst_19 {dimension_numbers = #tpu.dot_dimension_numbers<[1], [0], [0], [1], [0, 0, 1, 1], [], []>} : vector<24x256xbf16>, vector<256x1024xbf16>, vector<24x1024xf32> -> vector<24x1024xf32>
    %33 = arith.addf %27, %32 : vector<24x1024xf32>
    %34 = tpu.iota {dimensions = array<i32: 0>} : vector<24x1xi32>
    %c24_i32 = arith.constant 24 : i32
    %35 = arith.muli %arg1, %c24_i32 : i32
    %36 = vector.broadcast %35 : i32 to vector<24x1xi32>
    %37 = arith.addi %34, %36 : vector<24x1xi32>
    %c17_i32 = arith.constant 17 : i32
    %38 = vector.broadcast %c17_i32 : i32 to vector<24x1xi32>
    %39 = arith.cmpi slt, %37, %38 : vector<24x1xi32>
    %cst_20 = arith.constant 0.000000e+00 : f32
    %40 = vector.shape_cast %39 : vector<24x1xi1> to vector<24x1xi1>
    %41 = vector.broadcast %40 : vector<24x1xi1> to vector<24x1024xi1>
    %42 = vector.broadcast %cst_20 : f32 to vector<24x1024xf32>
    %43 = arith.select %41, %33, %42 : vector<24x1024xi1>, vector<24x1024xf32>
    %cst_21 = arith.constant 0.000000e+00 : f32
    %44 = vector.broadcast %cst_21 : f32 to vector<8x1024xf32>
    %cst_22 = arith.constant 0.000000e+00 : f32
    %45 = vector.broadcast %cst_22 : f32 to vector<8x1024xf32>
    %46 = tpu.concatenate %44, %43, %45 in 0 : vector<8x1024xf32>, vector<24x1024xf32>, vector<8x1024xf32> -> vector<40x1024xf32>
    %47 = vector.extract_strided_slice %46 {offsets = [8, 0], sizes = [32, 256], strides = [1, 1]} : vector<40x1024xf32> to vector<32x256xf32>
    %48 = vector.extract_strided_slice %46 {offsets = [7, 256], sizes = [32, 256], strides = [1, 1]} : vector<40x1024xf32> to vector<32x256xf32>
    %49 = arith.addf %47, %48 : vector<32x256xf32>
    %50 = vector.extract_strided_slice %46 {offsets = [6, 512], sizes = [32, 256], strides = [1, 1]} : vector<40x1024xf32> to vector<32x256xf32>
    %51 = arith.addf %49, %50 : vector<32x256xf32>
    %52 = vector.extract_strided_slice %46 {offsets = [5, 768], sizes = [32, 256], strides = [1, 1]} : vector<40x1024xf32> to vector<32x256xf32>
    %53 = arith.addf %51, %52 : vector<32x256xf32>
    %c0_23 = arith.constant 0 : index
    %c0_24 = arith.constant 0 : index
    %54 = vector.load %arg6[%c0_23, %c0_24] : memref<32x256xf32, #tpu.memory_space<vmem>>, vector<32x256xf32>
    %55 = arith.addf %54, %53 : vector<32x256xf32>
    %c0_25 = arith.constant 0 : index
    %c0_26 = arith.constant 0 : index
    %56 = vector.load %arg6[%c0_25, %c0_26] : memref<32x256xf32, #tpu.memory_space<vmem>>, vector<32x256xf32>
    tpu.vector_store %arg6[%c0_25, %c0_26], %55 {strides = array<i32>} : memref<32x256xf32, #tpu.memory_space<vmem>>, vector<32x256xf32>,
    %c0_27 = arith.constant 0 : index
    %c0_28 = arith.constant 0 : index
    %57 = vector.load %arg6[%c0_27, %c0_28] : memref<32x256xf32, #tpu.memory_space<vmem>>, vector<24x256xf32>
    %c0_29 = arith.constant 0 : index
    %c0_30 = arith.constant 0 : index
    %c0_31 = arith.constant 0 : index
    %58 = vector.load %arg5[%c0_29, %c0_30, %c0_31] : memref<1x24x256xf32, #tpu.memory_space<vmem>>, vector<1x24x256xf32>
    %59 = vector.shape_cast %58 : vector<1x24x256xf32> to vector<24x256xf32>
    %60 = vector.shape_cast %57 : vector<24x256xf32> to vector<1x24x256xf32>
    tpu.vector_store %arg5[%c0_29, %c0_30, %c0_31], %60 {strides = array<i32>} : memref<1x24x256xf32, #tpu.memory_space<vmem>>, vector<1x24x256xf32>,
    return
  }
  func.func @transform_0(%arg0: i32, %arg1: i32) -> (i32, i32, i32) {
    %c0_i32 = arith.constant 0 : i32
    %c0_i32_0 = arith.constant 0 : i32
    return %arg0, %arg1, %c0_i32 : i32, i32, i32
  }
  func.func @transform_1(%arg0: i32, %arg1: i32) -> (i32, i32, i32) {
    %c1_i32 = arith.constant 1 : i32
    %0 = arith.addi %arg1, %c1_i32 : i32
    %c3_i32 = arith.constant 3 : i32
    %1 = arith.muli %0, %c3_i32 : i32
    %c0_i32 = arith.constant 0 : i32
    %c0_i32_0 = arith.constant 0 : i32
    return %arg0, %1, %c0_i32 : i32, i32, i32
  }
  func.func @transform_2(%arg0: i32, %arg1: i32) -> (i32, i32, i32) {
    %c0_i32 = arith.constant 0 : i32
    %c0_i32_0 = arith.constant 0 : i32
    %c0_i32_1 = arith.constant 0 : i32
    return %arg0, %c0_i32, %c0_i32_0 : i32, i32, i32
  }
  func.func @transform_3(%arg0: i32, %arg1: i32) -> (i32, i32, i32) {
    %c0_i32 = arith.constant 0 : i32
    %c0_i32_0 = arith.constant 0 : i32
    return %arg0, %arg1, %c0_i32 : i32, i32, i32
  }
}

</mosaic_0001>

<llo_original>
// kernel: _lambda_.1
$region0: #{_lambda_.1}
  #allocation0 [shape = 'u32[]', space=smem, size = 0x4, offset = 0x4, fixed_abs, tag = 'smem constant byte address 0x4 - core index']
  #allocation1 [shape = 'u32[144,128]{1,0:T(1,128)}', space=vmem, size = 0x12000, scoped, tag = 'internal scratch']
  #allocation2 [shape = 'f32[32,256]{1,0:T(8,128)}', space=vmem, size = 0x8000, scoped, tag = 'scratch operand']
  %s0 = inlined_call_operand.vmem [shape: f32[2,32,256], index: 0, kind: input, shape index: {}, may-alias: {0,1}]
  %s1 = inlined_call_operand.vmem [shape: f32[2,32,256], index: 1, kind: input, shape index: {}, may-alias: {0,1}]
  %s2 = inlined_call_operand.vmem [shape: bf16[2,1024,1024], index: 2, kind: input, shape index: {}]
  %s3 = inlined_call_operand.vmem [shape: f32[2,24,256], index: 3, kind: output, shape index: {}]
  %s4 = sld [smem:[#allocation0]]
  $region53: #{_lambda_.1} parent=0
    _
  %s6 = ssub.s32 1, %s4
  %s7 = scalar_select 0, %s6, %s4
  loop: start=0, step=1, limit=4
  $region2: #{_lambda_.1} parent=0 // loop_pre_header
    _
  $region3: #{_lambda_.1} parent=0 // loop_header
    %s9 = sphi 0, %s13
    %p10 = scmp.ge.s32.totalorder %s9, 4
    %s16 = sphi 0, %s28
    %s17 = sphi 0, %s24
    %s18 = sphi 0, %s16
    %s19 = sphi 0, %s17
    %s20 = sphi 0, %s18
    %s21 = sphi 0, %s19
    %s33 = sphi 0, %s35
    %s36 = sphi 0, %s33
    %s37 = sphi 0, %s36
    %s53 = sphi 0, %s37
    %s65 = sphi 0, %s67
    %s68 = sphi 0, %s65
    %s69 = sphi 0, %s68
    %s85 = sphi 0, %s69
    %s91 = sphi 0, %s93
    %s94 = sphi 0, %s91
    %s95 = sphi 0, %s94
    %s111 = sphi 0, %s95
    %s119 = sphi 0, %s121
    %s122 = sphi 0, %s119
    %s123 = sphi 0, %s122
    %s139 = sphi 0, %s123
  $region4: #{_lambda_.1} parent=0 // loop_header_branch
    %12 = sbr.rel (%p10) target = $region8
  $region5: #{_lambda_.1} parent=0 // loop_body
    %s14 = ssub.s32 %s9, 1
    %s15 = ssub.s32 %s9, 2
    %s22 = sadd.s32 1, %s17
    %p23 = scmp.ge.s32.totalorder %s22, 1
    %s24 = scalar_select %p23, 0, %s22
    %s25 = sadd.s32 1, %s16
    %s26 = scalar_select %p23, %s25, %s16
    %p27 = scmp.ge.s32.totalorder %s26, 2
    %s28 = scalar_select %p27, 0, %s26
    %s29 = ssub.s32 %s16, %s28
    %s30 = ssub.s32 %s17, %s24
    %s31 = sor.u32 %s29, %s30
    %p32 = scmp.eq.s32.totalorder %s31, 0
    %s34 = sadd.s32 %s33, 1
    %s35 = scalar_select %p32, %s33, %s34
    %p38 = pneg %p32
    %p39 = scmp.eq.s32.totalorder %s9, 1
    %p40 = por %p38, %p39
    %p41 = scmp.ne.s32.totalorder %s33, %s36
    %p42 = scmp.eq.s32.totalorder %s9, 0
    %p43 = por %p41, %p42
    %p44 = scmp.ne.s32.totalorder %s33, %s36
    %p45 = scmp.eq.s32.totalorder %s14, 1
    %p46 = por %p44, %p45
    %p47 = scmp.ne.s32.totalorder %s36, %s37
    %p48 = scmp.eq.s32.totalorder %s14, 0
    %p49 = por %p47, %p48
    %p50 = scmp.ne.s32.totalorder %s36, %s37
    %p51 = scmp.eq.s32.totalorder %s15, 1
    %p52 = por %p50, %p51
    %p54 = scmp.ne.s32.totalorder %s37, %s53
    %p55 = scmp.eq.s32.totalorder %s15, 0
    %p56 = por %p54, %p55
    %s57 = sadd.s32 %s17, 1
    %s58 = smul.u32 %s57, 3
    %s59 = sadd.s32 %s24, 1
    %s60 = smul.u32 %s59, 3
    %s61 = ssub.s32 %s16, %s28
    %s62 = ssub.s32 %s58, %s60
    %s63 = sor.u32 %s61, %s62
    %p64 = scmp.eq.s32.totalorder %s63, 0
    %s66 = sadd.s32 %s65, 1
    %s67 = scalar_select %p64, %s65, %s66
    %p70 = pneg %p64
    %p71 = scmp.eq.s32.totalorder %s9, 1
    %p72 = por %p70, %p71
    %p73 = scmp.ne.s32.totalorder %s65, %s68
    %p74 = scmp.eq.s32.totalorder %s9, 0
    %p75 = por %p73, %p74
    %p76 = scmp.ne.s32.totalorder %s65, %s68
    %p77 = scmp.eq.s32.totalorder %s14, 1
    %p78 = por %p76, %p77
    %p79 = scmp.ne.s32.totalorder %s68, %s69
    %p80 = scmp.eq.s32.totalorder %s14, 0
    %p81 = por %p79, %p80
    %p82 = scmp.ne.s32.totalorder %s68, %s69
    %p83 = scmp.eq.s32.totalorder %s15, 1
    %p84 = por %p82, %p83
    %p86 = scmp.ne.s32.totalorder %s69, %s85
    %p87 = scmp.eq.s32.totalorder %s15, 0
    %p88 = por %p86, %p87
    %s89 = ssub.s32 %s16, %s28
    %p90 = scmp.eq.s32.totalorder %s89, 0
    %s92 = sadd.s32 %s91, 1
    %s93 = scalar_select %p90, %s91, %s92
    %p96 = pneg %p90
    %p97 = scmp.eq.s32.totalorder %s9, 1
    %p98 = por %p96, %p97
    %p99 = scmp.ne.s32.totalorder %s91, %s94
    %p100 = scmp.eq.s32.totalorder %s9, 0
    %p101 = por %p99, %p100
    %p102 = scmp.ne.s32.totalorder %s91, %s94
    %p103 = scmp.eq.s32.totalorder %s14, 1
    %p104 = por %p102, %p103
    %p105 = scmp.ne.s32.totalorder %s94, %s95
    %p106 = scmp.eq.s32.totalorder %s14, 0
    %p107 = por %p105, %p106
    %p108 = scmp.ne.s32.totalorder %s94, %s95
    %p109 = scmp.eq.s32.totalorder %s15, 1
    %p110 = por %p108, %p109
    %p112 = scmp.ne.s32.totalorder %s95, %s111
    %p113 = scmp.eq.s32.totalorder %s15, 0
    %p114 = por %p112, %p113
    %s115 = ssub.s32 %s16, %s28
    %s116 = ssub.s32 %s17, %s24
    %s117 = sor.u32 %s115, %s116
    %p118 = scmp.eq.s32.totalorder %s117, 0
    %s120 = sadd.s32 %s119, 1
    %s121 = scalar_select %p118, %s119, %s120
    %p124 = pneg %p118
    %p125 = scmp.eq.s32.totalorder %s9, 1
    %p126 = por %p124, %p125
    %p127 = scmp.ne.s32.totalorder %s119, %s122
    %p128 = scmp.eq.s32.totalorder %s9, 0
    %p129 = por %p127, %p128
    %p130 = scmp.ne.s32.totalorder %s119, %s122
    %p131 = scmp.eq.s32.totalorder %s14, 1
    %p132 = por %p130, %p131
    %p133 = scmp.ne.s32.totalorder %s122, %s123
    %p134 = scmp.eq.s32.totalorder %s14, 0
    %p135 = por %p133, %p134
    %p136 = scmp.ne.s32.totalorder %s122, %s123
    %p137 = scmp.eq.s32.totalorder %s15, 1
    %p138 = por %p136, %p137
    %p140 = scmp.ne.s32.totalorder %s123, %s139
    %p141 = scmp.eq.s32.totalorder %s15, 0
    %p142 = por %p140, %p141
    %p143 = scmp.le.s32.totalorder 1, %s9
    %p144 = scmp.lt.s32.totalorder %s9, 3
    %p145 = pnand %p143, %p144
    %p146 = pneg %p145
    // Predicated region
    $region9: #{_lambda_.1} parent=5 // pred_check
      _
    $region10: #{_lambda_.1} parent=5 // pred_check_branch
      %148 = sbr.rel (%p145) target = $region12
    $region11: #{_lambda_.1} parent=5 // pred_region
      %s149 = ssub.s32 %s9, 1
    $region12: #{_lambda_.1} parent=5 // pred_fallthru
      _
    %p150 = scmp.lt.s32.totalorder %s9, 2
    // Predicated region
    $region13: #{_lambda_.1} parent=5 // pred_check
      %p151 = pneg %p150
    $region14: #{_lambda_.1} parent=5 // pred_check_branch
      %153 = sbr.rel (%p151) target = $region16
    $region15: #{_lambda_.1} parent=5 // pred_region
      // Predicated region
      $region17: #{_lambda_.1} parent=15 // pred_check
        %p154 = pneg %p43
      $region18: #{_lambda_.1} parent=15 // pred_check_branch
        %156 = sbr.rel (%p154) target = $region20
      $region19: #{_lambda_.1} parent=15 // pred_region
        %s157 = smul.u32 3, %s17
        %s158 = ssub.s32 4, %s157
        %p159 = scmp.lt.s32.totalorder %s158, 3
        %s160 = scalar_select %p159, %s158, 3
        %s161 = smul.u32 128, %s160
        %s162 = smul.u32 %s161, 2
        %p163 = scmp.lt.s32.totalorder %s16, 1
        %s164 = scalar_select %p163, %s16, 1
        %p165 = scmp.lt.s32.totalorder %s157, 3
        %s166 = scalar_select %p165, %s157, 3
        %s167 = smul.addr %s166, 2
        %s168 = smul.addr %s164, 8
        %s169 = sadd.s32 %s167, %s168
        %s170 = smul.addr %s169, 8
        %s171 = scalar_lea.vmem %s0, %s170
        %s172 = smul.u32 3, %s17
        %s173 = ssub.s32 4, %s172
        %p174 = scmp.lt.s32.totalorder %s173, 3
        %s175 = scalar_select %p174, %s173, 3
        %s176 = smul.u32 128, %s175
        %s177 = smul.u32 %s176, 2
      $region20: #{_lambda_.1} parent=15 // pred_fallthru
        _
      // Predicated region
      $region21: #{_lambda_.1} parent=15 // pred_check
        %p178 = pneg %p75
      $region22: #{_lambda_.1} parent=15 // pred_check_branch
        %180 = sbr.rel (%p178) target = $region24
      $region23: #{_lambda_.1} parent=15 // pred_region
        %s181 = sadd.s32 %s17, 1
        %s182 = smul.u32 %s181, 3
        %p183 = scmp.lt.s32.totalorder %s16, 1
        %s184 = scalar_select %p183, %s16, 1
        %p185 = scmp.lt.s32.totalorder %s182, 3
        %s186 = scalar_select %p185, %s182, 3
        %s187 = smul.addr %s186, 2
        %s188 = smul.addr %s184, 8
        %s189 = sadd.s32 %s187, %s188
        %s190 = smul.addr %s189, 8
        %s191 = scalar_lea.vmem %s1, %s190
        %s192 = sadd.s32 %s17, 1
        %s193 = smul.u32 %s192, 3
      $region24: #{_lambda_.1} parent=15 // pred_fallthru
        _
      // Predicated region
      $region25: #{_lambda_.1} parent=15 // pred_check
        %p194 = pneg %p101
      $region26: #{_lambda_.1} parent=15 // pred_check_branch
        %196 = sbr.rel (%p194) target = $region28
      $region27: #{_lambda_.1} parent=15 // pred_region
        %p197 = scmp.lt.s32.totalorder %s16, 1
        %s198 = scalar_select %p197, %s16, 1
        %s199 = smul.addr %s198, 1024
        %s200 = smul.addr %s199, 4
        %s201 = scalar_lea.vmem %s2, %s200
      $region28: #{_lambda_.1} parent=15 // pred_fallthru
        _
    $region16: #{_lambda_.1} parent=5 // pred_fallthru
      _
    %p202 = scmp.le.s32.totalorder 1, %s9
    %p203 = scmp.lt.s32.totalorder %s9, 3
    %p204 = pnand %p202, %p203
    %p205 = pneg %p204
    // Predicated region
    $region29: #{_lambda_.1} parent=5 // pred_check
      _
    $region30: #{_lambda_.1} parent=5 // pred_check_branch
      %207 = sbr.rel (%p204) target = $region32
    $region31: #{_lambda_.1} parent=5 // pred_region
      %s208 = ssub.s32 %s9, 1
      %s209 = smul.u32 3, %s19
      %s210 = ssub.s32 4, %s209
      %p211 = scmp.lt.s32.totalorder %s210, 3
      %s212 = scalar_select %p211, %s210, 3
      %s213 = smul.u32 128, %s212
      %s214 = smul.u32 %s213, 2
      %p215 = scmp.lt.s32.totalorder %s18, 1
      %s216 = scalar_select %p215, %s18, 1
      %p217 = scmp.lt.s32.totalorder %s209, 3
      %s218 = scalar_select %p217, %s209, 3
      %s219 = smul.addr %s218, 2
      %s220 = smul.addr %s216, 8
      %s221 = sadd.s32 %s219, %s220
      %s222 = smul.addr %s221, 8
      %s223 = scalar_lea.vmem %s0, %s222
      %p224 = pneg %p49
      %p225 = pneg %p46
      %s226 = sadd.s32 %s19, 1
      %s227 = smul.u32 %s226, 3
      %p228 = scmp.lt.s32.totalorder %s18, 1
      %s229 = scalar_select %p228, %s18, 1
      %p230 = scmp.lt.s32.totalorder %s227, 3
      %s231 = scalar_select %p230, %s227, 3
      %s232 = smul.addr %s231, 2
      %s233 = smul.addr %s229, 8
      %s234 = sadd.s32 %s232, %s233
      %s235 = smul.addr %s234, 8
      %s236 = scalar_lea.vmem %s1, %s235
      %p237 = pneg %p81
      %p238 = pneg %p78
      %p239 = scmp.lt.s32.totalorder %s18, 1
      %s240 = scalar_select %p239, %s18, 1
      %s241 = smul.addr %s240, 1024
      %s242 = smul.addr %s241, 4
      %s243 = scalar_lea.vmem %s2, %s242
      %p244 = pneg %p107
      %p245 = pneg %p104
      %p246 = pneg %p135
      %p247 = pneg %p132
      %s248 = smul.u32 3, %s19
      %p249 = scmp.lt.s32.totalorder %s18, 1
      %s250 = scalar_select %p249, %s18, 1
      %p251 = scmp.lt.s32.totalorder %s248, 2
      %s252 = scalar_select %p251, %s248, 2
      %s253 = smul.addr %s252, 2
      %s254 = smul.addr %s250, 6
      %s255 = sadd.s32 %s253, %s254
      %s256 = smul.addr %s255, 8
      %s257 = scalar_lea.vmem %s3, %s256
      %s258 = smul.u32 3, %s19
      %s259 = ssub.s32 4, %s258
      %p260 = scmp.lt.s32.totalorder %s259, 3
      %s261 = scalar_select %p260, %s259, 3
      %s262 = smul.u32 128, %s261
      %s263 = smul.u32 %s262, 2
      %p264 = scmp.lt.s32.totalorder %s18, 1
      %s265 = scalar_select %p264, %s18, 1
      %p266 = scmp.lt.s32.totalorder %s258, 3
      %s267 = scalar_select %p266, %s258, 3
      %s268 = smul.addr %s267, 2
      %s269 = smul.addr %s265, 8
      %s270 = sadd.s32 %s268, %s269
      %s271 = smul.addr %s270, 8
      %s272 = scalar_lea.vmem %s0, %s271
      %s273 = smul.u32 3, %s19
      %s274 = ssub.s32 4, %s273
      %p275 = scmp.lt.s32.totalorder %s274, 3
      %s276 = scalar_select %p275, %s274, 3
      %s277 = smul.u32 128, %s276
      %s278 = smul.u32 %s277, 2
      %s279 = sadd.s32 %s19, 1
      %s280 = smul.u32 %s279, 3
      %p281 = scmp.lt.s32.totalorder %s18, 1
      %s282 = scalar_select %p281, %s18, 1
      %p283 = scmp.lt.s32.totalorder %s280, 3
      %s284 = scalar_select %p283, %s280, 3
      %s285 = smul.addr %s284, 2
      %s286 = smul.addr %s282, 8
      %s287 = sadd.s32 %s285, %s286
      %s288 = smul.addr %s287, 8
      %s289 = scalar_lea.vmem %s1, %s288
      %s290 = sadd.s32 %s19, 1
      %s291 = smul.u32 %s290, 3
      %p292 = scmp.lt.s32.totalorder %s18, 1
      %s293 = scalar_select %p292, %s18, 1
      %s294 = smul.addr %s293, 1024
      %s295 = smul.addr %s294, 4
      %s296 = scalar_lea.vmem %s2, %s295
      %s297 = smul.u32 3, %s19
      %p298 = scmp.lt.s32.totalorder %s18, 1
      %s299 = scalar_select %p298, %s18, 1
      %p300 = scmp.lt.s32.totalorder %s297, 2
      %s301 = scalar_select %p300, %s297, 2
      %s302 = smul.addr %s301, 2
      %s303 = smul.addr %s299, 6
      %s304 = sadd.s32 %s302, %s303
      %s305 = smul.addr %s304, 8
      %s306 = scalar_lea.vmem %s3, %s305
      %s307 = smul.u32 3, %s19
      %p308 = scmp.eq.s32.totalorder %s19, 0
      // Predicated region
      $region33: #{_lambda_.1} parent=31 // pred_check
        %p309 = pneg %p308
      $region34: #{_lambda_.1} parent=31 // pred_check_branch
        %311 = sbr.rel (%p309) target = $region36
      $region35: #{_lambda_.1} parent=31 // pred_region
        %312 = vst [vmem:[#allocation2] sm:$0xff] 0.0
        %313 = vst [vmem:[#allocation2 + $0x8] sm:$0xff] 0.0
        %314 = vst [vmem:[#allocation2 + $0x10] sm:$0xff] 0.0
        %315 = vst [vmem:[#allocation2 + $0x18] sm:$0xff] 0.0
        %316 = vst [vmem:[#allocation2 + $0x20] sm:$0xff] 0.0
        %317 = vst [vmem:[#allocation2 + $0x28] sm:$0xff] 0.0
        %318 = vst [vmem:[#allocation2 + $0x30] sm:$0xff] 0.0
        %319 = vst [vmem:[#allocation2 + $0x38] sm:$0xff] 0.0
      $region36: #{_lambda_.1} parent=31 // pred_fallthru
        _
      %p320 = scmp.gt.s32.totalorder %s19, 0
      // Predicated region
      $region37: #{_lambda_.1} parent=31 // pred_check
        %p321 = pneg %p320
      $region38: #{_lambda_.1} parent=31 // pred_check_branch
        %323 = sbr.rel (%p321) target = $region40
      $region39: #{_lambda_.1} parent=31 // pred_region
        %v324 = vld [vmem:[#allocation2 + $0x30] sm:$0xff]
        %v325 = vld [vmem:[#allocation2 + $0x38] sm:$0xff]
        %326 = vst [vmem:[#allocation2] sm:$0xff] %v324
        %327 = vst [vmem:[#allocation2 + $0x8] sm:$0xff] %v325
        %328 = vst [vmem:[#allocation2 + $0x10] sm:$0xff] 0.0
        %329 = vst [vmem:[#allocation2 + $0x18] sm:$0xff] 0.0
        %330 = vst [vmem:[#allocation2 + $0x20] sm:$0xff] 0.0
        %331 = vst [vmem:[#allocation2 + $0x28] sm:$0xff] 0.0
        %332 = vst [vmem:[#allocation2 + $0x30] sm:$0xff] 0.0
        %333 = vst [vmem:[#allocation2 + $0x38] sm:$0xff] 0.0
      $region40: #{_lambda_.1} parent=31 // pred_fallthru
        _
      %v334 = vld [vmem:[%s272] sm:$0xff]
      %v335 = vld [vmem:[%s272 + $0x8] sm:$0xff]
      %v336 = vld [vmem:[%s272 + $0x10] sm:$0xff]
      %v337 = vld [vmem:[%s272 + $0x18] sm:$0xff]
      %v338 = vld [vmem:[%s272 + $0x20] sm:$0xff]
      %v339 = vld [vmem:[%s272 + $0x28] sm:$0xff]
      %v340 = vld [vmem:[%s289] sm:$0xff]
      %v341 = vld [vmem:[%s289 + $0x8] sm:$0xff]
      %v342 = vpack.c.bf16 %v336, %v334
      %v343 = vpack.c.bf16 %v337, %v335
      %v344 = vpack.c.bf16 %v338, %v338
      %v345 = vpack.c.bf16 %v339, %v339
      %v346 = vld [vmem:[%s296] sm:$0xff]
      %v347 = vld [vmem:[%s296 + $0x8] sm:$0xff]
      %v348 = vld [vmem:[%s296 + $0x10] sm:$0xff]
      %v349 = vld [vmem:[%s296 + $0x18] sm:$0xff]
      %v350 = vld [vmem:[%s296 + $0x20] sm:$0xff]
      %v351 = vld [vmem:[%s296 + $0x28] sm:$0xff]
      %v352 = vld [vmem:[%s296 + $0x30] sm:$0xff]
      %v353 = vld [vmem:[%s296 + $0x38] sm:$0xff]
      %v354 = vld [vmem:[%s296 + $0x40] sm:$0xff]
      %v355 = vld [vmem:[%s296 + $0x48] sm:$0xff]
      %v356 = vld [vmem:[%s296 + $0x50] sm:$0xff]
      %v357 = vld [vmem:[%s296 + $0x58] sm:$0xff]
      %v358 = vld [vmem:[%s296 + $0x60] sm:$0xff]
      %v359 = vld [vmem:[%s296 + $0x68] sm:$0xff]
      %v360 = vld [vmem:[%s296 + $0x70] sm:$0xff]
      %v361 = vld [vmem:[%s296 + $0x78] sm:$0xff]
      %v362 = vld [vmem:[%s296 + $0x80] sm:$0xff]
      %v363 = vld [vmem:[%s296 + $0x88] sm:$0xff]
      %v364 = vld [vmem:[%s296 + $0x90] sm:$0xff]
      %v365 = vld [vmem:[%s296 + $0x98] sm:$0xff]
      %v366 = vld [vmem:[%s296 + $0xa0] sm:$0xff]
      %v367 = vld [vmem:[%s296 + $0xa8] sm:$0xff]
      %v368 = vld [vmem:[%s296 + $0xb0] sm:$0xff]
      %v369 = vld [vmem:[%s296 + $0xb8] sm:$0xff]
      %v370 = vld [vmem:[%s296 + $0xc0] sm:$0xff]
      %v371 = vld [vmem:[%s296 + $0xc8] sm:$0xff]
      %v372 = vld [vmem:[%s296 + $0xd0] sm:$0xff]
      %v373 = vld [vmem:[%s296 + $0xd8] sm:$0xff]
      %v374 = vld [vmem:[%s296 + $0xe0] sm:$0xff]
      %v375 = vld [vmem:[%s296 + $0xe8] sm:$0xff]
      %v376 = vld [vmem:[%s296 + $0xf0] sm:$0xff]
      %v377 = vld [vmem:[%s296 + $0xf8] sm:$0xff]
      %v378 = vld [vmem:[%s296 + $0x100] sm:$0xff]
      %v379 = vld [vmem:[%s296 + $0x108] sm:$0xff]
      %v380 = vld [vmem:[%s296 + $0x110] sm:$0xff]
      %v381 = vld [vmem:[%s296 + $0x118] sm:$0xff]
      %v382 = vld [vmem:[%s296 + $0x120] sm:$0xff]
      %v383 = vld [vmem:[%s296 + $0x128] sm:$0xff]
      %v384 = vld [vmem:[%s296 + $0x130] sm:$0xff]
      %v385 = vld [vmem:[%s296 + $0x138] sm:$0xff]
      %v386 = vld [vmem:[%s296 + $0x140] sm:$0xff]
      %v387 = vld [vmem:[%s296 + $0x148] sm:$0xff]
      %v388 = vld [vmem:[%s296 + $0x150] sm:$0xff]
      %v389 = vld [vmem:[%s296 + $0x158] sm:$0xff]
      %v390 = vld [vmem:[%s296 + $0x160] sm:$0xff]
      %v391 = vld [vmem:[%s296 + $0x168] sm:$0xff]
      %v392 = vld [vmem:[%s296 + $0x170] sm:$0xff]
      %v393 = vld [vmem:[%s296 + $0x178] sm:$0xff]
      %v394 = vld [vmem:[%s296 + $0x180] sm:$0xff]
      %v395 = vld [vmem:[%s296 + $0x188] sm:$0xff]
      %v396 = vld [vmem:[%s296 + $0x190] sm:$0xff]
      %v397 = vld [vmem:[%s296 + $0x198] sm:$0xff]
      %v398 = vld [vmem:[%s296 + $0x1a0] sm:$0xff]
      %v399 = vld [vmem:[%s296 + $0x1a8] sm:$0xff]
      %v400 = vld [vmem:[%s296 + $0x1b0] sm:$0xff]
      %v401 = vld [vmem:[%s296 + $0x1b8] sm:$0xff]
      %v402 = vld [vmem:[%s296 + $0x1c0] sm:$0xff]
      %v403 = vld [vmem:[%s296 + $0x1c8] sm:$0xff]
      %v404 = vld [vmem:[%s296 + $0x1d0] sm:$0xff]
      %v405 = vld [vmem:[%s296 + $0x1d8] sm:$0xff]
      %v406 = vld [vmem:[%s296 + $0x1e0] sm:$0xff]
      %v407 = vld [vmem:[%s296 + $0x1e8] sm:$0xff]
      %v408 = vld [vmem:[%s296 + $0x1f0] sm:$0xff]
      %v409 = vld [vmem:[%s296 + $0x1f8] sm:$0xff]
      %v410 = vld [vmem:[%s296 + $0x200] sm:$0xff]
      %v411 = vld [vmem:[%s296 + $0x208] sm:$0xff]
      %v412 = vld [vmem:[%s296 + $0x210] sm:$0xff]
      %v413 = vld [vmem:[%s296 + $0x218] sm:$0xff]
      %v414 = vld [vmem:[%s296 + $0x220] sm:$0xff]
      %v415 = vld [vmem:[%s296 + $0x228] sm:$0xff]
      %v416 = vld [vmem:[%s296 + $0x230] sm:$0xff]
      %v417 = vld [vmem:[%s296 + $0x238] sm:$0xff]
      %v418 = vld [vmem:[%s296 + $0x240] sm:$0xff]
      %v419 = vld [vmem:[%s296 + $0x248] sm:$0xff]
      %v420 = vld [vmem:[%s296 + $0x250] sm:$0xff]
      %v421 = vld [vmem:[%s296 + $0x258] sm:$0xff]
      %v422 = vld [vmem:[%s296 + $0x260] sm:$0xff]
      %v423 = vld [vmem:[%s296 + $0x268] sm:$0xff]
      %v424 = vld [vmem:[%s296 + $0x270] sm:$0xff]
      %v425 = vld [vmem:[%s296 + $0x278] sm:$0xff]
      %v426 = vld [vmem:[%s296 + $0x280] sm:$0xff]
      %v427 = vld [vmem:[%s296 + $0x288] sm:$0xff]
      %v428 = vld [vmem:[%s296 + $0x290] sm:$0xff]
      %v429 = vld [vmem:[%s296 + $0x298] sm:$0xff]
      %v430 = vld [vmem:[%s296 + $0x2a0] sm:$0xff]
      %v431 = vld [vmem:[%s296 + $0x2a8] sm:$0xff]
      %v432 = vld [vmem:[%s296 + $0x2b0] sm:$0xff]
      %v433 = vld [vmem:[%s296 + $0x2b8] sm:$0xff]
      %v434 = vld [vmem:[%s296 + $0x2c0] sm:$0xff]
      %v435 = vld [vmem:[%s296 + $0x2c8] sm:$0xff]
      %v436 = vld [vmem:[%s296 + $0x2d0] sm:$0xff]
      %v437 = vld [vmem:[%s296 + $0x2d8] sm:$0xff]
      %v438 = vld [vmem:[%s296 + $0x2e0] sm:$0xff]
      %v439 = vld [vmem:[%s296 + $0x2e8] sm:$0xff]
      %v440 = vld [vmem:[%s296 + $0x2f0] sm:$0xff]
      %v441 = vld [vmem:[%s296 + $0x2f8] sm:$0xff]
      %v442 = vld [vmem:[%s296 + $0x300] sm:$0xff]
      %v443 = vld [vmem:[%s296 + $0x308] sm:$0xff]
      %v444 = vld [vmem:[%s296 + $0x310] sm:$0xff]
      %v445 = vld [vmem:[%s296 + $0x318] sm:$0xff]
      %v446 = vld [vmem:[%s296 + $0x320] sm:$0xff]
      %v447 = vld [vmem:[%s296 + $0x328] sm:$0xff]
      %v448 = vld [vmem:[%s296 + $0x330] sm:$0xff]
      %v449 = vld [vmem:[%s296 + $0x338] sm:$0xff]
      %v450 = vld [vmem:[%s296 + $0x340] sm:$0xff]
      %v451 = vld [vmem:[%s296 + $0x348] sm:$0xff]
      %v452 = vld [vmem:[%s296 + $0x350] sm:$0xff]
      %v453 = vld [vmem:[%s296 + $0x358] sm:$0xff]
      %v454 = vld [vmem:[%s296 + $0x360] sm:$0xff]
      %v455 = vld [vmem:[%s296 + $0x368] sm:$0xff]
      %v456 = vld [vmem:[%s296 + $0x370] sm:$0xff]
      %v457 = vld [vmem:[%s296 + $0x378] sm:$0xff]
      %v458 = vld [vmem:[%s296 + $0x380] sm:$0xff]
      %v459 = vld [vmem:[%s296 + $0x388] sm:$0xff]
      %v460 = vld [vmem:[%s296 + $0x390] sm:$0xff]
      %v461 = vld [vmem:[%s296 + $0x398] sm:$0xff]
      %v462 = vld [vmem:[%s296 + $0x3a0] sm:$0xff]
      %v463 = vld [vmem:[%s296 + $0x3a8] sm:$0xff]
      %v464 = vld [vmem:[%s296 + $0x3b0] sm:$0xff]
      %v465 = vld [vmem:[%s296 + $0x3b8] sm:$0xff]
      %v466 = vld [vmem:[%s296 + $0x3c0] sm:$0xff]
      %v467 = vld [vmem:[%s296 + $0x3c8] sm:$0xff]
      %v468 = vld [vmem:[%s296 + $0x3d0] sm:$0xff]
      %v469 = vld [vmem:[%s296 + $0x3d8] sm:$0xff]
      %v470 = vld [vmem:[%s296 + $0x3e0] sm:$0xff]
      %v471 = vld [vmem:[%s296 + $0x3e8] sm:$0xff]
      %v472 = vld [vmem:[%s296 + $0x3f0] sm:$0xff]
      %v473 = vld [vmem:[%s296 + $0x3f8] sm:$0xff]
      %v474 = vpack.c.bf16 %v340, %v338
      %v475 = vpack.c.bf16 %v341, %v339
      %v476 = vld [vmem:[%s296 + $0x400] sm:$0xff]
      %v477 = vld [vmem:[%s296 + $0x408] sm:$0xff]
      %v478 = vld [vmem:[%s296 + $0x410] sm:$0xff]
      %v479 = vld [vmem:[%s296 + $0x418] sm:$0xff]
      %v480 = vld [vmem:[%s296 + $0x420] sm:$0xff]
      %v481 = vld [vmem:[%s296 + $0x428] sm:$0xff]
      %v482 = vld [vmem:[%s296 + $0x430] sm:$0xff]
      %v483 = vld [vmem:[%s296 + $0x438] sm:$0xff]
      %v484 = vld [vmem:[%s296 + $0x440] sm:$0xff]
      %v485 = vld [vmem:[%s296 + $0x448] sm:$0xff]
      %v486 = vld [vmem:[%s296 + $0x450] sm:$0xff]
      %v487 = vld [vmem:[%s296 + $0x458] sm:$0xff]
      %v488 = vld [vmem:[%s296 + $0x460] sm:$0xff]
      %v489 = vld [vmem:[%s296 + $0x468] sm:$0xff]
      %v490 = vld [vmem:[%s296 + $0x470] sm:$0xff]
      %v491 = vld [vmem:[%s296 + $0x478] sm:$0xff]
      %v492 = vld [vmem:[%s296 + $0x480] sm:$0xff]
      %v493 = vld [vmem:[%s296 + $0x488] sm:$0xff]
      %v494 = vld [vmem:[%s296 + $0x490] sm:$0xff]
      %v495 = vld [vmem:[%s296 + $0x498] sm:$0xff]
      %v496 = vld [vmem:[%s296 + $0x4a0] sm:$0xff]
      %v497 = vld [vmem:[%s296 + $0x4a8] sm:$0xff]
      %v498 = vld [vmem:[%s296 + $0x4b0] sm:$0xff]
      %v499 = vld [vmem:[%s296 + $0x4b8] sm:$0xff]
      %v500 = vld [vmem:[%s296 + $0x4c0] sm:$0xff]
      %v501 = vld [vmem:[%s296 + $0x4c8] sm:$0xff]
      %v502 = vld [vmem:[%s296 + $0x4d0] sm:$0xff]
      %v503 = vld [vmem:[%s296 + $0x4d8] sm:$0xff]
      %v504 = vld [vmem:[%s296 + $0x4e0] sm:$0xff]
      %v505 = vld [vmem:[%s296 + $0x4e8] sm:$0xff]
      %v506 = vld [vmem:[%s296 + $0x4f0] sm:$0xff]
      %v507 = vld [vmem:[%s296 + $0x4f8] sm:$0xff]
      %v508 = vld [vmem:[%s296 + $0x500] sm:$0xff]
      %v509 = vld [vmem:[%s296 + $0x508] sm:$0xff]
      %v510 = vld [vmem:[%s296 + $0x510] sm:$0xff]
      %v511 = vld [vmem:[%s296 + $0x518] sm:$0xff]
      %v512 = vld [vmem:[%s296 + $0x520] sm:$0xff]
      %v513 = vld [vmem:[%s296 + $0x528] sm:$0xff]
      %v514 = vld [vmem:[%s296 + $0x530] sm:$0xff]
      %v515 = vld [vmem:[%s296 + $0x538] sm:$0xff]
      %v516 = vld [vmem:[%s296 + $0x540] sm:$0xff]
      %v517 = vld [vmem:[%s296 + $0x548] sm:$0xff]
      %v518 = vld [vmem:[%s296 + $0x550] sm:$0xff]
      %v519 = vld [vmem:[%s296 + $0x558] sm:$0xff]
      %v520 = vld [vmem:[%s296 + $0x560] sm:$0xff]
      %v521 = vld [vmem:[%s296 + $0x568] sm:$0xff]
      %v522 = vld [vmem:[%s296 + $0x570] sm:$0xff]
      %v523 = vld [vmem:[%s296 + $0x578] sm:$0xff]
      %v524 = vld [vmem:[%s296 + $0x580] sm:$0xff]
      %v525 = vld [vmem:[%s296 + $0x588] sm:$0xff]
      %v526 = vld [vmem:[%s296 + $0x590] sm:$0xff]
      %v527 = vld [vmem:[%s296 + $0x598] sm:$0xff]
      %v528 = vld [vmem:[%s296 + $0x5a0] sm:$0xff]
      %v529 = vld [vmem:[%s296 + $0x5a8] sm:$0xff]
      %v530 = vld [vmem:[%s296 + $0x5b0] sm:$0xff]
      %v531 = vld [vmem:[%s296 + $0x5b8] sm:$0xff]
      %v532 = vld [vmem:[%s296 + $0x5c0] sm:$0xff]
      %v533 = vld [vmem:[%s296 + $0x5c8] sm:$0xff]
      %v534 = vld [vmem:[%s296 + $0x5d0] sm:$0xff]
      %v535 = vld [vmem:[%s296 + $0x5d8] sm:$0xff]
      %v536 = vld [vmem:[%s296 + $0x5e0] sm:$0xff]
      %v537 = vld [vmem:[%s296 + $0x5e8] sm:$0xff]
      %v538 = vld [vmem:[%s296 + $0x5f0] sm:$0xff]
      %v539 = vld [vmem:[%s296 + $0x5f8] sm:$0xff]
      %v540 = vld [vmem:[%s296 + $0x600] sm:$0xff]
      %v541 = vld [vmem:[%s296 + $0x608] sm:$0xff]
      %v542 = vld [vmem:[%s296 + $0x610] sm:$0xff]
      %v543 = vld [vmem:[%s296 + $0x618] sm:$0xff]
      %v544 = vld [vmem:[%s296 + $0x620] sm:$0xff]
      %v545 = vld [vmem:[%s296 + $0x628] sm:$0xff]
      %v546 = vld [vmem:[%s296 + $0x630] sm:$0xff]
      %v547 = vld [vmem:[%s296 + $0x638] sm:$0xff]
      %v548 = vld [vmem:[%s296 + $0x640] sm:$0xff]
      %v549 = vld [vmem:[%s296 + $0x648] sm:$0xff]
      %v550 = vld [vmem:[%s296 + $0x650] sm:$0xff]
      %v551 = vld [vmem:[%s296 + $0x658] sm:$0xff]
      %v552 = vld [vmem:[%s296 + $0x660] sm:$0xff]
      %v553 = vld [vmem:[%s296 + $0x668] sm:$0xff]
      %v554 = vld [vmem:[%s296 + $0x670] sm:$0xff]
      %v555 = vld [vmem:[%s296 + $0x678] sm:$0xff]
      %v556 = vld [vmem:[%s296 + $0x680] sm:$0xff]
      %v557 = vld [vmem:[%s296 + $0x688] sm:$0xff]
      %v558 = vld [vmem:[%s296 + $0x690] sm:$0xff]
      %v559 = vld [vmem:[%s296 + $0x698] sm:$0xff]
      %v560 = vld [vmem:[%s296 + $0x6a0] sm:$0xff]
      %v561 = vld [vmem:[%s296 + $0x6a8] sm:$0xff]
      %v562 = vld [vmem:[%s296 + $0x6b0] sm:$0xff]
      %v563 = vld [vmem:[%s296 + $0x6b8] sm:$0xff]
      %v564 = vld [vmem:[%s296 + $0x6c0] sm:$0xff]
      %v565 = vld [vmem:[%s296 + $0x6c8] sm:$0xff]
      %v566 = vld [vmem:[%s296 + $0x6d0] sm:$0xff]
      %v567 = vld [vmem:[%s296 + $0x6d8] sm:$0xff]
      %v568 = vld [vmem:[%s296 + $0x6e0] sm:$0xff]
      %v569 = vld [vmem:[%s296 + $0x6e8] sm:$0xff]
      %v570 = vld [vmem:[%s296 + $0x6f0] sm:$0xff]
      %v571 = vld [vmem:[%s296 + $0x6f8] sm:$0xff]
      %v572 = vld [vmem:[%s296 + $0x700] sm:$0xff]
      %v573 = vld [vmem:[%s296 + $0x708] sm:$0xff]
      %v574 = vld [vmem:[%s296 + $0x710] sm:$0xff]
      %v575 = vld [vmem:[%s296 + $0x718] sm:$0xff]
      %v576 = vld [vmem:[%s296 + $0x720] sm:$0xff]
      %v577 = vld [vmem:[%s296 + $0x728] sm:$0xff]
      %v578 = vld [vmem:[%s296 + $0x730] sm:$0xff]
      %v579 = vld [vmem:[%s296 + $0x738] sm:$0xff]
      %v580 = vld [vmem:[%s296 + $0x740] sm:$0xff]
      %v581 = vld [vmem:[%s296 + $0x748] sm:$0xff]
      %v582 = vld [vmem:[%s296 + $0x750] sm:$0xff]
      %v583 = vld [vmem:[%s296 + $0x758] sm:$0xff]
      %v584 = vld [vmem:[%s296 + $0x760] sm:$0xff]
      %v585 = vld [vmem:[%s296 + $0x768] sm:$0xff]
      %v586 = vld [vmem:[%s296 + $0x770] sm:$0xff]
      %v587 = vld [vmem:[%s296 + $0x778] sm:$0xff]
      %v588 = vld [vmem:[%s296 + $0x780] sm:$0xff]
      %v589 = vld [vmem:[%s296 + $0x788] sm:$0xff]
      %v590 = vld [vmem:[%s296 + $0x790] sm:$0xff]
      %v591 = vld [vmem:[%s296 + $0x798] sm:$0xff]
      %v592 = vld [vmem:[%s296 + $0x7a0] sm:$0xff]
      %v593 = vld [vmem:[%s296 + $0x7a8] sm:$0xff]
      %v594 = vld [vmem:[%s296 + $0x7b0] sm:$0xff]
      %v595 = vld [vmem:[%s296 + $0x7b8] sm:$0xff]
      %v596 = vld [vmem:[%s296 + $0x7c0] sm:$0xff]
      %v597 = vld [vmem:[%s296 + $0x7c8] sm:$0xff]
      %v598 = vld [vmem:[%s296 + $0x7d0] sm:$0xff]
      %v599 = vld [vmem:[%s296 + $0x7d8] sm:$0xff]
      %v600 = vld [vmem:[%s296 + $0x7e0] sm:$0xff]
      %v601 = vld [vmem:[%s296 + $0x7e8] sm:$0xff]
      %v602 = vld [vmem:[%s296 + $0x7f0] sm:$0xff]
      %v603 = vld [vmem:[%s296 + $0x7f8] sm:$0xff]
      %vm604 = vsmask.f32 7424
      %v606 = vshrl.u32 %v342, 16
      %v608 = vshll.u32 %v342, 16
      %v610 = vrot.slane %v608, 1
      %v611 = vor.u32 %v606, %v610
      %v613 = vshll.u32 %v474, 16
      %v615 = vrot.slane %v613, 1
      %v616 = vsel %vm604, %v611, %v615
      %v618 = vshrl.u32 %v343, 16
      %v620 = vshll.u32 %v343, 16
      %v622 = vrot.slane %v620, 1
      %v623 = vor.u32 %v618, %v622
      %v625 = vshll.u32 %v475, 16
      %v627 = vrot.slane %v625, 1
      %v628 = vsel %vm604, %v623, %v627
      %v629 = vshrl.u32 %v474, 16
      %v631 = vor.u32 %v629, %v615
      %v632 = vshrl.u32 %v475, 16
      %v634 = vor.u32 %v632, %v627
      %v767 = vunpack.c.l.b16 %v476
      %v768 = vunpack.c.h.b16 %v476
      %v769 = vunpack.c.l.b16 %v477
      %v770 = vunpack.c.h.b16 %v477
      %v771 = vunpack.c.l.b16 %v478
      %v772 = vunpack.c.h.b16 %v478
      %v773 = vunpack.c.l.b16 %v479
      %v774 = vunpack.c.h.b16 %v479
      %v775 = vunpack.c.l.b16 %v480
      %v776 = vunpack.c.h.b16 %v480
      %v777 = vunpack.c.l.b16 %v481
      %v778 = vunpack.c.h.b16 %v481
      %v779 = vunpack.c.l.b16 %v482
      %v780 = vunpack.c.h.b16 %v482
      %v781 = vunpack.c.l.b16 %v483
      %v782 = vunpack.c.h.b16 %v483
      %v783 = vunpack.c.l.b16 %v484
      %v784 = vunpack.c.h.b16 %v484
      %v785 = vunpack.c.l.b16 %v485
      %v786 = vunpack.c.h.b16 %v485
      %v787 = vunpack.c.l.b16 %v486
      %v788 = vunpack.c.h.b16 %v486
      %v789 = vunpack.c.l.b16 %v487
      %v790 = vunpack.c.h.b16 %v487
      %v791 = vunpack.c.l.b16 %v488
      %v792 = vunpack.c.h.b16 %v488
      %v793 = vunpack.c.l.b16 %v489
      %v794 = vunpack.c.h.b16 %v489
      %v795 = vunpack.c.l.b16 %v490
      %v796 = vunpack.c.h.b16 %v490
      %v797 = vunpack.c.l.b16 %v491
      %v798 = vunpack.c.h.b16 %v491
      %v799 = vunpack.c.l.b16 %v492
      %v800 = vunpack.c.h.b16 %v492
      %v801 = vunpack.c.l.b16 %v493
      %v802 = vunpack.c.h.b16 %v493
      %v803 = vunpack.c.l.b16 %v494
      %v804 = vunpack.c.h.b16 %v494
      %v805 = vunpack.c.l.b16 %v495
      %v806 = vunpack.c.h.b16 %v495
      %v807 = vunpack.c.l.b16 %v496
      %v808 = vunpack.c.h.b16 %v496
      %v809 = vunpack.c.l.b16 %v497
      %v810 = vunpack.c.h.b16 %v497
      %v811 = vunpack.c.l.b16 %v498
      %v812 = vunpack.c.h.b16 %v498
      %v813 = vunpack.c.l.b16 %v499
      %v814 = vunpack.c.h.b16 %v499
      %v815 = vunpack.c.l.b16 %v500
      %v816 = vunpack.c.h.b16 %v500
      %v817 = vunpack.c.l.b16 %v501
      %v818 = vunpack.c.h.b16 %v501
      %v819 = vunpack.c.l.b16 %v502
      %v820 = vunpack.c.h.b16 %v502
      %v821 = vunpack.c.l.b16 %v503
      %v822 = vunpack.c.h.b16 %v503
      %v823 = vunpack.c.l.b16 %v504
      %v824 = vunpack.c.h.b16 %v504
      %v825 = vunpack.c.l.b16 %v505
      %v826 = vunpack.c.h.b16 %v505
      %v827 = vunpack.c.l.b16 %v506
      %v828 = vunpack.c.h.b16 %v506
      %v829 = vunpack.c.l.b16 %v507
      %v830 = vunpack.c.h.b16 %v507
      %v831 = vunpack.c.l.b16 %v508
      %v832 = vunpack.c.h.b16 %v508
      %v833 = vunpack.c.l.b16 %v509
      %v834 = vunpack.c.h.b16 %v509
      %v835 = vunpack.c.l.b16 %v510
      %v836 = vunpack.c.h.b16 %v510
      %v837 = vunpack.c.l.b16 %v511
      %v838 = vunpack.c.h.b16 %v511
      %v839 = vunpack.c.l.b16 %v512
      %v840 = vunpack.c.h.b16 %v512
      %v841 = vunpack.c.l.b16 %v513
      %v842 = vunpack.c.h.b16 %v513
      %v843 = vunpack.c.l.b16 %v514
      %v844 = vunpack.c.h.b16 %v514
      %v845 = vunpack.c.l.b16 %v515
      %v846 = vunpack.c.h.b16 %v515
      %v847 = vunpack.c.l.b16 %v516
      %v848 = vunpack.c.h.b16 %v516
      %v849 = vunpack.c.l.b16 %v517
      %v850 = vunpack.c.h.b16 %v517
      %v851 = vunpack.c.l.b16 %v518
      %v852 = vunpack.c.h.b16 %v518
      %v853 = vunpack.c.l.b16 %v519
      %v854 = vunpack.c.h.b16 %v519
      %v855 = vunpack.c.l.b16 %v520
      %v856 = vunpack.c.h.b16 %v520
      %v857 = vunpack.c.l.b16 %v521
      %v858 = vunpack.c.h.b16 %v521
      %v859 = vunpack.c.l.b16 %v522
      %v860 = vunpack.c.h.b16 %v522
      %v861 = vunpack.c.l.b16 %v523
      %v862 = vunpack.c.h.b16 %v523
      %v863 = vunpack.c.l.b16 %v524
      %v864 = vunpack.c.h.b16 %v524
      %v865 = vunpack.c.l.b16 %v525
      %v866 = vunpack.c.h.b16 %v525
      %v867 = vunpack.c.l.b16 %v526
      %v868 = vunpack.c.h.b16 %v526
      %v869 = vunpack.c.l.b16 %v527
      %v870 = vunpack.c.h.b16 %v527
      %v871 = vunpack.c.l.b16 %v528
      %v872 = vunpack.c.h.b16 %v528
      %v873 = vunpack.c.l.b16 %v529
      %v874 = vunpack.c.h.b16 %v529
      %v875 = vunpack.c.l.b16 %v530
      %v876 = vunpack.c.h.b16 %v530
      %v877 = vunpack.c.l.b16 %v531
      %v878 = vunpack.c.h.b16 %v531
      %v879 = vunpack.c.l.b16 %v532
      %v880 = vunpack.c.h.b16 %v532
      %v881 = vunpack.c.l.b16 %v533
      %v882 = vunpack.c.h.b16 %v533
      %v883 = vunpack.c.l.b16 %v534
      %v884 = vunpack.c.h.b16 %v534
      %v885 = vunpack.c.l.b16 %v535
      %v886 = vunpack.c.h.b16 %v535
      %v887 = vunpack.c.l.b16 %v536
      %v888 = vunpack.c.h.b16 %v536
      %v889 = vunpack.c.l.b16 %v537
      %v890 = vunpack.c.h.b16 %v537
      %v891 = vunpack.c.l.b16 %v538
      %v892 = vunpack.c.h.b16 %v538
      %v893 = vunpack.c.l.b16 %v539
      %v894 = vunpack.c.h.b16 %v539
      %v895 = vunpack.c.l.b16 %v540
      %v896 = vunpack.c.h.b16 %v540
      %v897 = vunpack.c.l.b16 %v541
      %v898 = vunpack.c.h.b16 %v541
      %v899 = vunpack.c.l.b16 %v542
      %v900 = vunpack.c.h.b16 %v542
      %v901 = vunpack.c.l.b16 %v543
      %v902 = vunpack.c.h.b16 %v543
      %v903 = vunpack.c.l.b16 %v544
      %v904 = vunpack.c.h.b16 %v544
      %v905 = vunpack.c.l.b16 %v545
      %v906 = vunpack.c.h.b16 %v545
      %v907 = vunpack.c.l.b16 %v546
      %v908 = vunpack.c.h.b16 %v546
      %v909 = vunpack.c.l.b16 %v547
      %v910 = vunpack.c.h.b16 %v547
      %v911 = vunpack.c.l.b16 %v548
      %v912 = vunpack.c.h.b16 %v548
      %v913 = vunpack.c.l.b16 %v549
      %v914 = vunpack.c.h.b16 %v549
      %v915 = vunpack.c.l.b16 %v550
      %v916 = vunpack.c.h.b16 %v550
      %v917 = vunpack.c.l.b16 %v551
      %v918 = vunpack.c.h.b16 %v551
      %v919 = vunpack.c.l.b16 %v552
      %v920 = vunpack.c.h.b16 %v552
      %v921 = vunpack.c.l.b16 %v553
      %v922 = vunpack.c.h.b16 %v553
      %v923 = vunpack.c.l.b16 %v554
      %v924 = vunpack.c.h.b16 %v554
      %v925 = vunpack.c.l.b16 %v555
      %v926 = vunpack.c.h.b16 %v555
      %v927 = vunpack.c.l.b16 %v556
      %v928 = vunpack.c.h.b16 %v556
      %v929 = vunpack.c.l.b16 %v557
      %v930 = vunpack.c.h.b16 %v557
      %v931 = vunpack.c.l.b16 %v558
      %v932 = vunpack.c.h.b16 %v558
      %v933 = vunpack.c.l.b16 %v559
      %v934 = vunpack.c.h.b16 %v559
      %v935 = vunpack.c.l.b16 %v560
      %v936 = vunpack.c.h.b16 %v560
      %v937 = vunpack.c.l.b16 %v561
      %v938 = vunpack.c.h.b16 %v561
      %v939 = vunpack.c.l.b16 %v562
      %v940 = vunpack.c.h.b16 %v562
      %v941 = vunpack.c.l.b16 %v563
      %v942 = vunpack.c.h.b16 %v563
      %v943 = vunpack.c.l.b16 %v564
      %v944 = vunpack.c.h.b16 %v564
      %v945 = vunpack.c.l.b16 %v565
      %v946 = vunpack.c.h.b16 %v565
      %v947 = vunpack.c.l.b16 %v566
      %v948 = vunpack.c.h.b16 %v566
      %v949 = vunpack.c.l.b16 %v567
      %v950 = vunpack.c.h.b16 %v567
      %v951 = vunpack.c.l.b16 %v568
      %v952 = vunpack.c.h.b16 %v568
      %v953 = vunpack.c.l.b16 %v569
      %v954 = vunpack.c.h.b16 %v569
      %v955 = vunpack.c.l.b16 %v570
      %v956 = vunpack.c.h.b16 %v570
      %v957 = vunpack.c.l.b16 %v571
      %v958 = vunpack.c.h.b16 %v571
      %v959 = vunpack.c.l.b16 %v572
      %v960 = vunpack.c.h.b16 %v572
      %v961 = vunpack.c.l.b16 %v573
      %v962 = vunpack.c.h.b16 %v573
      %v963 = vunpack.c.l.b16 %v574
      %v964 = vunpack.c.h.b16 %v574
      %v965 = vunpack.c.l.b16 %v575
      %v966 = vunpack.c.h.b16 %v575
      %v967 = vunpack.c.l.b16 %v576
      %v968 = vunpack.c.h.b16 %v576
      %v969 = vunpack.c.l.b16 %v577
      %v970 = vunpack.c.h.b16 %v577
      %v971 = vunpack.c.l.b16 %v578
      %v972 = vunpack.c.h.b16 %v578
      %v973 = vunpack.c.l.b16 %v579
      %v974 = vunpack.c.h.b16 %v579
      %v975 = vunpack.c.l.b16 %v580
      %v976 = vunpack.c.h.b16 %v580
      %v977 = vunpack.c.l.b16 %v581
      %v978 = vunpack.c.h.b16 %v581
      %v979 = vunpack.c.l.b16 %v582
      %v980 = vunpack.c.h.b16 %v582
      %v981 = vunpack.c.l.b16 %v583
      %v982 = vunpack.c.h.b16 %v583
      %v983 = vunpack.c.l.b16 %v584
      %v984 = vunpack.c.h.b16 %v584
      %v985 = vunpack.c.l.b16 %v585
      %v986 = vunpack.c.h.b16 %v585
      %v987 = vunpack.c.l.b16 %v586
      %v988 = vunpack.c.h.b16 %v586
      %v989 = vunpack.c.l.b16 %v587
      %v990 = vunpack.c.h.b16 %v587
      %v991 = vunpack.c.l.b16 %v588
      %v992 = vunpack.c.h.b16 %v588
      %v993 = vunpack.c.l.b16 %v589
      %v994 = vunpack.c.h.b16 %v589
      %v995 = vunpack.c.l.b16 %v590
      %v996 = vunpack.c.h.b16 %v590
      %v997 = vunpack.c.l.b16 %v591
      %v998 = vunpack.c.h.b16 %v591
      %v999 = vunpack.c.l.b16 %v592
      %v1000 = vunpack.c.h.b16 %v592
      %v1001 = vunpack.c.l.b16 %v593
      %v1002 = vunpack.c.h.b16 %v593
      %v1003 = vunpack.c.l.b16 %v594
      %v1004 = vunpack.c.h.b16 %v594
      %v1005 = vunpack.c.l.b16 %v595
      %v1006 = vunpack.c.h.b16 %v595
      %v1007 = vunpack.c.l.b16 %v596
      %v1008 = vunpack.c.h.b16 %v596
      %v1009 = vunpack.c.l.b16 %v597
      %v1010 = vunpack.c.h.b16 %v597
      %v1011 = vunpack.c.l.b16 %v598
      %v1012 = vunpack.c.h.b16 %v598
      %v1013 = vunpack.c.l.b16 %v599
      %v1014 = vunpack.c.h.b16 %v599
      %v1015 = vunpack.c.l.b16 %v600
      %v1016 = vunpack.c.h.b16 %v600
      %v1017 = vunpack.c.l.b16 %v601
      %v1018 = vunpack.c.h.b16 %v601
      %v1019 = vunpack.c.l.b16 %v602
      %v1020 = vunpack.c.h.b16 %v602
      %v1021 = vunpack.c.l.b16 %v603
      %v1022 = vunpack.c.h.b16 %v603
      %v1023 = vpack.c.b16 %v775, %v767
      %v1024 = vpack.c.b16 %v776, %v768
      %v1025 = vpack.c.b16 %v777, %v769
      %v1026 = vpack.c.b16 %v778, %v770
      %v1027 = vpack.c.b16 %v779, %v771
      %v1028 = vpack.c.b16 %v780, %v772
      %v1029 = vpack.c.b16 %v781, %v773
      %v1030 = vpack.c.b16 %v782, %v774
      %v1031 = vpack.c.b16 %v791, %v783
      %v1032 = vpack.c.b16 %v792, %v784
      %v1033 = vpack.c.b16 %v793, %v785
      %v1034 = vpack.c.b16 %v794, %v786
      %v1035 = vpack.c.b16 %v795, %v787
      %v1036 = vpack.c.b16 %v796, %v788
      %v1037 = vpack.c.b16 %v797, %v789
      %v1038 = vpack.c.b16 %v798, %v790
      %v1039 = vpack.c.b16 %v807, %v799
      %v1040 = vpack.c.b16 %v808, %v800
      %v1041 = vpack.c.b16 %v809, %v801
      %v1042 = vpack.c.b16 %v810, %v802
      %v1043 = vpack.c.b16 %v811, %v803
      %v1044 = vpack.c.b16 %v812, %v804
      %v1045 = vpack.c.b16 %v813, %v805
      %v1046 = vpack.c.b16 %v814, %v806
      %v1047 = vpack.c.b16 %v823, %v815
      %v1048 = vpack.c.b16 %v824, %v816
      %v1049 = vpack.c.b16 %v825, %v817
      %v1050 = vpack.c.b16 %v826, %v818
      %v1051 = vpack.c.b16 %v827, %v819
      %v1052 = vpack.c.b16 %v828, %v820
      %v1053 = vpack.c.b16 %v829, %v821
      %v1054 = vpack.c.b16 %v830, %v822
      %v1055 = vpack.c.b16 %v839, %v831
      %v1056 = vpack.c.b16 %v840, %v832
      %v1057 = vpack.c.b16 %v841, %v833
      %v1058 = vpack.c.b16 %v842, %v834
      %v1059 = vpack.c.b16 %v843, %v835
      %v1060 = vpack.c.b16 %v844, %v836
      %v1061 = vpack.c.b16 %v845, %v837
      %v1062 = vpack.c.b16 %v846, %v838
      %v1063 = vpack.c.b16 %v855, %v847
      %v1064 = vpack.c.b16 %v856, %v848
      %v1065 = vpack.c.b16 %v857, %v849
      %v1066 = vpack.c.b16 %v858, %v850
      %v1067 = vpack.c.b16 %v859, %v851
      %v1068 = vpack.c.b16 %v860, %v852
      %v1069 = vpack.c.b16 %v861, %v853
      %v1070 = vpack.c.b16 %v862, %v854
      %v1071 = vpack.c.b16 %v871, %v863
      %v1072 = vpack.c.b16 %v872, %v864
      %v1073 = vpack.c.b16 %v873, %v865
      %v1074 = vpack.c.b16 %v874, %v866
      %v1075 = vpack.c.b16 %v875, %v867
      %v1076 = vpack.c.b16 %v876, %v868
      %v1077 = vpack.c.b16 %v877, %v869
      %v1078 = vpack.c.b16 %v878, %v870
      %v1079 = vpack.c.b16 %v887, %v879
      %v1080 = vpack.c.b16 %v888, %v880
      %v1081 = vpack.c.b16 %v889, %v881
      %v1082 = vpack.c.b16 %v890, %v882
      %v1083 = vpack.c.b16 %v891, %v883
      %v1084 = vpack.c.b16 %v892, %v884
      %v1085 = vpack.c.b16 %v893, %v885
      %v1086 = vpack.c.b16 %v894, %v886
      %v1087 = vpack.c.b16 %v903, %v895
      %v1088 = vpack.c.b16 %v904, %v896
      %v1089 = vpack.c.b16 %v905, %v897
      %v1090 = vpack.c.b16 %v906, %v898
      %v1091 = vpack.c.b16 %v907, %v899
      %v1092 = vpack.c.b16 %v908, %v900
      %v1093 = vpack.c.b16 %v909, %v901
      %v1094 = vpack.c.b16 %v910, %v902
      %v1095 = vpack.c.b16 %v919, %v911
      %v1096 = vpack.c.b16 %v920, %v912
      %v1097 = vpack.c.b16 %v921, %v913
      %v1098 = vpack.c.b16 %v922, %v914
      %v1099 = vpack.c.b16 %v923, %v915
      %v1100 = vpack.c.b16 %v924, %v916
      %v1101 = vpack.c.b16 %v925, %v917
      %v1102 = vpack.c.b16 %v926, %v918
      %v1103 = vpack.c.b16 %v935, %v927
      %v1104 = vpack.c.b16 %v936, %v928
      %v1105 = vpack.c.b16 %v937, %v929
      %v1106 = vpack.c.b16 %v938, %v930
      %v1107 = vpack.c.b16 %v939, %v931
      %v1108 = vpack.c.b16 %v940, %v932
      %v1109 = vpack.c.b16 %v941, %v933
      %v1110 = vpack.c.b16 %v942, %v934
      %v1111 = vpack.c.b16 %v951, %v943
      %v1112 = vpack.c.b16 %v952, %v944
      %v1113 = vpack.c.b16 %v953, %v945
      %v1114 = vpack.c.b16 %v954, %v946
      %v1115 = vpack.c.b16 %v955, %v947
      %v1116 = vpack.c.b16 %v956, %v948
      %v1117 = vpack.c.b16 %v957, %v949
      %v1118 = vpack.c.b16 %v958, %v950
      %v1119 = vpack.c.b16 %v967, %v959
      %v1120 = vpack.c.b16 %v968, %v960
      %v1121 = vpack.c.b16 %v969, %v961
      %v1122 = vpack.c.b16 %v970, %v962
      %v1123 = vpack.c.b16 %v971, %v963
      %v1124 = vpack.c.b16 %v972, %v964
      %v1125 = vpack.c.b16 %v973, %v965
      %v1126 = vpack.c.b16 %v974, %v966
      %v1127 = vpack.c.b16 %v983, %v975
      %v1128 = vpack.c.b16 %v984, %v976
      %v1129 = vpack.c.b16 %v985, %v977
      %v1130 = vpack.c.b16 %v986, %v978
      %v1131 = vpack.c.b16 %v987, %v979
      %v1132 = vpack.c.b16 %v988, %v980
      %v1133 = vpack.c.b16 %v989, %v981
      %v1134 = vpack.c.b16 %v990, %v982
      %v1135 = vpack.c.b16 %v999, %v991
      %v1136 = vpack.c.b16 %v1000, %v992
      %v1137 = vpack.c.b16 %v1001, %v993
      %v1138 = vpack.c.b16 %v1002, %v994
      %v1139 = vpack.c.b16 %v1003, %v995
      %v1140 = vpack.c.b16 %v1004, %v996
      %v1141 = vpack.c.b16 %v1005, %v997
      %v1142 = vpack.c.b16 %v1006, %v998
      %v1143 = vpack.c.b16 %v1015, %v1007
      %v1144 = vpack.c.b16 %v1016, %v1008
      %v1145 = vpack.c.b16 %v1017, %v1009
      %v1146 = vpack.c.b16 %v1018, %v1010
      %v1147 = vpack.c.b16 %v1019, %v1011
      %v1148 = vpack.c.b16 %v1020, %v1012
      %v1149 = vpack.c.b16 %v1021, %v1013
      %v1150 = vpack.c.b16 %v1022, %v1014
      %1279 = vmatprep.subr.bf16.mxu0 %v1024
      %1280 = vmatpush1.bf16.msra.mxu0 %v1023
      %1281 = vmatprep.subr.bf16.mxu0 %v1032
      %1282 = vmatpush1.bf16.msra.mxu0 %v1031
      %1283 = vmatprep.subr.bf16.mxu0 %v1040
      %1284 = vmatpush1.bf16.msra.mxu0 %v1039
      %1285 = vmatprep.subr.bf16.mxu0 %v1048
      %1286 = vmatpush1.bf16.msra.mxu0 %v1047
      %1287 = vmatprep.subr.bf16.mxu0 %v1056
      %1288 = vmatpush1.bf16.msra.mxu0 %v1055
      %1289 = vmatprep.subr.bf16.mxu0 %v1064
      %1290 = vmatpush1.bf16.msra.mxu0 %v1063
      %1291 = vmatprep.subr.bf16.mxu0 %v1072
      %1292 = vmatpush1.bf16.msra.mxu0 %v1071
      %1293 = vmatprep.subr.bf16.mxu0 %v1080
      %1294 = vmatpush1.bf16.msra.mxu0 %v1079
      %1295 = vmatprep.subr.bf16.mxu0 %v1088
      %1296 = vmatpush1.bf16.msra.mxu0 %v1087
      %1297 = vmatprep.subr.bf16.mxu0 %v1096
      %1298 = vmatpush1.bf16.msra.mxu0 %v1095
      %1299 = vmatprep.subr.bf16.mxu0 %v1104
      %1300 = vmatpush1.bf16.msra.mxu0 %v1103
      %1301 = vmatprep.subr.bf16.mxu0 %v1112
      %1302 = vmatpush1.bf16.msra.mxu0 %v1111
      %1303 = vmatprep.subr.bf16.mxu0 %v1120
      %1304 = vmatpush1.bf16.msra.mxu0 %v1119
      %1305 = vmatprep.subr.bf16.mxu0 %v1128
      %1306 = vmatpush1.bf16.msra.mxu0 %v1127
      %1307 = vmatprep.subr.bf16.mxu0 %v1136
      %1308 = vmatpush1.bf16.msra.mxu0 %v1135
      %1309 = vmatprep.subr.bf16.mxu0 %v1144
      %1310 = vmatpush1.bf16.msra.mxu0 %v1143
      %1311 = vmatprep.mubr.bf16.mxu0 %v628
      %1312 = vmatmul.mubr.bf16.gmra.mrb[0].mxu0 %v616
      %v1313 = vpop.f32.mrb[0].mxu0
      %v1314 = vadd.f32 0.0, %v1313
      %v1315 = vpop.f32.mrb[0].mxu0
      %v1316 = vadd.f32 0.0, %v1315
      %v1317 = vpop.f32.mrb[0].mxu0
      %v1318 = vadd.f32 0.0, %v1317
      %v1319 = vpop.f32.mrb[0].mxu0
      %v1320 = vadd.f32 0.0, %v1319
      %1321 = vmatprep.mubr.bf16.mxu0 %v634
      %1322 = vmatmul.mubr.bf16.gmra.mrb[0].mxu0 %v631
      %v1323 = vpop.f32.mrb[0].mxu0
      %v1324 = vadd.f32 0.0, %v1323
      %v1325 = vpop.f32.mrb[0].mxu0
      %v1326 = vadd.f32 0.0, %v1325
      %v1327 = vpop.f32.mrb[0].mxu0
      %v1328 = vpop.f32.mrb[0].mxu0
      %1329 = vdwg.mxu0
      %1330 = vmatprep.subr.bf16.mxu0 %v1026
      %1331 = vmatpush1.bf16.msra.mxu0 %v1025
      %1332 = vmatprep.subr.bf16.mxu0 %v1034
      %1333 = vmatpush1.bf16.msra.mxu0 %v1033
      %1334 = vmatprep.subr.bf16.mxu0 %v1042
      %1335 = vmatpush1.bf16.msra.mxu0 %v1041
      %1336 = vmatprep.subr.bf16.mxu0 %v1050
      %1337 = vmatpush1.bf16.msra.mxu0 %v1049
      %1338 = vmatprep.subr.bf16.mxu0 %v1058
      %1339 = vmatpush1.bf16.msra.mxu0 %v1057
      %1340 = vmatprep.subr.bf16.mxu0 %v1066
      %1341 = vmatpush1.bf16.msra.mxu0 %v1065
      %1342 = vmatprep.subr.bf16.mxu0 %v1074
      %1343 = vmatpush1.bf16.msra.mxu0 %v1073
      %1344 = vmatprep.subr.bf16.mxu0 %v1082
      %1345 = vmatpush1.bf16.msra.mxu0 %v1081
      %1346 = vmatprep.subr.bf16.mxu0 %v1090
      %1347 = vmatpush1.bf16.msra.mxu0 %v1089
      %1348 = vmatprep.subr.bf16.mxu0 %v1098
      %1349 = vmatpush1.bf16.msra.mxu0 %v1097
      %1350 = vmatprep.subr.bf16.mxu0 %v1106
      %1351 = vmatpush1.bf16.msra.mxu0 %v1105
      %1352 = vmatprep.subr.bf16.mxu0 %v1114
      %1353 = vmatpush1.bf16.msra.mxu0 %v1113
      %1354 = vmatprep.subr.bf16.mxu0 %v1122
      %1355 = vmatpush1.bf16.msra.mxu0 %v1121
      %1356 = vmatprep.subr.bf16.mxu0 %v1130
      %1357 = vmatpush1.bf16.msra.mxu0 %v1129
      %1358 = vmatprep.subr.bf16.mxu0 %v1138
      %1359 = vmatpush1.bf16.msra.mxu0 %v1137
      %1360 = vmatprep.subr.bf16.mxu0 %v1146
      %1361 = vmatpush1.bf16.msra.mxu0 %v1145
      %1362 = vmatprep.mubr.bf16.mxu0 %v628
      %1363 = vmatmul.mubr.bf16.gmra.mrb[0].mxu0 %v616
      %v1364 = vpop.f32.mrb[0].mxu0
      %v1365 = vadd.f32 0.0, %v1364
      %v1366 = vpop.f32.mrb[0].mxu0
      %v1367 = vadd.f32 0.0, %v1366
      %v1368 = vpop.f32.mrb[0].mxu0
      %v1369 = vadd.f32 0.0, %v1368
      %v1370 = vpop.f32.mrb[0].mxu0
      %v1371 = vadd.f32 0.0, %v1370
      %1372 = vmatprep.mubr.bf16.mxu0 %v634
      %1373 = vmatmul.mubr.bf16.gmra.mrb[0].mxu0 %v631
      %v1374 = vpop.f32.mrb[0].mxu0
      %v1375 = vadd.f32 0.0, %v1374
      %v1376 = vpop.f32.mrb[0].mxu0
      %v1377 = vadd.f32 0.0, %v1376
      %v1378 = vpop.f32.mrb[0].mxu0
      %v1379 = vpop.f32.mrb[0].mxu0
      %1380 = vdwg.mxu0
      %1381 = vmatprep.subr.bf16.mxu0 %v1028
      %1382 = vmatpush1.bf16.msra.mxu0 %v1027
      %1383 = vmatprep.subr.bf16.mxu0 %v1036
      %1384 = vmatpush1.bf16.msra.mxu0 %v1035
      %1385 = vmatprep.subr.bf16.mxu0 %v1044
      %1386 = vmatpush1.bf16.msra.mxu0 %v1043
      %1387 = vmatprep.subr.bf16.mxu0 %v1052
      %1388 = vmatpush1.bf16.msra.mxu0 %v1051
      %1389 = vmatprep.subr.bf16.mxu0 %v1060
      %1390 = vmatpush1.bf16.msra.mxu0 %v1059
      %1391 = vmatprep.subr.bf16.mxu0 %v1068
      %1392 = vmatpush1.bf16.msra.mxu0 %v1067
      %1393 = vmatprep.subr.bf16.mxu0 %v1076
      %1394 = vmatpush1.bf16.msra.mxu0 %v1075
      %1395 = vmatprep.subr.bf16.mxu0 %v1084
      %1396 = vmatpush1.bf16.msra.mxu0 %v1083
      %1397 = vmatprep.subr.bf16.mxu0 %v1092
      %1398 = vmatpush1.bf16.msra.mxu0 %v1091
      %1399 = vmatprep.subr.bf16.mxu0 %v1100
      %1400 = vmatpush1.bf16.msra.mxu0 %v1099
      %1401 = vmatprep.subr.bf16.mxu0 %v1108
      %1402 = vmatpush1.bf16.msra.mxu0 %v1107
      %1403 = vmatprep.subr.bf16.mxu0 %v1116
      %1404 = vmatpush1.bf16.msra.mxu0 %v1115
      %1405 = vmatprep.subr.bf16.mxu0 %v1124
      %1406 = vmatpush1.bf16.msra.mxu0 %v1123
      %1407 = vmatprep.subr.bf16.mxu0 %v1132
      %1408 = vmatpush1.bf16.msra.mxu0 %v1131
      %1409 = vmatprep.subr.bf16.mxu0 %v1140
      %1410 = vmatpush1.bf16.msra.mxu0 %v1139
      %1411 = vmatprep.subr.bf16.mxu0 %v1148
      %1412 = vmatpush1.bf16.msra.mxu0 %v1147
      %1413 = vmatprep.mubr.bf16.mxu0 %v628
      %1414 = vmatmul.mubr.bf16.gmra.mrb[0].mxu0 %v616
      %v1415 = vpop.f32.mrb[0].mxu0
      %v1416 = vadd.f32 0.0, %v1415
      %v1417 = vpop.f32.mrb[0].mxu0
      %v1418 = vadd.f32 0.0, %v1417
      %v1419 = vpop.f32.mrb[0].mxu0
      %v1420 = vadd.f32 0.0, %v1419
      %v1421 = vpop.f32.mrb[0].mxu0
      %v1422 = vadd.f32 0.0, %v1421
      %1423 = vmatprep.mubr.bf16.mxu0 %v634
      %1424 = vmatmul.mubr.bf16.gmra.mrb[0].mxu0 %v631
      %v1425 = vpop.f32.mrb[0].mxu0
      %v1426 = vadd.f32 0.0, %v1425
      %v1427 = vpop.f32.mrb[0].mxu0
      %v1428 = vadd.f32 0.0, %v1427
      %v1429 = vpop.f32.mrb[0].mxu0
      %v1430 = vpop.f32.mrb[0].mxu0
      %1431 = vdwg.mxu0
      %1432 = vmatprep.subr.bf16.mxu0 %v1030
      %1433 = vmatpush1.bf16.msra.mxu0 %v1029
      %1434 = vmatprep.subr.bf16.mxu0 %v1038
      %1435 = vmatpush1.bf16.msra.mxu0 %v1037
      %1436 = vmatprep.subr.bf16.mxu0 %v1046
      %1437 = vmatpush1.bf16.msra.mxu0 %v1045
      %1438 = vmatprep.subr.bf16.mxu0 %v1054
      %1439 = vmatpush1.bf16.msra.mxu0 %v1053
      %1440 = vmatprep.subr.bf16.mxu0 %v1062
      %1441 = vmatpush1.bf16.msra.mxu0 %v1061
      %1442 = vmatprep.subr.bf16.mxu0 %v1070
      %1443 = vmatpush1.bf16.msra.mxu0 %v1069
      %1444 = vmatprep.subr.bf16.mxu0 %v1078
      %1445 = vmatpush1.bf16.msra.mxu0 %v1077
      %1446 = vmatprep.subr.bf16.mxu0 %v1086
      %1447 = vmatpush1.bf16.msra.mxu0 %v1085
      %1448 = vmatprep.subr.bf16.mxu0 %v1094
      %1449 = vmatpush1.bf16.msra.mxu0 %v1093
      %1450 = vmatprep.subr.bf16.mxu0 %v1102
      %1451 = vmatpush1.bf16.msra.mxu0 %v1101
      %1452 = vmatprep.subr.bf16.mxu0 %v1110
      %1453 = vmatpush1.bf16.msra.mxu0 %v1109
      %1454 = vmatprep.subr.bf16.mxu0 %v1118
      %1455 = vmatpush1.bf16.msra.mxu0 %v1117
      %1456 = vmatprep.subr.bf16.mxu0 %v1126
      %1457 = vmatpush1.bf16.msra.mxu0 %v1125
      %1458 = vmatprep.subr.bf16.mxu0 %v1134
      %1459 = vmatpush1.bf16.msra.mxu0 %v1133
      %1460 = vmatprep.subr.bf16.mxu0 %v1142
      %1461 = vmatpush1.bf16.msra.mxu0 %v1141
      %1462 = vmatprep.subr.bf16.mxu0 %v1150
      %1463 = vmatpush1.bf16.msra.mxu0 %v1149
      %1464 = vmatprep.mubr.bf16.mxu0 %v628
      %1465 = vmatmul.mubr.bf16.gmra.mrb[0].mxu0 %v616
      %v1466 = vpop.f32.mrb[0].mxu0
      %v1467 = vadd.f32 0.0, %v1466
      %v1468 = vpop.f32.mrb[0].mxu0
      %v1469 = vadd.f32 0.0, %v1468
      %v1470 = vpop.f32.mrb[0].mxu0
      %v1471 = vadd.f32 0.0, %v1470
      %v1472 = vpop.f32.mrb[0].mxu0
      %v1473 = vadd.f32 0.0, %v1472
      %1474 = vmatprep.mubr.bf16.mxu0 %v634
      %1475 = vmatmul.mubr.bf16.gmra.mrb[0].mxu0 %v631
      %v1476 = vpop.f32.mrb[0].mxu0
      %v1477 = vadd.f32 0.0, %v1476
      %v1478 = vpop.f32.mrb[0].mxu0
      %v1479 = vadd.f32 0.0, %v1478
      %v1480 = vpop.f32.mrb[0].mxu0
      %v1481 = vpop.f32.mrb[0].mxu0
      %1482 = vdwg.mxu0
      %v1611 = vunpack.c.l.b16 %v346
      %v1612 = vunpack.c.h.b16 %v346
      %v1613 = vunpack.c.l.b16 %v347
      %v1614 = vunpack.c.h.b16 %v347
      %v1615 = vunpack.c.l.b16 %v348
      %v1616 = vunpack.c.h.b16 %v348
      %v1617 = vunpack.c.l.b16 %v349
      %v1618 = vunpack.c.h.b16 %v349
      %v1619 = vunpack.c.l.b16 %v350
      %v1620 = vunpack.c.h.b16 %v350
      %v1621 = vunpack.c.l.b16 %v351
      %v1622 = vunpack.c.h.b16 %v351
      %v1623 = vunpack.c.l.b16 %v352
      %v1624 = vunpack.c.h.b16 %v352
      %v1625 = vunpack.c.l.b16 %v353
      %v1626 = vunpack.c.h.b16 %v353
      %v1627 = vunpack.c.l.b16 %v354
      %v1628 = vunpack.c.h.b16 %v354
      %v1629 = vunpack.c.l.b16 %v355
      %v1630 = vunpack.c.h.b16 %v355
      %v1631 = vunpack.c.l.b16 %v356
      %v1632 = vunpack.c.h.b16 %v356
      %v1633 = vunpack.c.l.b16 %v357
      %v1634 = vunpack.c.h.b16 %v357
      %v1635 = vunpack.c.l.b16 %v358
      %v1636 = vunpack.c.h.b16 %v358
      %v1637 = vunpack.c.l.b16 %v359
      %v1638 = vunpack.c.h.b16 %v359
      %v1639 = vunpack.c.l.b16 %v360
      %v1640 = vunpack.c.h.b16 %v360
      %v1641 = vunpack.c.l.b16 %v361
      %v1642 = vunpack.c.h.b16 %v361
      %v1643 = vunpack.c.l.b16 %v362
      %v1644 = vunpack.c.h.b16 %v362
      %v1645 = vunpack.c.l.b16 %v363
      %v1646 = vunpack.c.h.b16 %v363
      %v1647 = vunpack.c.l.b16 %v364
      %v1648 = vunpack.c.h.b16 %v364
      %v1649 = vunpack.c.l.b16 %v365
      %v1650 = vunpack.c.h.b16 %v365
      %v1651 = vunpack.c.l.b16 %v366
      %v1652 = vunpack.c.h.b16 %v366
      %v1653 = vunpack.c.l.b16 %v367
      %v1654 = vunpack.c.h.b16 %v367
      %v1655 = vunpack.c.l.b16 %v368
      %v1656 = vunpack.c.h.b16 %v368
      %v1657 = vunpack.c.l.b16 %v369
      %v1658 = vunpack.c.h.b16 %v369
      %v1659 = vunpack.c.l.b16 %v370
      %v1660 = vunpack.c.h.b16 %v370
      %v1661 = vunpack.c.l.b16 %v371
      %v1662 = vunpack.c.h.b16 %v371
      %v1663 = vunpack.c.l.b16 %v372
      %v1664 = vunpack.c.h.b16 %v372
      %v1665 = vunpack.c.l.b16 %v373
      %v1666 = vunpack.c.h.b16 %v373
      %v1667 = vunpack.c.l.b16 %v374
      %v1668 = vunpack.c.h.b16 %v374
      %v1669 = vunpack.c.l.b16 %v375
      %v1670 = vunpack.c.h.b16 %v375
      %v1671 = vunpack.c.l.b16 %v376
      %v1672 = vunpack.c.h.b16 %v376
      %v1673 = vunpack.c.l.b16 %v377
      %v1674 = vunpack.c.h.b16 %v377
      %v1675 = vunpack.c.l.b16 %v378
      %v1676 = vunpack.c.h.b16 %v378
      %v1677 = vunpack.c.l.b16 %v379
      %v1678 = vunpack.c.h.b16 %v379
      %v1679 = vunpack.c.l.b16 %v380
      %v1680 = vunpack.c.h.b16 %v380
      %v1681 = vunpack.c.l.b16 %v381
      %v1682 = vunpack.c.h.b16 %v381
      %v1683 = vunpack.c.l.b16 %v382
      %v1684 = vunpack.c.h.b16 %v382
      %v1685 = vunpack.c.l.b16 %v383
      %v1686 = vunpack.c.h.b16 %v383
      %v1687 = vunpack.c.l.b16 %v384
      %v1688 = vunpack.c.h.b16 %v384
      %v1689 = vunpack.c.l.b16 %v385
      %v1690 = vunpack.c.h.b16 %v385
      %v1691 = vunpack.c.l.b16 %v386
      %v1692 = vunpack.c.h.b16 %v386
      %v1693 = vunpack.c.l.b16 %v387
      %v1694 = vunpack.c.h.b16 %v387
      %v1695 = vunpack.c.l.b16 %v388
      %v1696 = vunpack.c.h.b16 %v388
      %v1697 = vunpack.c.l.b16 %v389
      %v1698 = vunpack.c.h.b16 %v389
      %v1699 = vunpack.c.l.b16 %v390
      %v1700 = vunpack.c.h.b16 %v390
      %v1701 = vunpack.c.l.b16 %v391
      %v1702 = vunpack.c.h.b16 %v391
      %v1703 = vunpack.c.l.b16 %v392
      %v1704 = vunpack.c.h.b16 %v392
      %v1705 = vunpack.c.l.b16 %v393
      %v1706 = vunpack.c.h.b16 %v393
      %v1707 = vunpack.c.l.b16 %v394
      %v1708 = vunpack.c.h.b16 %v394
      %v1709 = vunpack.c.l.b16 %v395
      %v1710 = vunpack.c.h.b16 %v395
      %v1711 = vunpack.c.l.b16 %v396
      %v1712 = vunpack.c.h.b16 %v396
      %v1713 = vunpack.c.l.b16 %v397
      %v1714 = vunpack.c.h.b16 %v397
      %v1715 = vunpack.c.l.b16 %v398
      %v1716 = vunpack.c.h.b16 %v398
      %v1717 = vunpack.c.l.b16 %v399
      %v1718 = vunpack.c.h.b16 %v399
      %v1719 = vunpack.c.l.b16 %v400
      %v1720 = vunpack.c.h.b16 %v400
      %v1721 = vunpack.c.l.b16 %v401
      %v1722 = vunpack.c.h.b16 %v401
      %v1723 = vunpack.c.l.b16 %v402
      %v1724 = vunpack.c.h.b16 %v402
      %v1725 = vunpack.c.l.b16 %v403
      %v1726 = vunpack.c.h.b16 %v403
      %v1727 = vunpack.c.l.b16 %v404
      %v1728 = vunpack.c.h.b16 %v404
      %v1729 = vunpack.c.l.b16 %v405
      %v1730 = vunpack.c.h.b16 %v405
      %v1731 = vunpack.c.l.b16 %v406
      %v1732 = vunpack.c.h.b16 %v406
      %v1733 = vunpack.c.l.b16 %v407
      %v1734 = vunpack.c.h.b16 %v407
      %v1735 = vunpack.c.l.b16 %v408
      %v1736 = vunpack.c.h.b16 %v408
      %v1737 = vunpack.c.l.b16 %v409
      %v1738 = vunpack.c.h.b16 %v409
      %v1739 = vunpack.c.l.b16 %v410
      %v1740 = vunpack.c.h.b16 %v410
      %v1741 = vunpack.c.l.b16 %v411
      %v1742 = vunpack.c.h.b16 %v411
      %v1743 = vunpack.c.l.b16 %v412
      %v1744 = vunpack.c.h.b16 %v412
      %v1745 = vunpack.c.l.b16 %v413
      %v1746 = vunpack.c.h.b16 %v413
      %v1747 = vunpack.c.l.b16 %v414
      %v1748 = vunpack.c.h.b16 %v414
      %v1749 = vunpack.c.l.b16 %v415
      %v1750 = vunpack.c.h.b16 %v415
      %v1751 = vunpack.c.l.b16 %v416
      %v1752 = vunpack.c.h.b16 %v416
      %v1753 = vunpack.c.l.b16 %v417
      %v1754 = vunpack.c.h.b16 %v417
      %v1755 = vunpack.c.l.b16 %v418
      %v1756 = vunpack.c.h.b16 %v418
      %v1757 = vunpack.c.l.b16 %v419
      %v1758 = vunpack.c.h.b16 %v419
      %v1759 = vunpack.c.l.b16 %v420
      %v1760 = vunpack.c.h.b16 %v420
      %v1761 = vunpack.c.l.b16 %v421
      %v1762 = vunpack.c.h.b16 %v421
      %v1763 = vunpack.c.l.b16 %v422
      %v1764 = vunpack.c.h.b16 %v422
      %v1765 = vunpack.c.l.b16 %v423
      %v1766 = vunpack.c.h.b16 %v423
      %v1767 = vunpack.c.l.b16 %v424
      %v1768 = vunpack.c.h.b16 %v424
      %v1769 = vunpack.c.l.b16 %v425
      %v1770 = vunpack.c.h.b16 %v425
      %v1771 = vunpack.c.l.b16 %v426
      %v1772 = vunpack.c.h.b16 %v426
      %v1773 = vunpack.c.l.b16 %v427
      %v1774 = vunpack.c.h.b16 %v427
      %v1775 = vunpack.c.l.b16 %v428
      %v1776 = vunpack.c.h.b16 %v428
      %v1777 = vunpack.c.l.b16 %v429
      %v1778 = vunpack.c.h.b16 %v429
      %v1779 = vunpack.c.l.b16 %v430
      %v1780 = vunpack.c.h.b16 %v430
      %v1781 = vunpack.c.l.b16 %v431
      %v1782 = vunpack.c.h.b16 %v431
      %v1783 = vunpack.c.l.b16 %v432
      %v1784 = vunpack.c.h.b16 %v432
      %v1785 = vunpack.c.l.b16 %v433
      %v1786 = vunpack.c.h.b16 %v433
      %v1787 = vunpack.c.l.b16 %v434
      %v1788 = vunpack.c.h.b16 %v434
      %v1789 = vunpack.c.l.b16 %v435
      %v1790 = vunpack.c.h.b16 %v435
      %v1791 = vunpack.c.l.b16 %v436
      %v1792 = vunpack.c.h.b16 %v436
      %v1793 = vunpack.c.l.b16 %v437
      %v1794 = vunpack.c.h.b16 %v437
      %v1795 = vunpack.c.l.b16 %v438
      %v1796 = vunpack.c.h.b16 %v438
      %v1797 = vunpack.c.l.b16 %v439
      %v1798 = vunpack.c.h.b16 %v439
      %v1799 = vunpack.c.l.b16 %v440
      %v1800 = vunpack.c.h.b16 %v440
      %v1801 = vunpack.c.l.b16 %v441
      %v1802 = vunpack.c.h.b16 %v441
      %v1803 = vunpack.c.l.b16 %v442
      %v1804 = vunpack.c.h.b16 %v442
      %v1805 = vunpack.c.l.b16 %v443
      %v1806 = vunpack.c.h.b16 %v443
      %v1807 = vunpack.c.l.b16 %v444
      %v1808 = vunpack.c.h.b16 %v444
      %v1809 = vunpack.c.l.b16 %v445
      %v1810 = vunpack.c.h.b16 %v445
      %v1811 = vunpack.c.l.b16 %v446
      %v1812 = vunpack.c.h.b16 %v446
      %v1813 = vunpack.c.l.b16 %v447
      %v1814 = vunpack.c.h.b16 %v447
      %v1815 = vunpack.c.l.b16 %v448
      %v1816 = vunpack.c.h.b16 %v448
      %v1817 = vunpack.c.l.b16 %v449
      %v1818 = vunpack.c.h.b16 %v449
      %v1819 = vunpack.c.l.b16 %v450
      %v1820 = vunpack.c.h.b16 %v450
      %v1821 = vunpack.c.l.b16 %v451
      %v1822 = vunpack.c.h.b16 %v451
      %v1823 = vunpack.c.l.b16 %v452
      %v1824 = vunpack.c.h.b16 %v452
      %v1825 = vunpack.c.l.b16 %v453
      %v1826 = vunpack.c.h.b16 %v453
      %v1827 = vunpack.c.l.b16 %v454
      %v1828 = vunpack.c.h.b16 %v454
      %v1829 = vunpack.c.l.b16 %v455
      %v1830 = vunpack.c.h.b16 %v455
      %v1831 = vunpack.c.l.b16 %v456
      %v1832 = vunpack.c.h.b16 %v456
      %v1833 = vunpack.c.l.b16 %v457
      %v1834 = vunpack.c.h.b16 %v457
      %v1835 = vunpack.c.l.b16 %v458
      %v1836 = vunpack.c.h.b16 %v458
      %v1837 = vunpack.c.l.b16 %v459
      %v1838 = vunpack.c.h.b16 %v459
      %v1839 = vunpack.c.l.b16 %v460
      %v1840 = vunpack.c.h.b16 %v460
      %v1841 = vunpack.c.l.b16 %v461
      %v1842 = vunpack.c.h.b16 %v461
      %v1843 = vunpack.c.l.b16 %v462
      %v1844 = vunpack.c.h.b16 %v462
      %v1845 = vunpack.c.l.b16 %v463
      %v1846 = vunpack.c.h.b16 %v463
      %v1847 = vunpack.c.l.b16 %v464
      %v1848 = vunpack.c.h.b16 %v464
      %v1849 = vunpack.c.l.b16 %v465
      %v1850 = vunpack.c.h.b16 %v465
      %v1851 = vunpack.c.l.b16 %v466
      %v1852 = vunpack.c.h.b16 %v466
      %v1853 = vunpack.c.l.b16 %v467
      %v1854 = vunpack.c.h.b16 %v467
      %v1855 = vunpack.c.l.b16 %v468
      %v1856 = vunpack.c.h.b16 %v468
      %v1857 = vunpack.c.l.b16 %v469
      %v1858 = vunpack.c.h.b16 %v469
      %v1859 = vunpack.c.l.b16 %v470
      %v1860 = vunpack.c.h.b16 %v470
      %v1861 = vunpack.c.l.b16 %v471
      %v1862 = vunpack.c.h.b16 %v471
      %v1863 = vunpack.c.l.b16 %v472
      %v1864 = vunpack.c.h.b16 %v472
      %v1865 = vunpack.c.l.b16 %v473
      %v1866 = vunpack.c.h.b16 %v473
      %v1867 = vpack.c.b16 %v1619, %v1611
      %v1868 = vpack.c.b16 %v1620, %v1612
      %v1869 = vpack.c.b16 %v1621, %v1613
      %v1870 = vpack.c.b16 %v1622, %v1614
      %v1871 = vpack.c.b16 %v1623, %v1615
      %v1872 = vpack.c.b16 %v1624, %v1616
      %v1873 = vpack.c.b16 %v1625, %v1617
      %v1874 = vpack.c.b16 %v1626, %v1618
      %v1875 = vpack.c.b16 %v1635, %v1627
      %v1876 = vpack.c.b16 %v1636, %v1628
      %v1877 = vpack.c.b16 %v1637, %v1629
      %v1878 = vpack.c.b16 %v1638, %v1630
      %v1879 = vpack.c.b16 %v1639, %v1631
      %v1880 = vpack.c.b16 %v1640, %v1632
      %v1881 = vpack.c.b16 %v1641, %v1633
      %v1882 = vpack.c.b16 %v1642, %v1634
      %v1883 = vpack.c.b16 %v1651, %v1643
      %v1884 = vpack.c.b16 %v1652, %v1644
      %v1885 = vpack.c.b16 %v1653, %v1645
      %v1886 = vpack.c.b16 %v1654, %v1646
      %v1887 = vpack.c.b16 %v1655, %v1647
      %v1888 = vpack.c.b16 %v1656, %v1648
      %v1889 = vpack.c.b16 %v1657, %v1649
      %v1890 = vpack.c.b16 %v1658, %v1650
      %v1891 = vpack.c.b16 %v1667, %v1659
      %v1892 = vpack.c.b16 %v1668, %v1660
      %v1893 = vpack.c.b16 %v1669, %v1661
      %v1894 = vpack.c.b16 %v1670, %v1662
      %v1895 = vpack.c.b16 %v1671, %v1663
      %v1896 = vpack.c.b16 %v1672, %v1664
      %v1897 = vpack.c.b16 %v1673, %v1665
      %v1898 = vpack.c.b16 %v1674, %v1666
      %v1899 = vpack.c.b16 %v1683, %v1675
      %v1900 = vpack.c.b16 %v1684, %v1676
      %v1901 = vpack.c.b16 %v1685, %v1677
      %v1902 = vpack.c.b16 %v1686, %v1678
      %v1903 = vpack.c.b16 %v1687, %v1679
      %v1904 = vpack.c.b16 %v1688, %v1680
      %v1905 = vpack.c.b16 %v1689, %v1681
      %v1906 = vpack.c.b16 %v1690, %v1682
      %v1907 = vpack.c.b16 %v1699, %v1691
      %v1908 = vpack.c.b16 %v1700, %v1692
      %v1909 = vpack.c.b16 %v1701, %v1693
      %v1910 = vpack.c.b16 %v1702, %v1694
      %v1911 = vpack.c.b16 %v1703, %v1695
      %v1912 = vpack.c.b16 %v1704, %v1696
      %v1913 = vpack.c.b16 %v1705, %v1697
      %v1914 = vpack.c.b16 %v1706, %v1698
      %v1915 = vpack.c.b16 %v1715, %v1707
      %v1916 = vpack.c.b16 %v1716, %v1708
      %v1917 = vpack.c.b16 %v1717, %v1709
      %v1918 = vpack.c.b16 %v1718, %v1710
      %v1919 = vpack.c.b16 %v1719, %v1711
      %v1920 = vpack.c.b16 %v1720, %v1712
      %v1921 = vpack.c.b16 %v1721, %v1713
      %v1922 = vpack.c.b16 %v1722, %v1714
      %v1923 = vpack.c.b16 %v1731, %v1723
      %v1924 = vpack.c.b16 %v1732, %v1724
      %v1925 = vpack.c.b16 %v1733, %v1725
      %v1926 = vpack.c.b16 %v1734, %v1726
      %v1927 = vpack.c.b16 %v1735, %v1727
      %v1928 = vpack.c.b16 %v1736, %v1728
      %v1929 = vpack.c.b16 %v1737, %v1729
      %v1930 = vpack.c.b16 %v1738, %v1730
      %v1931 = vpack.c.b16 %v1747, %v1739
      %v1932 = vpack.c.b16 %v1748, %v1740
      %v1933 = vpack.c.b16 %v1749, %v1741
      %v1934 = vpack.c.b16 %v1750, %v1742
      %v1935 = vpack.c.b16 %v1751, %v1743
      %v1936 = vpack.c.b16 %v1752, %v1744
      %v1937 = vpack.c.b16 %v1753, %v1745
      %v1938 = vpack.c.b16 %v1754, %v1746
      %v1939 = vpack.c.b16 %v1763, %v1755
      %v1940 = vpack.c.b16 %v1764, %v1756
      %v1941 = vpack.c.b16 %v1765, %v1757
      %v1942 = vpack.c.b16 %v1766, %v1758
      %v1943 = vpack.c.b16 %v1767, %v1759
      %v1944 = vpack.c.b16 %v1768, %v1760
      %v1945 = vpack.c.b16 %v1769, %v1761
      %v1946 = vpack.c.b16 %v1770, %v1762
      %v1947 = vpack.c.b16 %v1779, %v1771
      %v1948 = vpack.c.b16 %v1780, %v1772
      %v1949 = vpack.c.b16 %v1781, %v1773
      %v1950 = vpack.c.b16 %v1782, %v1774
      %v1951 = vpack.c.b16 %v1783, %v1775
      %v1952 = vpack.c.b16 %v1784, %v1776
      %v1953 = vpack.c.b16 %v1785, %v1777
      %v1954 = vpack.c.b16 %v1786, %v1778
      %v1955 = vpack.c.b16 %v1795, %v1787
      %v1956 = vpack.c.b16 %v1796, %v1788
      %v1957 = vpack.c.b16 %v1797, %v1789
      %v1958 = vpack.c.b16 %v1798, %v1790
      %v1959 = vpack.c.b16 %v1799, %v1791
      %v1960 = vpack.c.b16 %v1800, %v1792
      %v1961 = vpack.c.b16 %v1801, %v1793
      %v1962 = vpack.c.b16 %v1802, %v1794
      %v1963 = vpack.c.b16 %v1811, %v1803
      %v1964 = vpack.c.b16 %v1812, %v1804
      %v1965 = vpack.c.b16 %v1813, %v1805
      %v1966 = vpack.c.b16 %v1814, %v1806
      %v1967 = vpack.c.b16 %v1815, %v1807
      %v1968 = vpack.c.b16 %v1816, %v1808
      %v1969 = vpack.c.b16 %v1817, %v1809
      %v1970 = vpack.c.b16 %v1818, %v1810
      %v1971 = vpack.c.b16 %v1827, %v1819
      %v1972 = vpack.c.b16 %v1828, %v1820
      %v1973 = vpack.c.b16 %v1829, %v1821
      %v1974 = vpack.c.b16 %v1830, %v1822
      %v1975 = vpack.c.b16 %v1831, %v1823
      %v1976 = vpack.c.b16 %v1832, %v1824
      %v1977 = vpack.c.b16 %v1833, %v1825
      %v1978 = vpack.c.b16 %v1834, %v1826
      %v1979 = vpack.c.b16 %v1843, %v1835
      %v1980 = vpack.c.b16 %v1844, %v1836
      %v1981 = vpack.c.b16 %v1845, %v1837
      %v1982 = vpack.c.b16 %v1846, %v1838
      %v1983 = vpack.c.b16 %v1847, %v1839
      %v1984 = vpack.c.b16 %v1848, %v1840
      %v1985 = vpack.c.b16 %v1849, %v1841
      %v1986 = vpack.c.b16 %v1850, %v1842
      %v1987 = vpack.c.b16 %v1859, %v1851
      %v1988 = vpack.c.b16 %v1860, %v1852
      %v1989 = vpack.c.b16 %v1861, %v1853
      %v1990 = vpack.c.b16 %v1862, %v1854
      %v1991 = vpack.c.b16 %v1863, %v1855
      %v1992 = vpack.c.b16 %v1864, %v1856
      %v1993 = vpack.c.b16 %v1865, %v1857
      %v1994 = vpack.c.b16 %v1866, %v1858
      %2123 = vmatprep.subr.bf16.mxu0 %v1868
      %2124 = vmatpush1.bf16.msra.mxu0 %v1867
      %2125 = vmatprep.subr.bf16.mxu0 %v1876
      %2126 = vmatpush1.bf16.msra.mxu0 %v1875
      %2127 = vmatprep.subr.bf16.mxu0 %v1884
      %2128 = vmatpush1.bf16.msra.mxu0 %v1883
      %2129 = vmatprep.subr.bf16.mxu0 %v1892
      %2130 = vmatpush1.bf16.msra.mxu0 %v1891
      %2131 = vmatprep.subr.bf16.mxu0 %v1900
      %2132 = vmatpush1.bf16.msra.mxu0 %v1899
      %2133 = vmatprep.subr.bf16.mxu0 %v1908
      %2134 = vmatpush1.bf16.msra.mxu0 %v1907
      %2135 = vmatprep.subr.bf16.mxu0 %v1916
      %2136 = vmatpush1.bf16.msra.mxu0 %v1915
      %2137 = vmatprep.subr.bf16.mxu0 %v1924
      %2138 = vmatpush1.bf16.msra.mxu0 %v1923
      %2139 = vmatprep.subr.bf16.mxu0 %v1932
      %2140 = vmatpush1.bf16.msra.mxu0 %v1931
      %2141 = vmatprep.subr.bf16.mxu0 %v1940
      %2142 = vmatpush1.bf16.msra.mxu0 %v1939
      %2143 = vmatprep.subr.bf16.mxu0 %v1948
      %2144 = vmatpush1.bf16.msra.mxu0 %v1947
      %2145 = vmatprep.subr.bf16.mxu0 %v1956
      %2146 = vmatpush1.bf16.msra.mxu0 %v1955
      %2147 = vmatprep.subr.bf16.mxu0 %v1964
      %2148 = vmatpush1.bf16.msra.mxu0 %v1963
      %2149 = vmatprep.subr.bf16.mxu0 %v1972
      %2150 = vmatpush1.bf16.msra.mxu0 %v1971
      %2151 = vmatprep.subr.bf16.mxu0 %v1980
      %2152 = vmatpush1.bf16.msra.mxu0 %v1979
      %2153 = vmatprep.subr.bf16.mxu0 %v1988
      %2154 = vmatpush1.bf16.msra.mxu0 %v1987
      %2155 = vmatprep.mubr.bf16.mxu0 %v343
      %2156 = vmatmul.mubr.bf16.gmra.mrb[0].mxu0 %v342
      %v2157 = vpop.f32.mrb[0].mxu0
      %v2158 = vadd.f32 %v1314, %v2157
      %v2159 = vpop.f32.mrb[0].mxu0
      %v2160 = vadd.f32 %v1316, %v2159
      %v2161 = vpop.f32.mrb[0].mxu0
      %v2162 = vadd.f32 %v1318, %v2161
      %v2163 = vpop.f32.mrb[0].mxu0
      %v2164 = vadd.f32 %v1320, %v2163
      %2165 = vmatprep.mubr.bf16.mxu0 %v345
      %2166 = vmatmul.mubr.bf16.gmra.mrb[0].mxu0 %v344
      %v2167 = vpop.f32.mrb[0].mxu0
      %v2168 = vadd.f32 %v1324, %v2167
      %v2169 = vpop.f32.mrb[0].mxu0
      %v2170 = vadd.f32 %v1326, %v2169
      %v2171 = vpop.f32.mrb[0].mxu0
      %v2172 = vpop.f32.mrb[0].mxu0
      %2173 = vdwg.mxu0
      %2174 = vmatprep.subr.bf16.mxu0 %v1870
      %2175 = vmatpush1.bf16.msra.mxu0 %v1869
      %2176 = vmatprep.subr.bf16.mxu0 %v1878
      %2177 = vmatpush1.bf16.msra.mxu0 %v1877
      %2178 = vmatprep.subr.bf16.mxu0 %v1886
      %2179 = vmatpush1.bf16.msra.mxu0 %v1885
      %2180 = vmatprep.subr.bf16.mxu0 %v1894
      %2181 = vmatpush1.bf16.msra.mxu0 %v1893
      %2182 = vmatprep.subr.bf16.mxu0 %v1902
      %2183 = vmatpush1.bf16.msra.mxu0 %v1901
      %2184 = vmatprep.subr.bf16.mxu0 %v1910
      %2185 = vmatpush1.bf16.msra.mxu0 %v1909
      %2186 = vmatprep.subr.bf16.mxu0 %v1918
      %2187 = vmatpush1.bf16.msra.mxu0 %v1917
      %2188 = vmatprep.subr.bf16.mxu0 %v1926
      %2189 = vmatpush1.bf16.msra.mxu0 %v1925
      %2190 = vmatprep.subr.bf16.mxu0 %v1934
      %2191 = vmatpush1.bf16.msra.mxu0 %v1933
      %2192 = vmatprep.subr.bf16.mxu0 %v1942
      %2193 = vmatpush1.bf16.msra.mxu0 %v1941
      %2194 = vmatprep.subr.bf16.mxu0 %v1950
      %2195 = vmatpush1.bf16.msra.mxu0 %v1949
      %2196 = vmatprep.subr.bf16.mxu0 %v1958
      %2197 = vmatpush1.bf16.msra.mxu0 %v1957
      %2198 = vmatprep.subr.bf16.mxu0 %v1966
      %2199 = vmatpush1.bf16.msra.mxu0 %v1965
      %2200 = vmatprep.subr.bf16.mxu0 %v1974
      %2201 = vmatpush1.bf16.msra.mxu0 %v1973
      %2202 = vmatprep.subr.bf16.mxu0 %v1982
      %2203 = vmatpush1.bf16.msra.mxu0 %v1981
      %2204 = vmatprep.subr.bf16.mxu0 %v1990
      %2205 = vmatpush1.bf16.msra.mxu0 %v1989
      %2206 = vmatprep.mubr.bf16.mxu0 %v343
      %2207 = vmatmul.mubr.bf16.gmra.mrb[0].mxu0 %v342
      %v2208 = vpop.f32.mrb[0].mxu0
      %v2209 = vadd.f32 %v1365, %v2208
      %v2210 = vpop.f32.mrb[0].mxu0
      %v2211 = vadd.f32 %v1367, %v2210
      %v2212 = vpop.f32.mrb[0].mxu0
      %v2213 = vadd.f32 %v1369, %v2212
      %v2214 = vpop.f32.mrb[0].mxu0
      %v2215 = vadd.f32 %v1371, %v2214
      %2216 = vmatprep.mubr.bf16.mxu0 %v345
      %2217 = vmatmul.mubr.bf16.gmra.mrb[0].mxu0 %v344
      %v2218 = vpop.f32.mrb[0].mxu0
      %v2219 = vadd.f32 %v1375, %v2218
      %v2220 = vpop.f32.mrb[0].mxu0
      %v2221 = vadd.f32 %v1377, %v2220
      %v2222 = vpop.f32.mrb[0].mxu0
      %v2223 = vpop.f32.mrb[0].mxu0
      %2224 = vdwg.mxu0
      %2225 = vmatprep.subr.bf16.mxu0 %v1872
      %2226 = vmatpush1.bf16.msra.mxu0 %v1871
      %2227 = vmatprep.subr.bf16.mxu0 %v1880
      %2228 = vmatpush1.bf16.msra.mxu0 %v1879
      %2229 = vmatprep.subr.bf16.mxu0 %v1888
      %2230 = vmatpush1.bf16.msra.mxu0 %v1887
      %2231 = vmatprep.subr.bf16.mxu0 %v1896
      %2232 = vmatpush1.bf16.msra.mxu0 %v1895
      %2233 = vmatprep.subr.bf16.mxu0 %v1904
      %2234 = vmatpush1.bf16.msra.mxu0 %v1903
      %2235 = vmatprep.subr.bf16.mxu0 %v1912
      %2236 = vmatpush1.bf16.msra.mxu0 %v1911
      %2237 = vmatprep.subr.bf16.mxu0 %v1920
      %2238 = vmatpush1.bf16.msra.mxu0 %v1919
      %2239 = vmatprep.subr.bf16.mxu0 %v1928
      %2240 = vmatpush1.bf16.msra.mxu0 %v1927
      %2241 = vmatprep.subr.bf16.mxu0 %v1936
      %2242 = vmatpush1.bf16.msra.mxu0 %v1935
      %2243 = vmatprep.subr.bf16.mxu0 %v1944
      %2244 = vmatpush1.bf16.msra.mxu0 %v1943
      %2245 = vmatprep.subr.bf16.mxu0 %v1952
      %2246 = vmatpush1.bf16.msra.mxu0 %v1951
      %2247 = vmatprep.subr.bf16.mxu0 %v1960
      %2248 = vmatpush1.bf16.msra.mxu0 %v1959
      %2249 = vmatprep.subr.bf16.mxu0 %v1968
      %2250 = vmatpush1.bf16.msra.mxu0 %v1967
      %2251 = vmatprep.subr.bf16.mxu0 %v1976
      %2252 = vmatpush1.bf16.msra.mxu0 %v1975
      %2253 = vmatprep.subr.bf16.mxu0 %v1984
      %2254 = vmatpush1.bf16.msra.mxu0 %v1983
      %2255 = vmatprep.subr.bf16.mxu0 %v1992
      %2256 = vmatpush1.bf16.msra.mxu0 %v1991
      %2257 = vmatprep.mubr.bf16.mxu0 %v343
      %2258 = vmatmul.mubr.bf16.gmra.mrb[0].mxu0 %v342
      %v2259 = vpop.f32.mrb[0].mxu0
      %v2260 = vadd.f32 %v1416, %v2259
      %v2261 = vpop.f32.mrb[0].mxu0
      %v2262 = vadd.f32 %v1418, %v2261
      %v2263 = vpop.f32.mrb[0].mxu0
      %v2264 = vadd.f32 %v1420, %v2263
      %v2265 = vpop.f32.mrb[0].mxu0
      %v2266 = vadd.f32 %v1422, %v2265
      %2267 = vmatprep.mubr.bf16.mxu0 %v345
      %2268 = vmatmul.mubr.bf16.gmra.mrb[0].mxu0 %v344
      %v2269 = vpop.f32.mrb[0].mxu0
      %v2270 = vadd.f32 %v1426, %v2269
      %v2271 = vpop.f32.mrb[0].mxu0
      %v2272 = vadd.f32 %v1428, %v2271
      %v2273 = vpop.f32.mrb[0].mxu0
      %v2274 = vpop.f32.mrb[0].mxu0
      %2275 = vdwg.mxu0
      %2276 = vmatprep.subr.bf16.mxu0 %v1874
      %2277 = vmatpush1.bf16.msra.mxu0 %v1873
      %2278 = vmatprep.subr.bf16.mxu0 %v1882
      %2279 = vmatpush1.bf16.msra.mxu0 %v1881
      %2280 = vmatprep.subr.bf16.mxu0 %v1890
      %2281 = vmatpush1.bf16.msra.mxu0 %v1889
      %2282 = vmatprep.subr.bf16.mxu0 %v1898
      %2283 = vmatpush1.bf16.msra.mxu0 %v1897
      %2284 = vmatprep.subr.bf16.mxu0 %v1906
      %2285 = vmatpush1.bf16.msra.mxu0 %v1905
      %2286 = vmatprep.subr.bf16.mxu0 %v1914
      %2287 = vmatpush1.bf16.msra.mxu0 %v1913
      %2288 = vmatprep.subr.bf16.mxu0 %v1922
      %2289 = vmatpush1.bf16.msra.mxu0 %v1921
      %2290 = vmatprep.subr.bf16.mxu0 %v1930
      %2291 = vmatpush1.bf16.msra.mxu0 %v1929
      %2292 = vmatprep.subr.bf16.mxu0 %v1938
      %2293 = vmatpush1.bf16.msra.mxu0 %v1937
      %2294 = vmatprep.subr.bf16.mxu0 %v1946
      %2295 = vmatpush1.bf16.msra.mxu0 %v1945
      %2296 = vmatprep.subr.bf16.mxu0 %v1954
      %2297 = vmatpush1.bf16.msra.mxu0 %v1953
      %2298 = vmatprep.subr.bf16.mxu0 %v1962
      %2299 = vmatpush1.bf16.msra.mxu0 %v1961
      %2300 = vmatprep.subr.bf16.mxu0 %v1970
      %2301 = vmatpush1.bf16.msra.mxu0 %v1969
      %2302 = vmatprep.subr.bf16.mxu0 %v1978
      %2303 = vmatpush1.bf16.msra.mxu0 %v1977
      %2304 = vmatprep.subr.bf16.mxu0 %v1986
      %2305 = vmatpush1.bf16.msra.mxu0 %v1985
      %2306 = vmatprep.subr.bf16.mxu0 %v1994
      %2307 = vmatpush1.bf16.msra.mxu0 %v1993
      %2308 = vmatprep.mubr.bf16.mxu0 %v343
      %2309 = vmatmul.mubr.bf16.gmra.mrb[0].mxu0 %v342
      %v2310 = vpop.f32.mrb[0].mxu0
      %v2311 = vadd.f32 %v1467, %v2310
      %v2312 = vpop.f32.mrb[0].mxu0
      %v2313 = vadd.f32 %v1469, %v2312
      %v2314 = vpop.f32.mrb[0].mxu0
      %v2315 = vadd.f32 %v1471, %v2314
      %v2316 = vpop.f32.mrb[0].mxu0
      %v2317 = vadd.f32 %v1473, %v2316
      %2318 = vmatprep.mubr.bf16.mxu0 %v345
      %2319 = vmatmul.mubr.bf16.gmra.mrb[0].mxu0 %v344
      %v2320 = vpop.f32.mrb[0].mxu0
      %v2321 = vadd.f32 %v1477, %v2320
      %v2322 = vpop.f32.mrb[0].mxu0
      %v2323 = vadd.f32 %v1479, %v2322
      %v2324 = vpop.f32.mrb[0].mxu0
      %v2325 = vpop.f32.mrb[0].mxu0
      %2326 = vdwg.mxu0
      %v2327 = vld [vmem:[%s296 + $0x800] sm:$0xff]
      %v2328 = vld [vmem:[%s296 + $0x808] sm:$0xff]
      %v2329 = vld [vmem:[%s296 + $0x810] sm:$0xff]
      %v2330 = vld [vmem:[%s296 + $0x818] sm:$0xff]
      %v2331 = vld [vmem:[%s296 + $0x820] sm:$0xff]
      %v2332 = vld [vmem:[%s296 + $0x828] sm:$0xff]
      %v2333 = vld [vmem:[%s296 + $0x830] sm:$0xff]
      %v2334 = vld [vmem:[%s296 + $0x838] sm:$0xff]
      %v2335 = vld [vmem:[%s296 + $0x840] sm:$0xff]
      %v2336 = vld [vmem:[%s296 + $0x848] sm:$0xff]
      %v2337 = vld [vmem:[%s296 + $0x850] sm:$0xff]
      %v2338 = vld [vmem:[%s296 + $0x858] sm:$0xff]
      %v2339 = vld [vmem:[%s296 + $0x860] sm:$0xff]
      %v2340 = vld [vmem:[%s296 + $0x868] sm:$0xff]
      %v2341 = vld [vmem:[%s296 + $0x870] sm:$0xff]
      %v2342 = vld [vmem:[%s296 + $0x878] sm:$0xff]
      %v2343 = vld [vmem:[%s296 + $0x880] sm:$0xff]
      %v2344 = vld [vmem:[%s296 + $0x888] sm:$0xff]
      %v2345 = vld [vmem:[%s296 + $0x890] sm:$0xff]
      %v2346 = vld [vmem:[%s296 + $0x898] sm:$0xff]
      %v2347 = vld [vmem:[%s296 + $0x8a0] sm:$0xff]
      %v2348 = vld [vmem:[%s296 + $0x8a8] sm:$0xff]
      %v2349 = vld [vmem:[%s296 + $0x8b0] sm:$0xff]
      %v2350 = vld [vmem:[%s296 + $0x8b8] sm:$0xff]
      %v2351 = vld [vmem:[%s296 + $0x8c0] sm:$0xff]
      %v2352 = vld [vmem:[%s296 + $0x8c8] sm:$0xff]
      %v2353 = vld [vmem:[%s296 + $0x8d0] sm:$0xff]
      %v2354 = vld [vmem:[%s296 + $0x8d8] sm:$0xff]
      %v2355 = vld [vmem:[%s296 + $0x8e0] sm:$0xff]
      %v2356 = vld [vmem:[%s296 + $0x8e8] sm:$0xff]
      %v2357 = vld [vmem:[%s296 + $0x8f0] sm:$0xff]
      %v2358 = vld [vmem:[%s296 + $0x8f8] sm:$0xff]
      %v2359 = vld [vmem:[%s296 + $0x900] sm:$0xff]
      %v2360 = vld [vmem:[%s296 + $0x908] sm:$0xff]
      %v2361 = vld [vmem:[%s296 + $0x910] sm:$0xff]
      %v2362 = vld [vmem:[%s296 + $0x918] sm:$0xff]
      %v2363 = vld [vmem:[%s296 + $0x920] sm:$0xff]
      %v2364 = vld [vmem:[%s296 + $0x928] sm:$0xff]
      %v2365 = vld [vmem:[%s296 + $0x930] sm:$0xff]
      %v2366 = vld [vmem:[%s296 + $0x938] sm:$0xff]
      %v2367 = vld [vmem:[%s296 + $0x940] sm:$0xff]
      %v2368 = vld [vmem:[%s296 + $0x948] sm:$0xff]
      %v2369 = vld [vmem:[%s296 + $0x950] sm:$0xff]
      %v2370 = vld [vmem:[%s296 + $0x958] sm:$0xff]
      %v2371 = vld [vmem:[%s296 + $0x960] sm:$0xff]
      %v2372 = vld [vmem:[%s296 + $0x968] sm:$0xff]
      %v2373 = vld [vmem:[%s296 + $0x970] sm:$0xff]
      %v2374 = vld [vmem:[%s296 + $0x978] sm:$0xff]
      %v2375 = vld [vmem:[%s296 + $0x980] sm:$0xff]
      %v2376 = vld [vmem:[%s296 + $0x988] sm:$0xff]
      %v2377 = vld [vmem:[%s296 + $0x990] sm:$0xff]
      %v2378 = vld [vmem:[%s296 + $0x998] sm:$0xff]
      %v2379 = vld [vmem:[%s296 + $0x9a0] sm:$0xff]
      %v2380 = vld [vmem:[%s296 + $0x9a8] sm:$0xff]
      %v2381 = vld [vmem:[%s296 + $0x9b0] sm:$0xff]
      %v2382 = vld [vmem:[%s296 + $0x9b8] sm:$0xff]
      %v2383 = vld [vmem:[%s296 + $0x9c0] sm:$0xff]
      %v2384 = vld [vmem:[%s296 + $0x9c8] sm:$0xff]
      %v2385 = vld [vmem:[%s296 + $0x9d0] sm:$0xff]
      %v2386 = vld [vmem:[%s296 + $0x9d8] sm:$0xff]
      %v2387 = vld [vmem:[%s296 + $0x9e0] sm:$0xff]
      %v2388 = vld [vmem:[%s296 + $0x9e8] sm:$0xff]
      %v2389 = vld [vmem:[%s296 + $0x9f0] sm:$0xff]
      %v2390 = vld [vmem:[%s296 + $0x9f8] sm:$0xff]
      %v2391 = vld [vmem:[%s296 + $0xa00] sm:$0xff]
      %v2392 = vld [vmem:[%s296 + $0xa08] sm:$0xff]
      %v2393 = vld [vmem:[%s296 + $0xa10] sm:$0xff]
      %v2394 = vld [vmem:[%s296 + $0xa18] sm:$0xff]
      %v2395 = vld [vmem:[%s296 + $0xa20] sm:$0xff]
      %v2396 = vld [vmem:[%s296 + $0xa28] sm:$0xff]
      %v2397 = vld [vmem:[%s296 + $0xa30] sm:$0xff]
      %v2398 = vld [vmem:[%s296 + $0xa38] sm:$0xff]
      %v2399 = vld [vmem:[%s296 + $0xa40] sm:$0xff]
      %v2400 = vld [vmem:[%s296 + $0xa48] sm:$0xff]
      %v2401 = vld [vmem:[%s296 + $0xa50] sm:$0xff]
      %v2402 = vld [vmem:[%s296 + $0xa58] sm:$0xff]
      %v2403 = vld [vmem:[%s296 + $0xa60] sm:$0xff]
      %v2404 = vld [vmem:[%s296 + $0xa68] sm:$0xff]
      %v2405 = vld [vmem:[%s296 + $0xa70] sm:$0xff]
      %v2406 = vld [vmem:[%s296 + $0xa78] sm:$0xff]
      %v2407 = vld [vmem:[%s296 + $0xa80] sm:$0xff]
      %v2408 = vld [vmem:[%s296 + $0xa88] sm:$0xff]
      %v2409 = vld [vmem:[%s296 + $0xa90] sm:$0xff]
      %v2410 = vld [vmem:[%s296 + $0xa98] sm:$0xff]
      %v2411 = vld [vmem:[%s296 + $0xaa0] sm:$0xff]
      %v2412 = vld [vmem:[%s296 + $0xaa8] sm:$0xff]
      %v2413 = vld [vmem:[%s296 + $0xab0] sm:$0xff]
      %v2414 = vld [vmem:[%s296 + $0xab8] sm:$0xff]
      %v2415 = vld [vmem:[%s296 + $0xac0] sm:$0xff]
      %v2416 = vld [vmem:[%s296 + $0xac8] sm:$0xff]
      %v2417 = vld [vmem:[%s296 + $0xad0] sm:$0xff]
      %v2418 = vld [vmem:[%s296 + $0xad8] sm:$0xff]
      %v2419 = vld [vmem:[%s296 + $0xae0] sm:$0xff]
      %v2420 = vld [vmem:[%s296 + $0xae8] sm:$0xff]
      %v2421 = vld [vmem:[%s296 + $0xaf0] sm:$0xff]
      %v2422 = vld [vmem:[%s296 + $0xaf8] sm:$0xff]
      %v2423 = vld [vmem:[%s296 + $0xb00] sm:$0xff]
      %v2424 = vld [vmem:[%s296 + $0xb08] sm:$0xff]
      %v2425 = vld [vmem:[%s296 + $0xb10] sm:$0xff]
      %v2426 = vld [vmem:[%s296 + $0xb18] sm:$0xff]
      %v2427 = vld [vmem:[%s296 + $0xb20] sm:$0xff]
      %v2428 = vld [vmem:[%s296 + $0xb28] sm:$0xff]
      %v2429 = vld [vmem:[%s296 + $0xb30] sm:$0xff]
      %v2430 = vld [vmem:[%s296 + $0xb38] sm:$0xff]
      %v2431 = vld [vmem:[%s296 + $0xb40] sm:$0xff]
      %v2432 = vld [vmem:[%s296 + $0xb48] sm:$0xff]
      %v2433 = vld [vmem:[%s296 + $0xb50] sm:$0xff]
      %v2434 = vld [vmem:[%s296 + $0xb58] sm:$0xff]
      %v2435 = vld [vmem:[%s296 + $0xb60] sm:$0xff]
      %v2436 = vld [vmem:[%s296 + $0xb68] sm:$0xff]
      %v2437 = vld [vmem:[%s296 + $0xb70] sm:$0xff]
      %v2438 = vld [vmem:[%s296 + $0xb78] sm:$0xff]
      %v2439 = vld [vmem:[%s296 + $0xb80] sm:$0xff]
      %v2440 = vld [vmem:[%s296 + $0xb88] sm:$0xff]
      %v2441 = vld [vmem:[%s296 + $0xb90] sm:$0xff]
      %v2442 = vld [vmem:[%s296 + $0xb98] sm:$0xff]
      %v2443 = vld [vmem:[%s296 + $0xba0] sm:$0xff]
      %v2444 = vld [vmem:[%s296 + $0xba8] sm:$0xff]
      %v2445 = vld [vmem:[%s296 + $0xbb0] sm:$0xff]
      %v2446 = vld [vmem:[%s296 + $0xbb8] sm:$0xff]
      %v2447 = vld [vmem:[%s296 + $0xbc0] sm:$0xff]
      %v2448 = vld [vmem:[%s296 + $0xbc8] sm:$0xff]
      %v2449 = vld [vmem:[%s296 + $0xbd0] sm:$0xff]
      %v2450 = vld [vmem:[%s296 + $0xbd8] sm:$0xff]
      %v2451 = vld [vmem:[%s296 + $0xbe0] sm:$0xff]
      %v2452 = vld [vmem:[%s296 + $0xbe8] sm:$0xff]
      %v2453 = vld [vmem:[%s296 + $0xbf0] sm:$0xff]
      %v2454 = vld [vmem:[%s296 + $0xbf8] sm:$0xff]
      %vm2459 = vcmask 1046528
      %v2460 = vrot.slane %v342, 1
      %v2461 = vrot.slane %v474, 1
      %v2462 = vsel %vm2459, %v2460, %v2461
      %v2463 = vrot.slane %v343, 1
      %v2464 = vrot.slane %v475, 1
      %v2465 = vsel %vm2459, %v2463, %v2464
      %v2598 = vunpack.c.l.b16 %v2327
      %v2599 = vunpack.c.h.b16 %v2327
      %v2600 = vunpack.c.l.b16 %v2328
      %v2601 = vunpack.c.h.b16 %v2328
      %v2602 = vunpack.c.l.b16 %v2329
      %v2603 = vunpack.c.h.b16 %v2329
      %v2604 = vunpack.c.l.b16 %v2330
      %v2605 = vunpack.c.h.b16 %v2330
      %v2606 = vunpack.c.l.b16 %v2331
      %v2607 = vunpack.c.h.b16 %v2331
      %v2608 = vunpack.c.l.b16 %v2332
      %v2609 = vunpack.c.h.b16 %v2332
      %v2610 = vunpack.c.l.b16 %v2333
      %v2611 = vunpack.c.h.b16 %v2333
      %v2612 = vunpack.c.l.b16 %v2334
      %v2613 = vunpack.c.h.b16 %v2334
      %v2614 = vunpack.c.l.b16 %v2335
      %v2615 = vunpack.c.h.b16 %v2335
      %v2616 = vunpack.c.l.b16 %v2336
      %v2617 = vunpack.c.h.b16 %v2336
      %v2618 = vunpack.c.l.b16 %v2337
      %v2619 = vunpack.c.h.b16 %v2337
      %v2620 = vunpack.c.l.b16 %v2338
      %v2621 = vunpack.c.h.b16 %v2338
      %v2622 = vunpack.c.l.b16 %v2339
      %v2623 = vunpack.c.h.b16 %v2339
      %v2624 = vunpack.c.l.b16 %v2340
      %v2625 = vunpack.c.h.b16 %v2340
      %v2626 = vunpack.c.l.b16 %v2341
      %v2627 = vunpack.c.h.b16 %v2341
      %v2628 = vunpack.c.l.b16 %v2342
      %v2629 = vunpack.c.h.b16 %v2342
      %v2630 = vunpack.c.l.b16 %v2343
      %v2631 = vunpack.c.h.b16 %v2343
      %v2632 = vunpack.c.l.b16 %v2344
      %v2633 = vunpack.c.h.b16 %v2344
      %v2634 = vunpack.c.l.b16 %v2345
      %v2635 = vunpack.c.h.b16 %v2345
      %v2636 = vunpack.c.l.b16 %v2346
      %v2637 = vunpack.c.h.b16 %v2346
      %v2638 = vunpack.c.l.b16 %v2347
      %v2639 = vunpack.c.h.b16 %v2347
      %v2640 = vunpack.c.l.b16 %v2348
      %v2641 = vunpack.c.h.b16 %v2348
      %v2642 = vunpack.c.l.b16 %v2349
      %v2643 = vunpack.c.h.b16 %v2349
      %v2644 = vunpack.c.l.b16 %v2350
      %v2645 = vunpack.c.h.b16 %v2350
      %v2646 = vunpack.c.l.b16 %v2351
      %v2647 = vunpack.c.h.b16 %v2351
      %v2648 = vunpack.c.l.b16 %v2352
      %v2649 = vunpack.c.h.b16 %v2352
      %v2650 = vunpack.c.l.b16 %v2353
      %v2651 = vunpack.c.h.b16 %v2353
      %v2652 = vunpack.c.l.b16 %v2354
      %v2653 = vunpack.c.h.b16 %v2354
      %v2654 = vunpack.c.l.b16 %v2355
      %v2655 = vunpack.c.h.b16 %v2355
      %v2656 = vunpack.c.l.b16 %v2356
      %v2657 = vunpack.c.h.b16 %v2356
      %v2658 = vunpack.c.l.b16 %v2357
      %v2659 = vunpack.c.h.b16 %v2357
      %v2660 = vunpack.c.l.b16 %v2358
      %v2661 = vunpack.c.h.b16 %v2358
      %v2662 = vunpack.c.l.b16 %v2359
      %v2663 = vunpack.c.h.b16 %v2359
      %v2664 = vunpack.c.l.b16 %v2360
      %v2665 = vunpack.c.h.b16 %v2360
      %v2666 = vunpack.c.l.b16 %v2361
      %v2667 = vunpack.c.h.b16 %v2361
      %v2668 = vunpack.c.l.b16 %v2362
      %v2669 = vunpack.c.h.b16 %v2362
      %v2670 = vunpack.c.l.b16 %v2363
      %v2671 = vunpack.c.h.b16 %v2363
      %v2672 = vunpack.c.l.b16 %v2364
      %v2673 = vunpack.c.h.b16 %v2364
      %v2674 = vunpack.c.l.b16 %v2365
      %v2675 = vunpack.c.h.b16 %v2365
      %v2676 = vunpack.c.l.b16 %v2366
      %v2677 = vunpack.c.h.b16 %v2366
      %v2678 = vunpack.c.l.b16 %v2367
      %v2679 = vunpack.c.h.b16 %v2367
      %v2680 = vunpack.c.l.b16 %v2368
      %v2681 = vunpack.c.h.b16 %v2368
      %v2682 = vunpack.c.l.b16 %v2369
      %v2683 = vunpack.c.h.b16 %v2369
      %v2684 = vunpack.c.l.b16 %v2370
      %v2685 = vunpack.c.h.b16 %v2370
      %v2686 = vunpack.c.l.b16 %v2371
      %v2687 = vunpack.c.h.b16 %v2371
      %v2688 = vunpack.c.l.b16 %v2372
      %v2689 = vunpack.c.h.b16 %v2372
      %v2690 = vunpack.c.l.b16 %v2373
      %v2691 = vunpack.c.h.b16 %v2373
      %v2692 = vunpack.c.l.b16 %v2374
      %v2693 = vunpack.c.h.b16 %v2374
      %v2694 = vunpack.c.l.b16 %v2375
      %v2695 = vunpack.c.h.b16 %v2375
      %v2696 = vunpack.c.l.b16 %v2376
      %v2697 = vunpack.c.h.b16 %v2376
      %v2698 = vunpack.c.l.b16 %v2377
      %v2699 = vunpack.c.h.b16 %v2377
      %v2700 = vunpack.c.l.b16 %v2378
      %v2701 = vunpack.c.h.b16 %v2378
      %v2702 = vunpack.c.l.b16 %v2379
      %v2703 = vunpack.c.h.b16 %v2379
      %v2704 = vunpack.c.l.b16 %v2380
      %v2705 = vunpack.c.h.b16 %v2380
      %v2706 = vunpack.c.l.b16 %v2381
      %v2707 = vunpack.c.h.b16 %v2381
      %v2708 = vunpack.c.l.b16 %v2382
      %v2709 = vunpack.c.h.b16 %v2382
      %v2710 = vunpack.c.l.b16 %v2383
      %v2711 = vunpack.c.h.b16 %v2383
      %v2712 = vunpack.c.l.b16 %v2384
      %v2713 = vunpack.c.h.b16 %v2384
      %v2714 = vunpack.c.l.b16 %v2385
      %v2715 = vunpack.c.h.b16 %v2385
      %v2716 = vunpack.c.l.b16 %v2386
      %v2717 = vunpack.c.h.b16 %v2386
      %v2718 = vunpack.c.l.b16 %v2387
      %v2719 = vunpack.c.h.b16 %v2387
      %v2720 = vunpack.c.l.b16 %v2388
      %v2721 = vunpack.c.h.b16 %v2388
      %v2722 = vunpack.c.l.b16 %v2389
      %v2723 = vunpack.c.h.b16 %v2389
      %v2724 = vunpack.c.l.b16 %v2390
      %v2725 = vunpack.c.h.b16 %v2390
      %v2726 = vunpack.c.l.b16 %v2391
      %v2727 = vunpack.c.h.b16 %v2391
      %v2728 = vunpack.c.l.b16 %v2392
      %v2729 = vunpack.c.h.b16 %v2392
      %v2730 = vunpack.c.l.b16 %v2393
      %v2731 = vunpack.c.h.b16 %v2393
      %v2732 = vunpack.c.l.b16 %v2394
      %v2733 = vunpack.c.h.b16 %v2394
      %v2734 = vunpack.c.l.b16 %v2395
      %v2735 = vunpack.c.h.b16 %v2395
      %v2736 = vunpack.c.l.b16 %v2396
      %v2737 = vunpack.c.h.b16 %v2396
      %v2738 = vunpack.c.l.b16 %v2397
      %v2739 = vunpack.c.h.b16 %v2397
      %v2740 = vunpack.c.l.b16 %v2398
      %v2741 = vunpack.c.h.b16 %v2398
      %v2742 = vunpack.c.l.b16 %v2399
      %v2743 = vunpack.c.h.b16 %v2399
      %v2744 = vunpack.c.l.b16 %v2400
      %v2745 = vunpack.c.h.b16 %v2400
      %v2746 = vunpack.c.l.b16 %v2401
      %v2747 = vunpack.c.h.b16 %v2401
      %v2748 = vunpack.c.l.b16 %v2402
      %v2749 = vunpack.c.h.b16 %v2402
      %v2750 = vunpack.c.l.b16 %v2403
      %v2751 = vunpack.c.h.b16 %v2403
      %v2752 = vunpack.c.l.b16 %v2404
      %v2753 = vunpack.c.h.b16 %v2404
      %v2754 = vunpack.c.l.b16 %v2405
      %v2755 = vunpack.c.h.b16 %v2405
      %v2756 = vunpack.c.l.b16 %v2406
      %v2757 = vunpack.c.h.b16 %v2406
      %v2758 = vunpack.c.l.b16 %v2407
      %v2759 = vunpack.c.h.b16 %v2407
      %v2760 = vunpack.c.l.b16 %v2408
      %v2761 = vunpack.c.h.b16 %v2408
      %v2762 = vunpack.c.l.b16 %v2409
      %v2763 = vunpack.c.h.b16 %v2409
      %v2764 = vunpack.c.l.b16 %v2410
      %v2765 = vunpack.c.h.b16 %v2410
      %v2766 = vunpack.c.l.b16 %v2411
      %v2767 = vunpack.c.h.b16 %v2411
      %v2768 = vunpack.c.l.b16 %v2412
      %v2769 = vunpack.c.h.b16 %v2412
      %v2770 = vunpack.c.l.b16 %v2413
      %v2771 = vunpack.c.h.b16 %v2413
      %v2772 = vunpack.c.l.b16 %v2414
      %v2773 = vunpack.c.h.b16 %v2414
      %v2774 = vunpack.c.l.b16 %v2415
      %v2775 = vunpack.c.h.b16 %v2415
      %v2776 = vunpack.c.l.b16 %v2416
      %v2777 = vunpack.c.h.b16 %v2416
      %v2778 = vunpack.c.l.b16 %v2417
      %v2779 = vunpack.c.h.b16 %v2417
      %v2780 = vunpack.c.l.b16 %v2418
      %v2781 = vunpack.c.h.b16 %v2418
      %v2782 = vunpack.c.l.b16 %v2419
      %v2783 = vunpack.c.h.b16 %v2419
      %v2784 = vunpack.c.l.b16 %v2420
      %v2785 = vunpack.c.h.b16 %v2420
      %v2786 = vunpack.c.l.b16 %v2421
      %v2787 = vunpack.c.h.b16 %v2421
      %v2788 = vunpack.c.l.b16 %v2422
      %v2789 = vunpack.c.h.b16 %v2422
      %v2790 = vunpack.c.l.b16 %v2423
      %v2791 = vunpack.c.h.b16 %v2423
      %v2792 = vunpack.c.l.b16 %v2424
      %v2793 = vunpack.c.h.b16 %v2424
      %v2794 = vunpack.c.l.b16 %v2425
      %v2795 = vunpack.c.h.b16 %v2425
      %v2796 = vunpack.c.l.b16 %v2426
      %v2797 = vunpack.c.h.b16 %v2426
      %v2798 = vunpack.c.l.b16 %v2427
      %v2799 = vunpack.c.h.b16 %v2427
      %v2800 = vunpack.c.l.b16 %v2428
      %v2801 = vunpack.c.h.b16 %v2428
      %v2802 = vunpack.c.l.b16 %v2429
      %v2803 = vunpack.c.h.b16 %v2429
      %v2804 = vunpack.c.l.b16 %v2430
      %v2805 = vunpack.c.h.b16 %v2430
      %v2806 = vunpack.c.l.b16 %v2431
      %v2807 = vunpack.c.h.b16 %v2431
      %v2808 = vunpack.c.l.b16 %v2432
      %v2809 = vunpack.c.h.b16 %v2432
      %v2810 = vunpack.c.l.b16 %v2433
      %v2811 = vunpack.c.h.b16 %v2433
      %v2812 = vunpack.c.l.b16 %v2434
      %v2813 = vunpack.c.h.b16 %v2434
      %v2814 = vunpack.c.l.b16 %v2435
      %v2815 = vunpack.c.h.b16 %v2435
      %v2816 = vunpack.c.l.b16 %v2436
      %v2817 = vunpack.c.h.b16 %v2436
      %v2818 = vunpack.c.l.b16 %v2437
      %v2819 = vunpack.c.h.b16 %v2437
      %v2820 = vunpack.c.l.b16 %v2438
      %v2821 = vunpack.c.h.b16 %v2438
      %v2822 = vunpack.c.l.b16 %v2439
      %v2823 = vunpack.c.h.b16 %v2439
      %v2824 = vunpack.c.l.b16 %v2440
      %v2825 = vunpack.c.h.b16 %v2440
      %v2826 = vunpack.c.l.b16 %v2441
      %v2827 = vunpack.c.h.b16 %v2441
      %v2828 = vunpack.c.l.b16 %v2442
      %v2829 = vunpack.c.h.b16 %v2442
      %v2830 = vunpack.c.l.b16 %v2443
      %v2831 = vunpack.c.h.b16 %v2443
      %v2832 = vunpack.c.l.b16 %v2444
      %v2833 = vunpack.c.h.b16 %v2444
      %v2834 = vunpack.c.l.b16 %v2445
      %v2835 = vunpack.c.h.b16 %v2445
      %v2836 = vunpack.c.l.b16 %v2446
      %v2837 = vunpack.c.h.b16 %v2446
      %v2838 = vunpack.c.l.b16 %v2447
      %v2839 = vunpack.c.h.b16 %v2447
      %v2840 = vunpack.c.l.b16 %v2448
      %v2841 = vunpack.c.h.b16 %v2448
      %v2842 = vunpack.c.l.b16 %v2449
      %v2843 = vunpack.c.h.b16 %v2449
      %v2844 = vunpack.c.l.b16 %v2450
      %v2845 = vunpack.c.h.b16 %v2450
      %v2846 = vunpack.c.l.b16 %v2451
      %v2847 = vunpack.c.h.b16 %v2451
      %v2848 = vunpack.c.l.b16 %v2452
      %v2849 = vunpack.c.h.b16 %v2452
      %v2850 = vunpack.c.l.b16 %v2453
      %v2851 = vunpack.c.h.b16 %v2453
      %v2852 = vunpack.c.l.b16 %v2454
      %v2853 = vunpack.c.h.b16 %v2454
      %v2854 = vpack.c.b16 %v2606, %v2598
      %v2855 = vpack.c.b16 %v2607, %v2599
      %v2856 = vpack.c.b16 %v2608, %v2600
      %v2857 = vpack.c.b16 %v2609, %v2601
      %v2858 = vpack.c.b16 %v2610, %v2602
      %v2859 = vpack.c.b16 %v2611, %v2603
      %v2860 = vpack.c.b16 %v2612, %v2604
      %v2861 = vpack.c.b16 %v2613, %v2605
      %v2862 = vpack.c.b16 %v2622, %v2614
      %v2863 = vpack.c.b16 %v2623, %v2615
      %v2864 = vpack.c.b16 %v2624, %v2616
      %v2865 = vpack.c.b16 %v2625, %v2617
      %v2866 = vpack.c.b16 %v2626, %v2618
      %v2867 = vpack.c.b16 %v2627, %v2619
      %v2868 = vpack.c.b16 %v2628, %v2620
      %v2869 = vpack.c.b16 %v2629, %v2621
      %v2870 = vpack.c.b16 %v2638, %v2630
      %v2871 = vpack.c.b16 %v2639, %v2631
      %v2872 = vpack.c.b16 %v2640, %v2632
      %v2873 = vpack.c.b16 %v2641, %v2633
      %v2874 = vpack.c.b16 %v2642, %v2634
      %v2875 = vpack.c.b16 %v2643, %v2635
      %v2876 = vpack.c.b16 %v2644, %v2636
      %v2877 = vpack.c.b16 %v2645, %v2637
      %v2878 = vpack.c.b16 %v2654, %v2646
      %v2879 = vpack.c.b16 %v2655, %v2647
      %v2880 = vpack.c.b16 %v2656, %v2648
      %v2881 = vpack.c.b16 %v2657, %v2649
      %v2882 = vpack.c.b16 %v2658, %v2650
      %v2883 = vpack.c.b16 %v2659, %v2651
      %v2884 = vpack.c.b16 %v2660, %v2652
      %v2885 = vpack.c.b16 %v2661, %v2653
      %v2886 = vpack.c.b16 %v2670, %v2662
      %v2887 = vpack.c.b16 %v2671, %v2663
      %v2888 = vpack.c.b16 %v2672, %v2664
      %v2889 = vpack.c.b16 %v2673, %v2665
      %v2890 = vpack.c.b16 %v2674, %v2666
      %v2891 = vpack.c.b16 %v2675, %v2667
      %v2892 = vpack.c.b16 %v2676, %v2668
      %v2893 = vpack.c.b16 %v2677, %v2669
      %v2894 = vpack.c.b16 %v2686, %v2678
      %v2895 = vpack.c.b16 %v2687, %v2679
      %v2896 = vpack.c.b16 %v2688, %v2680
      %v2897 = vpack.c.b16 %v2689, %v2681
      %v2898 = vpack.c.b16 %v2690, %v2682
      %v2899 = vpack.c.b16 %v2691, %v2683
      %v2900 = vpack.c.b16 %v2692, %v2684
      %v2901 = vpack.c.b16 %v2693, %v2685
      %v2902 = vpack.c.b16 %v2702, %v2694
      %v2903 = vpack.c.b16 %v2703, %v2695
      %v2904 = vpack.c.b16 %v2704, %v2696
      %v2905 = vpack.c.b16 %v2705, %v2697
      %v2906 = vpack.c.b16 %v2706, %v2698
      %v2907 = vpack.c.b16 %v2707, %v2699
      %v2908 = vpack.c.b16 %v2708, %v2700
      %v2909 = vpack.c.b16 %v2709, %v2701
      %v2910 = vpack.c.b16 %v2718, %v2710
      %v2911 = vpack.c.b16 %v2719, %v2711
      %v2912 = vpack.c.b16 %v2720, %v2712
      %v2913 = vpack.c.b16 %v2721, %v2713
      %v2914 = vpack.c.b16 %v2722, %v2714
      %v2915 = vpack.c.b16 %v2723, %v2715
      %v2916 = vpack.c.b16 %v2724, %v2716
      %v2917 = vpack.c.b16 %v2725, %v2717
      %v2918 = vpack.c.b16 %v2734, %v2726
      %v2919 = vpack.c.b16 %v2735, %v2727
      %v2920 = vpack.c.b16 %v2736, %v2728
      %v2921 = vpack.c.b16 %v2737, %v2729
      %v2922 = vpack.c.b16 %v2738, %v2730
      %v2923 = vpack.c.b16 %v2739, %v2731
      %v2924 = vpack.c.b16 %v2740, %v2732
      %v2925 = vpack.c.b16 %v2741, %v2733
      %v2926 = vpack.c.b16 %v2750, %v2742
      %v2927 = vpack.c.b16 %v2751, %v2743
      %v2928 = vpack.c.b16 %v2752, %v2744
      %v2929 = vpack.c.b16 %v2753, %v2745
      %v2930 = vpack.c.b16 %v2754, %v2746
      %v2931 = vpack.c.b16 %v2755, %v2747
      %v2932 = vpack.c.b16 %v2756, %v2748
      %v2933 = vpack.c.b16 %v2757, %v2749
      %v2934 = vpack.c.b16 %v2766, %v2758
      %v2935 = vpack.c.b16 %v2767, %v2759
      %v2936 = vpack.c.b16 %v2768, %v2760
      %v2937 = vpack.c.b16 %v2769, %v2761
      %v2938 = vpack.c.b16 %v2770, %v2762
      %v2939 = vpack.c.b16 %v2771, %v2763
      %v2940 = vpack.c.b16 %v2772, %v2764
      %v2941 = vpack.c.b16 %v2773, %v2765
      %v2942 = vpack.c.b16 %v2782, %v2774
      %v2943 = vpack.c.b16 %v2783, %v2775
      %v2944 = vpack.c.b16 %v2784, %v2776
      %v2945 = vpack.c.b16 %v2785, %v2777
      %v2946 = vpack.c.b16 %v2786, %v2778
      %v2947 = vpack.c.b16 %v2787, %v2779
      %v2948 = vpack.c.b16 %v2788, %v2780
      %v2949 = vpack.c.b16 %v2789, %v2781
      %v2950 = vpack.c.b16 %v2798, %v2790
      %v2951 = vpack.c.b16 %v2799, %v2791
      %v2952 = vpack.c.b16 %v2800, %v2792
      %v2953 = vpack.c.b16 %v2801, %v2793
      %v2954 = vpack.c.b16 %v2802, %v2794
      %v2955 = vpack.c.b16 %v2803, %v2795
      %v2956 = vpack.c.b16 %v2804, %v2796
      %v2957 = vpack.c.b16 %v2805, %v2797
      %v2958 = vpack.c.b16 %v2814, %v2806
      %v2959 = vpack.c.b16 %v2815, %v2807
      %v2960 = vpack.c.b16 %v2816, %v2808
      %v2961 = vpack.c.b16 %v2817, %v2809
      %v2962 = vpack.c.b16 %v2818, %v2810
      %v2963 = vpack.c.b16 %v2819, %v2811
      %v2964 = vpack.c.b16 %v2820, %v2812
      %v2965 = vpack.c.b16 %v2821, %v2813
      %v2966 = vpack.c.b16 %v2830, %v2822
      %v2967 = vpack.c.b16 %v2831, %v2823
      %v2968 = vpack.c.b16 %v2832, %v2824
      %v2969 = vpack.c.b16 %v2833, %v2825
      %v2970 = vpack.c.b16 %v2834, %v2826
      %v2971 = vpack.c.b16 %v2835, %v2827
      %v2972 = vpack.c.b16 %v2836, %v2828
      %v2973 = vpack.c.b16 %v2837, %v2829
      %v2974 = vpack.c.b16 %v2846, %v2838
      %v2975 = vpack.c.b16 %v2847, %v2839
      %v2976 = vpack.c.b16 %v2848, %v2840
      %v2977 = vpack.c.b16 %v2849, %v2841
      %v2978 = vpack.c.b16 %v2850, %v2842
      %v2979 = vpack.c.b16 %v2851, %v2843
      %v2980 = vpack.c.b16 %v2852, %v2844
      %v2981 = vpack.c.b16 %v2853, %v2845
      %3110 = vmatprep.subr.bf16.mxu0 %v2855
      %3111 = vmatpush1.bf16.msra.mxu0 %v2854
      %3112 = vmatprep.subr.bf16.mxu0 %v2863
      %3113 = vmatpush1.bf16.msra.mxu0 %v2862
      %3114 = vmatprep.subr.bf16.mxu0 %v2871
      %3115 = vmatpush1.bf16.msra.mxu0 %v2870
      %3116 = vmatprep.subr.bf16.mxu0 %v2879
      %3117 = vmatpush1.bf16.msra.mxu0 %v2878
      %3118 = vmatprep.subr.bf16.mxu0 %v2887
      %3119 = vmatpush1.bf16.msra.mxu0 %v2886
      %3120 = vmatprep.subr.bf16.mxu0 %v2895
      %3121 = vmatpush1.bf16.msra.mxu0 %v2894
      %3122 = vmatprep.subr.bf16.mxu0 %v2903
      %3123 = vmatpush1.bf16.msra.mxu0 %v2902
      %3124 = vmatprep.subr.bf16.mxu0 %v2911
      %3125 = vmatpush1.bf16.msra.mxu0 %v2910
      %3126 = vmatprep.subr.bf16.mxu0 %v2919
      %3127 = vmatpush1.bf16.msra.mxu0 %v2918
      %3128 = vmatprep.subr.bf16.mxu0 %v2927
      %3129 = vmatpush1.bf16.msra.mxu0 %v2926
      %3130 = vmatprep.subr.bf16.mxu0 %v2935
      %3131 = vmatpush1.bf16.msra.mxu0 %v2934
      %3132 = vmatprep.subr.bf16.mxu0 %v2943
      %3133 = vmatpush1.bf16.msra.mxu0 %v2942
      %3134 = vmatprep.subr.bf16.mxu0 %v2951
      %3135 = vmatpush1.bf16.msra.mxu0 %v2950
      %3136 = vmatprep.subr.bf16.mxu0 %v2959
      %3137 = vmatpush1.bf16.msra.mxu0 %v2958
      %3138 = vmatprep.subr.bf16.mxu0 %v2967
      %3139 = vmatpush1.bf16.msra.mxu0 %v2966
      %3140 = vmatprep.subr.bf16.mxu0 %v2975
      %3141 = vmatpush1.bf16.msra.mxu0 %v2974
      %3142 = vmatprep.mubr.bf16.mxu0 %v2465
      %3143 = vmatmul.mubr.bf16.gmra.mrb[0].mxu0 %v2462
      %v3144 = vpop.f32.mrb[0].mxu0
      %v3145 = vadd.f32 0.0, %v3144
      %v3146 = vpop.f32.mrb[0].mxu0
      %v3147 = vadd.f32 0.0, %v3146
      %v3148 = vpop.f32.mrb[0].mxu0
      %v3149 = vadd.f32 0.0, %v3148
      %v3150 = vpop.f32.mrb[0].mxu0
      %v3151 = vadd.f32 0.0, %v3150
      %3152 = vmatprep.mubr.bf16.mxu0 %v2464
      %3153 = vmatmul.mubr.bf16.gmra.mrb[0].mxu0 %v2461
      %v3154 = vpop.f32.mrb[0].mxu0
      %v3155 = vadd.f32 0.0, %v3154
      %v3156 = vpop.f32.mrb[0].mxu0
      %v3157 = vadd.f32 0.0, %v3156
      %v3158 = vpop.f32.mrb[0].mxu0
      %v3159 = vpop.f32.mrb[0].mxu0
      %3160 = vdwg.mxu0
      %3161 = vmatprep.subr.bf16.mxu0 %v2857
      %3162 = vmatpush1.bf16.msra.mxu0 %v2856
      %3163 = vmatprep.subr.bf16.mxu0 %v2865
      %3164 = vmatpush1.bf16.msra.mxu0 %v2864
      %3165 = vmatprep.subr.bf16.mxu0 %v2873
      %3166 = vmatpush1.bf16.msra.mxu0 %v2872
      %3167 = vmatprep.subr.bf16.mxu0 %v2881
      %3168 = vmatpush1.bf16.msra.mxu0 %v2880
      %3169 = vmatprep.subr.bf16.mxu0 %v2889
      %3170 = vmatpush1.bf16.msra.mxu0 %v2888
      %3171 = vmatprep.subr.bf16.mxu0 %v2897
      %3172 = vmatpush1.bf16.msra.mxu0 %v2896
      %3173 = vmatprep.subr.bf16.mxu0 %v2905
      %3174 = vmatpush1.bf16.msra.mxu0 %v2904
      %3175 = vmatprep.subr.bf16.mxu0 %v2913
      %3176 = vmatpush1.bf16.msra.mxu0 %v2912
      %3177 = vmatprep.subr.bf16.mxu0 %v2921
      %3178 = vmatpush1.bf16.msra.mxu0 %v2920
      %3179 = vmatprep.subr.bf16.mxu0 %v2929
      %3180 = vmatpush1.bf16.msra.mxu0 %v2928
      %3181 = vmatprep.subr.bf16.mxu0 %v2937
      %3182 = vmatpush1.bf16.msra.mxu0 %v2936
      %3183 = vmatprep.subr.bf16.mxu0 %v2945
      %3184 = vmatpush1.bf16.msra.mxu0 %v2944
      %3185 = vmatprep.subr.bf16.mxu0 %v2953
      %3186 = vmatpush1.bf16.msra.mxu0 %v2952
      %3187 = vmatprep.subr.bf16.mxu0 %v2961
      %3188 = vmatpush1.bf16.msra.mxu0 %v2960
      %3189 = vmatprep.subr.bf16.mxu0 %v2969
      %3190 = vmatpush1.bf16.msra.mxu0 %v2968
      %3191 = vmatprep.subr.bf16.mxu0 %v2977
      %3192 = vmatpush1.bf16.msra.mxu0 %v2976
      %3193 = vmatprep.mubr.bf16.mxu0 %v2465
      %3194 = vmatmul.mubr.bf16.gmra.mrb[0].mxu0 %v2462
      %v3195 = vpop.f32.mrb[0].mxu0
      %v3196 = vadd.f32 0.0, %v3195
      %v3197 = vpop.f32.mrb[0].mxu0
      %v3198 = vadd.f32 0.0, %v3197
      %v3199 = vpop.f32.mrb[0].mxu0
      %v3200 = vadd.f32 0.0, %v3199
      %v3201 = vpop.f32.mrb[0].mxu0
      %v3202 = vadd.f32 0.0, %v3201
      %3203 = vmatprep.mubr.bf16.mxu0 %v2464
      %3204 = vmatmul.mubr.bf16.gmra.mrb[0].mxu0 %v2461
      %v3205 = vpop.f32.mrb[0].mxu0
      %v3206 = vadd.f32 0.0, %v3205
      %v3207 = vpop.f32.mrb[0].mxu0
      %v3208 = vadd.f32 0.0, %v3207
      %v3209 = vpop.f32.mrb[0].mxu0
      %v3210 = vpop.f32.mrb[0].mxu0
      %3211 = vdwg.mxu0
      %3212 = vmatprep.subr.bf16.mxu0 %v2859
      %3213 = vmatpush1.bf16.msra.mxu0 %v2858
      %3214 = vmatprep.subr.bf16.mxu0 %v2867
      %3215 = vmatpush1.bf16.msra.mxu0 %v2866
      %3216 = vmatprep.subr.bf16.mxu0 %v2875
      %3217 = vmatpush1.bf16.msra.mxu0 %v2874
      %3218 = vmatprep.subr.bf16.mxu0 %v2883
      %3219 = vmatpush1.bf16.msra.mxu0 %v2882
      %3220 = vmatprep.subr.bf16.mxu0 %v2891
      %3221 = vmatpush1.bf16.msra.mxu0 %v2890
      %3222 = vmatprep.subr.bf16.mxu0 %v2899
      %3223 = vmatpush1.bf16.msra.mxu0 %v2898
      %3224 = vmatprep.subr.bf16.mxu0 %v2907
      %3225 = vmatpush1.bf16.msra.mxu0 %v2906
      %3226 = vmatprep.subr.bf16.mxu0 %v2915
      %3227 = vmatpush1.bf16.msra.mxu0 %v2914
      %3228 = vmatprep.subr.bf16.mxu0 %v2923
      %3229 = vmatpush1.bf16.msra.mxu0 %v2922
      %3230 = vmatprep.subr.bf16.mxu0 %v2931
      %3231 = vmatpush1.bf16.msra.mxu0 %v2930
      %3232 = vmatprep.subr.bf16.mxu0 %v2939
      %3233 = vmatpush1.bf16.msra.mxu0 %v2938
      %3234 = vmatprep.subr.bf16.mxu0 %v2947
      %3235 = vmatpush1.bf16.msra.mxu0 %v2946
      %3236 = vmatprep.subr.bf16.mxu0 %v2955
      %3237 = vmatpush1.bf16.msra.mxu0 %v2954
      %3238 = vmatprep.subr.bf16.mxu0 %v2963
      %3239 = vmatpush1.bf16.msra.mxu0 %v2962
      %3240 = vmatprep.subr.bf16.mxu0 %v2971
      %3241 = vmatpush1.bf16.msra.mxu0 %v2970
      %3242 = vmatprep.subr.bf16.mxu0 %v2979
      %3243 = vmatpush1.bf16.msra.mxu0 %v2978
      %3244 = vmatprep.mubr.bf16.mxu0 %v2465
      %3245 = vmatmul.mubr.bf16.gmra.mrb[0].mxu0 %v2462
      %v3246 = vpop.f32.mrb[0].mxu0
      %v3247 = vadd.f32 0.0, %v3246
      %v3248 = vpop.f32.mrb[0].mxu0
      %v3249 = vadd.f32 0.0, %v3248
      %v3250 = vpop.f32.mrb[0].mxu0
      %v3251 = vadd.f32 0.0, %v3250
      %v3252 = vpop.f32.mrb[0].mxu0
      %v3253 = vadd.f32 0.0, %v3252
      %3254 = vmatprep.mubr.bf16.mxu0 %v2464
      %3255 = vmatmul.mubr.bf16.gmra.mrb[0].mxu0 %v2461
      %v3256 = vpop.f32.mrb[0].mxu0
      %v3257 = vadd.f32 0.0, %v3256
      %v3258 = vpop.f32.mrb[0].mxu0
      %v3259 = vadd.f32 0.0, %v3258
      %v3260 = vpop.f32.mrb[0].mxu0
      %v3261 = vpop.f32.mrb[0].mxu0
      %3262 = vdwg.mxu0
      %3263 = vmatprep.subr.bf16.mxu0 %v2861
      %3264 = vmatpush1.bf16.msra.mxu0 %v2860
      %3265 = vmatprep.subr.bf16.mxu0 %v2869
      %3266 = vmatpush1.bf16.msra.mxu0 %v2868
      %3267 = vmatprep.subr.bf16.mxu0 %v2877
      %3268 = vmatpush1.bf16.msra.mxu0 %v2876
      %3269 = vmatprep.subr.bf16.mxu0 %v2885
      %3270 = vmatpush1.bf16.msra.mxu0 %v2884
      %3271 = vmatprep.subr.bf16.mxu0 %v2893
      %3272 = vmatpush1.bf16.msra.mxu0 %v2892
      %3273 = vmatprep.subr.bf16.mxu0 %v2901
      %3274 = vmatpush1.bf16.msra.mxu0 %v2900
      %3275 = vmatprep.subr.bf16.mxu0 %v2909
      %3276 = vmatpush1.bf16.msra.mxu0 %v2908
      %3277 = vmatprep.subr.bf16.mxu0 %v2917
      %3278 = vmatpush1.bf16.msra.mxu0 %v2916
      %3279 = vmatprep.subr.bf16.mxu0 %v2925
      %3280 = vmatpush1.bf16.msra.mxu0 %v2924
      %3281 = vmatprep.subr.bf16.mxu0 %v2933
      %3282 = vmatpush1.bf16.msra.mxu0 %v2932
      %3283 = vmatprep.subr.bf16.mxu0 %v2941
      %3284 = vmatpush1.bf16.msra.mxu0 %v2940
      %3285 = vmatprep.subr.bf16.mxu0 %v2949
      %3286 = vmatpush1.bf16.msra.mxu0 %v2948
      %3287 = vmatprep.subr.bf16.mxu0 %v2957
      %3288 = vmatpush1.bf16.msra.mxu0 %v2956
      %3289 = vmatprep.subr.bf16.mxu0 %v2965
      %3290 = vmatpush1.bf16.msra.mxu0 %v2964
      %3291 = vmatprep.subr.bf16.mxu0 %v2973
      %3292 = vmatpush1.bf16.msra.mxu0 %v2972
      %3293 = vmatprep.subr.bf16.mxu0 %v2981
      %3294 = vmatpush1.bf16.msra.mxu0 %v2980
      %3295 = vmatprep.mubr.bf16.mxu0 %v2465
      %3296 = vmatmul.mubr.bf16.gmra.mrb[0].mxu0 %v2462
      %v3297 = vpop.f32.mrb[0].mxu0
      %v3298 = vadd.f32 0.0, %v3297
      %v3299 = vpop.f32.mrb[0].mxu0
      %v3300 = vadd.f32 0.0, %v3299
      %v3301 = vpop.f32.mrb[0].mxu0
      %v3302 = vadd.f32 0.0, %v3301
      %v3303 = vpop.f32.mrb[0].mxu0
      %v3304 = vadd.f32 0.0, %v3303
      %3305 = vmatprep.mubr.bf16.mxu0 %v2464
      %3306 = vmatmul.mubr.bf16.gmra.mrb[0].mxu0 %v2461
      %v3307 = vpop.f32.mrb[0].mxu0
      %v3308 = vadd.f32 0.0, %v3307
      %v3309 = vpop.f32.mrb[0].mxu0
      %v3310 = vadd.f32 0.0, %v3309
      %v3311 = vpop.f32.mrb[0].mxu0
      %v3312 = vpop.f32.mrb[0].mxu0
      %3313 = vdwg.mxu0
      %v3314 = vadd.f32 %v2158, %v3145
      %v3315 = vadd.f32 %v2160, %v3147
      %v3316 = vadd.f32 %v2209, %v3196
      %v3317 = vadd.f32 %v2211, %v3198
      %v3318 = vadd.f32 %v2260, %v3247
      %v3319 = vadd.f32 %v2262, %v3249
      %v3320 = vadd.f32 %v2311, %v3298
      %v3321 = vadd.f32 %v2313, %v3300
      %v3322 = vadd.f32 %v2162, %v3149
      %v3323 = vadd.f32 %v2164, %v3151
      %v3324 = vadd.f32 %v2213, %v3200
      %v3325 = vadd.f32 %v2215, %v3202
      %v3326 = vadd.f32 %v2264, %v3251
      %v3327 = vadd.f32 %v2266, %v3253
      %v3328 = vadd.f32 %v2315, %v3302
      %v3329 = vadd.f32 %v2317, %v3304
      %v3330 = vadd.f32 %v2168, %v3155
      %v3331 = vadd.f32 %v2170, %v3157
      %v3332 = vadd.f32 %v2219, %v3206
      %v3333 = vadd.f32 %v2221, %v3208
      %v3334 = vadd.f32 %v2270, %v3257
      %v3335 = vadd.f32 %v2272, %v3259
      %v3336 = vadd.f32 %v2321, %v3308
      %v3337 = vadd.f32 %v2323, %v3310
      %v3338 = vld [vmem:[%s296 + $0xc00] sm:$0xff]
      %v3339 = vld [vmem:[%s296 + $0xc08] sm:$0xff]
      %v3340 = vld [vmem:[%s296 + $0xc10] sm:$0xff]
      %v3341 = vld [vmem:[%s296 + $0xc18] sm:$0xff]
      %v3342 = vld [vmem:[%s296 + $0xc20] sm:$0xff]
      %v3343 = vld [vmem:[%s296 + $0xc28] sm:$0xff]
      %v3344 = vld [vmem:[%s296 + $0xc30] sm:$0xff]
      %v3345 = vld [vmem:[%s296 + $0xc38] sm:$0xff]
      %v3346 = vld [vmem:[%s296 + $0xc40] sm:$0xff]
      %v3347 = vld [vmem:[%s296 + $0xc48] sm:$0xff]
      %v3348 = vld [vmem:[%s296 + $0xc50] sm:$0xff]
      %v3349 = vld [vmem:[%s296 + $0xc58] sm:$0xff]
      %v3350 = vld [vmem:[%s296 + $0xc60] sm:$0xff]
      %v3351 = vld [vmem:[%s296 + $0xc68] sm:$0xff]
      %v3352 = vld [vmem:[%s296 + $0xc70] sm:$0xff]
      %v3353 = vld [vmem:[%s296 + $0xc78] sm:$0xff]
      %v3354 = vld [vmem:[%s296 + $0xc80] sm:$0xff]
      %v3355 = vld [vmem:[%s296 + $0xc88] sm:$0xff]
      %v3356 = vld [vmem:[%s296 + $0xc90] sm:$0xff]
      %v3357 = vld [vmem:[%s296 + $0xc98] sm:$0xff]
      %v3358 = vld [vmem:[%s296 + $0xca0] sm:$0xff]
      %v3359 = vld [vmem:[%s296 + $0xca8] sm:$0xff]
      %v3360 = vld [vmem:[%s296 + $0xcb0] sm:$0xff]
      %v3361 = vld [vmem:[%s296 + $0xcb8] sm:$0xff]
      %v3362 = vld [vmem:[%s296 + $0xcc0] sm:$0xff]
      %v3363 = vld [vmem:[%s296 + $0xcc8] sm:$0xff]
      %v3364 = vld [vmem:[%s296 + $0xcd0] sm:$0xff]
      %v3365 = vld [vmem:[%s296 + $0xcd8] sm:$0xff]
      %v3366 = vld [vmem:[%s296 + $0xce0] sm:$0xff]
      %v3367 = vld [vmem:[%s296 + $0xce8] sm:$0xff]
      %v3368 = vld [vmem:[%s296 + $0xcf0] sm:$0xff]
      %v3369 = vld [vmem:[%s296 + $0xcf8] sm:$0xff]
      %v3370 = vld [vmem:[%s296 + $0xd00] sm:$0xff]
      %v3371 = vld [vmem:[%s296 + $0xd08] sm:$0xff]
      %v3372 = vld [vmem:[%s296 + $0xd10] sm:$0xff]
      %v3373 = vld [vmem:[%s296 + $0xd18] sm:$0xff]
      %v3374 = vld [vmem:[%s296 + $0xd20] sm:$0xff]
      %v3375 = vld [vmem:[%s296 + $0xd28] sm:$0xff]
      %v3376 = vld [vmem:[%s296 + $0xd30] sm:$0xff]
      %v3377 = vld [vmem:[%s296 + $0xd38] sm:$0xff]
      %v3378 = vld [vmem:[%s296 + $0xd40] sm:$0xff]
      %v3379 = vld [vmem:[%s296 + $0xd48] sm:$0xff]
      %v3380 = vld [vmem:[%s296 + $0xd50] sm:$0xff]
      %v3381 = vld [vmem:[%s296 + $0xd58] sm:$0xff]
      %v3382 = vld [vmem:[%s296 + $0xd60] sm:$0xff]
      %v3383 = vld [vmem:[%s296 + $0xd68] sm:$0xff]
      %v3384 = vld [vmem:[%s296 + $0xd70] sm:$0xff]
      %v3385 = vld [vmem:[%s296 + $0xd78] sm:$0xff]
      %v3386 = vld [vmem:[%s296 + $0xd80] sm:$0xff]
      %v3387 = vld [vmem:[%s296 + $0xd88] sm:$0xff]
      %v3388 = vld [vmem:[%s296 + $0xd90] sm:$0xff]
      %v3389 = vld [vmem:[%s296 + $0xd98] sm:$0xff]
      %v3390 = vld [vmem:[%s296 + $0xda0] sm:$0xff]
      %v3391 = vld [vmem:[%s296 + $0xda8] sm:$0xff]
      %v3392 = vld [vmem:[%s296 + $0xdb0] sm:$0xff]
      %v3393 = vld [vmem:[%s296 + $0xdb8] sm:$0xff]
      %v3394 = vld [vmem:[%s296 + $0xdc0] sm:$0xff]
      %v3395 = vld [vmem:[%s296 + $0xdc8] sm:$0xff]
      %v3396 = vld [vmem:[%s296 + $0xdd0] sm:$0xff]
      %v3397 = vld [vmem:[%s296 + $0xdd8] sm:$0xff]
      %v3398 = vld [vmem:[%s296 + $0xde0] sm:$0xff]
      %v3399 = vld [vmem:[%s296 + $0xde8] sm:$0xff]
      %v3400 = vld [vmem:[%s296 + $0xdf0] sm:$0xff]
      %v3401 = vld [vmem:[%s296 + $0xdf8] sm:$0xff]
      %v3402 = vld [vmem:[%s296 + $0xe00] sm:$0xff]
      %v3403 = vld [vmem:[%s296 + $0xe08] sm:$0xff]
      %v3404 = vld [vmem:[%s296 + $0xe10] sm:$0xff]
      %v3405 = vld [vmem:[%s296 + $0xe18] sm:$0xff]
      %v3406 = vld [vmem:[%s296 + $0xe20] sm:$0xff]
      %v3407 = vld [vmem:[%s296 + $0xe28] sm:$0xff]
      %v3408 = vld [vmem:[%s296 + $0xe30] sm:$0xff]
      %v3409 = vld [vmem:[%s296 + $0xe38] sm:$0xff]
      %v3410 = vld [vmem:[%s296 + $0xe40] sm:$0xff]
      %v3411 = vld [vmem:[%s296 + $0xe48] sm:$0xff]
      %v3412 = vld [vmem:[%s296 + $0xe50] sm:$0xff]
      %v3413 = vld [vmem:[%s296 + $0xe58] sm:$0xff]
      %v3414 = vld [vmem:[%s296 + $0xe60] sm:$0xff]
      %v3415 = vld [vmem:[%s296 + $0xe68] sm:$0xff]
      %v3416 = vld [vmem:[%s296 + $0xe70] sm:$0xff]
      %v3417 = vld [vmem:[%s296 + $0xe78] sm:$0xff]
      %v3418 = vld [vmem:[%s296 + $0xe80] sm:$0xff]
      %v3419 = vld [vmem:[%s296 + $0xe88] sm:$0xff]
      %v3420 = vld [vmem:[%s296 + $0xe90] sm:$0xff]
      %v3421 = vld [vmem:[%s296 + $0xe98] sm:$0xff]
      %v3422 = vld [vmem:[%s296 + $0xea0] sm:$0xff]
      %v3423 = vld [vmem:[%s296 + $0xea8] sm:$0xff]
      %v3424 = vld [vmem:[%s296 + $0xeb0] sm:$0xff]
      %v3425 = vld [vmem:[%s296 + $0xeb8] sm:$0xff]
      %v3426 = vld [vmem:[%s296 + $0xec0] sm:$0xff]
      %v3427 = vld [vmem:[%s296 + $0xec8] sm:$0xff]
      %v3428 = vld [vmem:[%s296 + $0xed0] sm:$0xff]
      %v3429 = vld [vmem:[%s296 + $0xed8] sm:$0xff]
      %v3430 = vld [vmem:[%s296 + $0xee0] sm:$0xff]
      %v3431 = vld [vmem:[%s296 + $0xee8] sm:$0xff]
      %v3432 = vld [vmem:[%s296 + $0xef0] sm:$0xff]
      %v3433 = vld [vmem:[%s296 + $0xef8] sm:$0xff]
      %v3434 = vld [vmem:[%s296 + $0xf00] sm:$0xff]
      %v3435 = vld [vmem:[%s296 + $0xf08] sm:$0xff]
      %v3436 = vld [vmem:[%s296 + $0xf10] sm:$0xff]
      %v3437 = vld [vmem:[%s296 + $0xf18] sm:$0xff]
      %v3438 = vld [vmem:[%s296 + $0xf20] sm:$0xff]
      %v3439 = vld [vmem:[%s296 + $0xf28] sm:$0xff]
      %v3440 = vld [vmem:[%s296 + $0xf30] sm:$0xff]
      %v3441 = vld [vmem:[%s296 + $0xf38] sm:$0xff]
      %v3442 = vld [vmem:[%s296 + $0xf40] sm:$0xff]
      %v3443 = vld [vmem:[%s296 + $0xf48] sm:$0xff]
      %v3444 = vld [vmem:[%s296 + $0xf50] sm:$0xff]
      %v3445 = vld [vmem:[%s296 + $0xf58] sm:$0xff]
      %v3446 = vld [vmem:[%s296 + $0xf60] sm:$0xff]
      %v3447 = vld [vmem:[%s296 + $0xf68] sm:$0xff]
      %v3448 = vld [vmem:[%s296 + $0xf70] sm:$0xff]
      %v3449 = vld [vmem:[%s296 + $0xf78] sm:$0xff]
      %v3450 = vld [vmem:[%s296 + $0xf80] sm:$0xff]
      %v3451 = vld [vmem:[%s296 + $0xf88] sm:$0xff]
      %v3452 = vld [vmem:[%s296 + $0xf90] sm:$0xff]
      %v3453 = vld [vmem:[%s296 + $0xf98] sm:$0xff]
      %v3454 = vld [vmem:[%s296 + $0xfa0] sm:$0xff]
      %v3455 = vld [vmem:[%s296 + $0xfa8] sm:$0xff]
      %v3456 = vld [vmem:[%s296 + $0xfb0] sm:$0xff]
      %v3457 = vld [vmem:[%s296 + $0xfb8] sm:$0xff]
      %v3458 = vld [vmem:[%s296 + $0xfc0] sm:$0xff]
      %v3459 = vld [vmem:[%s296 + $0xfc8] sm:$0xff]
      %v3460 = vld [vmem:[%s296 + $0xfd0] sm:$0xff]
      %v3461 = vld [vmem:[%s296 + $0xfd8] sm:$0xff]
      %v3462 = vld [vmem:[%s296 + $0xfe0] sm:$0xff]
      %v3463 = vld [vmem:[%s296 + $0xfe8] sm:$0xff]
      %v3464 = vld [vmem:[%s296 + $0xff0] sm:$0xff]
      %v3465 = vld [vmem:[%s296 + $0xff8] sm:$0xff]
      %vm3466 = vsmask.f32 6400
      %v3467 = vrot.slane %v606, 1
      %v3468 = vrot.slane %v608, 2
      %v3469 = vor.u32 %v3467, %v3468
      %v3470 = vrot.slane %v629, 1
      %v3471 = vrot.slane %v613, 2
      %v3472 = vor.u32 %v3470, %v3471
      %v3473 = vsel %vm3466, %v3469, %v3472
      %v3474 = vrot.slane %v618, 1
      %v3475 = vrot.slane %v620, 2
      %v3476 = vor.u32 %v3474, %v3475
      %v3477 = vrot.slane %v632, 1
      %v3478 = vrot.slane %v625, 2
      %v3479 = vor.u32 %v3477, %v3478
      %v3480 = vsel %vm3466, %v3476, %v3479
      %v3613 = vunpack.c.l.b16 %v3338
      %v3614 = vunpack.c.h.b16 %v3338
      %v3615 = vunpack.c.l.b16 %v3339
      %v3616 = vunpack.c.h.b16 %v3339
      %v3617 = vunpack.c.l.b16 %v3340
      %v3618 = vunpack.c.h.b16 %v3340
      %v3619 = vunpack.c.l.b16 %v3341
      %v3620 = vunpack.c.h.b16 %v3341
      %v3621 = vunpack.c.l.b16 %v3342
      %v3622 = vunpack.c.h.b16 %v3342
      %v3623 = vunpack.c.l.b16 %v3343
      %v3624 = vunpack.c.h.b16 %v3343
      %v3625 = vunpack.c.l.b16 %v3344
      %v3626 = vunpack.c.h.b16 %v3344
      %v3627 = vunpack.c.l.b16 %v3345
      %v3628 = vunpack.c.h.b16 %v3345
      %v3629 = vunpack.c.l.b16 %v3346
      %v3630 = vunpack.c.h.b16 %v3346
      %v3631 = vunpack.c.l.b16 %v3347
      %v3632 = vunpack.c.h.b16 %v3347
      %v3633 = vunpack.c.l.b16 %v3348
      %v3634 = vunpack.c.h.b16 %v3348
      %v3635 = vunpack.c.l.b16 %v3349
      %v3636 = vunpack.c.h.b16 %v3349
      %v3637 = vunpack.c.l.b16 %v3350
      %v3638 = vunpack.c.h.b16 %v3350
      %v3639 = vunpack.c.l.b16 %v3351
      %v3640 = vunpack.c.h.b16 %v3351
      %v3641 = vunpack.c.l.b16 %v3352
      %v3642 = vunpack.c.h.b16 %v3352
      %v3643 = vunpack.c.l.b16 %v3353
      %v3644 = vunpack.c.h.b16 %v3353
      %v3645 = vunpack.c.l.b16 %v3354
      %v3646 = vunpack.c.h.b16 %v3354
      %v3647 = vunpack.c.l.b16 %v3355
      %v3648 = vunpack.c.h.b16 %v3355
      %v3649 = vunpack.c.l.b16 %v3356
      %v3650 = vunpack.c.h.b16 %v3356
      %v3651 = vunpack.c.l.b16 %v3357
      %v3652 = vunpack.c.h.b16 %v3357
      %v3653 = vunpack.c.l.b16 %v3358
      %v3654 = vunpack.c.h.b16 %v3358
      %v3655 = vunpack.c.l.b16 %v3359
      %v3656 = vunpack.c.h.b16 %v3359
      %v3657 = vunpack.c.l.b16 %v3360
      %v3658 = vunpack.c.h.b16 %v3360
      %v3659 = vunpack.c.l.b16 %v3361
      %v3660 = vunpack.c.h.b16 %v3361
      %v3661 = vunpack.c.l.b16 %v3362
      %v3662 = vunpack.c.h.b16 %v3362
      %v3663 = vunpack.c.l.b16 %v3363
      %v3664 = vunpack.c.h.b16 %v3363
      %v3665 = vunpack.c.l.b16 %v3364
      %v3666 = vunpack.c.h.b16 %v3364
      %v3667 = vunpack.c.l.b16 %v3365
      %v3668 = vunpack.c.h.b16 %v3365
      %v3669 = vunpack.c.l.b16 %v3366
      %v3670 = vunpack.c.h.b16 %v3366
      %v3671 = vunpack.c.l.b16 %v3367
      %v3672 = vunpack.c.h.b16 %v3367
      %v3673 = vunpack.c.l.b16 %v3368
      %v3674 = vunpack.c.h.b16 %v3368
      %v3675 = vunpack.c.l.b16 %v3369
      %v3676 = vunpack.c.h.b16 %v3369
      %v3677 = vunpack.c.l.b16 %v3370
      %v3678 = vunpack.c.h.b16 %v3370
      %v3679 = vunpack.c.l.b16 %v3371
      %v3680 = vunpack.c.h.b16 %v3371
      %v3681 = vunpack.c.l.b16 %v3372
      %v3682 = vunpack.c.h.b16 %v3372
      %v3683 = vunpack.c.l.b16 %v3373
      %v3684 = vunpack.c.h.b16 %v3373
      %v3685 = vunpack.c.l.b16 %v3374
      %v3686 = vunpack.c.h.b16 %v3374
      %v3687 = vunpack.c.l.b16 %v3375
      %v3688 = vunpack.c.h.b16 %v3375
      %v3689 = vunpack.c.l.b16 %v3376
      %v3690 = vunpack.c.h.b16 %v3376
      %v3691 = vunpack.c.l.b16 %v3377
      %v3692 = vunpack.c.h.b16 %v3377
      %v3693 = vunpack.c.l.b16 %v3378
      %v3694 = vunpack.c.h.b16 %v3378
      %v3695 = vunpack.c.l.b16 %v3379
      %v3696 = vunpack.c.h.b16 %v3379
      %v3697 = vunpack.c.l.b16 %v3380
      %v3698 = vunpack.c.h.b16 %v3380
      %v3699 = vunpack.c.l.b16 %v3381
      %v3700 = vunpack.c.h.b16 %v3381
      %v3701 = vunpack.c.l.b16 %v3382
      %v3702 = vunpack.c.h.b16 %v3382
      %v3703 = vunpack.c.l.b16 %v3383
      %v3704 = vunpack.c.h.b16 %v3383
      %v3705 = vunpack.c.l.b16 %v3384
      %v3706 = vunpack.c.h.b16 %v3384
      %v3707 = vunpack.c.l.b16 %v3385
      %v3708 = vunpack.c.h.b16 %v3385
      %v3709 = vunpack.c.l.b16 %v3386
      %v3710 = vunpack.c.h.b16 %v3386
      %v3711 = vunpack.c.l.b16 %v3387
      %v3712 = vunpack.c.h.b16 %v3387
      %v3713 = vunpack.c.l.b16 %v3388
      %v3714 = vunpack.c.h.b16 %v3388
      %v3715 = vunpack.c.l.b16 %v3389
      %v3716 = vunpack.c.h.b16 %v3389
      %v3717 = vunpack.c.l.b16 %v3390
      %v3718 = vunpack.c.h.b16 %v3390
      %v3719 = vunpack.c.l.b16 %v3391
      %v3720 = vunpack.c.h.b16 %v3391
      %v3721 = vunpack.c.l.b16 %v3392
      %v3722 = vunpack.c.h.b16 %v3392
      %v3723 = vunpack.c.l.b16 %v3393
      %v3724 = vunpack.c.h.b16 %v3393
      %v3725 = vunpack.c.l.b16 %v3394
      %v3726 = vunpack.c.h.b16 %v3394
      %v3727 = vunpack.c.l.b16 %v3395
      %v3728 = vunpack.c.h.b16 %v3395
      %v3729 = vunpack.c.l.b16 %v3396
      %v3730 = vunpack.c.h.b16 %v3396
      %v3731 = vunpack.c.l.b16 %v3397
      %v3732 = vunpack.c.h.b16 %v3397
      %v3733 = vunpack.c.l.b16 %v3398
      %v3734 = vunpack.c.h.b16 %v3398
      %v3735 = vunpack.c.l.b16 %v3399
      %v3736 = vunpack.c.h.b16 %v3399
      %v3737 = vunpack.c.l.b16 %v3400
      %v3738 = vunpack.c.h.b16 %v3400
      %v3739 = vunpack.c.l.b16 %v3401
      %v3740 = vunpack.c.h.b16 %v3401
      %v3741 = vunpack.c.l.b16 %v3402
      %v3742 = vunpack.c.h.b16 %v3402
      %v3743 = vunpack.c.l.b16 %v3403
      %v3744 = vunpack.c.h.b16 %v3403
      %v3745 = vunpack.c.l.b16 %v3404
      %v3746 = vunpack.c.h.b16 %v3404
      %v3747 = vunpack.c.l.b16 %v3405
      %v3748 = vunpack.c.h.b16 %v3405
      %v3749 = vunpack.c.l.b16 %v3406
      %v3750 = vunpack.c.h.b16 %v3406
      %v3751 = vunpack.c.l.b16 %v3407
      %v3752 = vunpack.c.h.b16 %v3407
      %v3753 = vunpack.c.l.b16 %v3408
      %v3754 = vunpack.c.h.b16 %v3408
      %v3755 = vunpack.c.l.b16 %v3409
      %v3756 = vunpack.c.h.b16 %v3409
      %v3757 = vunpack.c.l.b16 %v3410
      %v3758 = vunpack.c.h.b16 %v3410
      %v3759 = vunpack.c.l.b16 %v3411
      %v3760 = vunpack.c.h.b16 %v3411
      %v3761 = vunpack.c.l.b16 %v3412
      %v3762 = vunpack.c.h.b16 %v3412
      %v3763 = vunpack.c.l.b16 %v3413
      %v3764 = vunpack.c.h.b16 %v3413
      %v3765 = vunpack.c.l.b16 %v3414
      %v3766 = vunpack.c.h.b16 %v3414
      %v3767 = vunpack.c.l.b16 %v3415
      %v3768 = vunpack.c.h.b16 %v3415
      %v3769 = vunpack.c.l.b16 %v3416
      %v3770 = vunpack.c.h.b16 %v3416
      %v3771 = vunpack.c.l.b16 %v3417
      %v3772 = vunpack.c.h.b16 %v3417
      %v3773 = vunpack.c.l.b16 %v3418
      %v3774 = vunpack.c.h.b16 %v3418
      %v3775 = vunpack.c.l.b16 %v3419
      %v3776 = vunpack.c.h.b16 %v3419
      %v3777 = vunpack.c.l.b16 %v3420
      %v3778 = vunpack.c.h.b16 %v3420
      %v3779 = vunpack.c.l.b16 %v3421
      %v3780 = vunpack.c.h.b16 %v3421
      %v3781 = vunpack.c.l.b16 %v3422
      %v3782 = vunpack.c.h.b16 %v3422
      %v3783 = vunpack.c.l.b16 %v3423
      %v3784 = vunpack.c.h.b16 %v3423
      %v3785 = vunpack.c.l.b16 %v3424
      %v3786 = vunpack.c.h.b16 %v3424
      %v3787 = vunpack.c.l.b16 %v3425
      %v3788 = vunpack.c.h.b16 %v3425
      %v3789 = vunpack.c.l.b16 %v3426
      %v3790 = vunpack.c.h.b16 %v3426
      %v3791 = vunpack.c.l.b16 %v3427
      %v3792 = vunpack.c.h.b16 %v3427
      %v3793 = vunpack.c.l.b16 %v3428
      %v3794 = vunpack.c.h.b16 %v3428
      %v3795 = vunpack.c.l.b16 %v3429
      %v3796 = vunpack.c.h.b16 %v3429
      %v3797 = vunpack.c.l.b16 %v3430
      %v3798 = vunpack.c.h.b16 %v3430
      %v3799 = vunpack.c.l.b16 %v3431
      %v3800 = vunpack.c.h.b16 %v3431
      %v3801 = vunpack.c.l.b16 %v3432
      %v3802 = vunpack.c.h.b16 %v3432
      %v3803 = vunpack.c.l.b16 %v3433
      %v3804 = vunpack.c.h.b16 %v3433
      %v3805 = vunpack.c.l.b16 %v3434
      %v3806 = vunpack.c.h.b16 %v3434
      %v3807 = vunpack.c.l.b16 %v3435
      %v3808 = vunpack.c.h.b16 %v3435
      %v3809 = vunpack.c.l.b16 %v3436
      %v3810 = vunpack.c.h.b16 %v3436
      %v3811 = vunpack.c.l.b16 %v3437
      %v3812 = vunpack.c.h.b16 %v3437
      %v3813 = vunpack.c.l.b16 %v3438
      %v3814 = vunpack.c.h.b16 %v3438
      %v3815 = vunpack.c.l.b16 %v3439
      %v3816 = vunpack.c.h.b16 %v3439
      %v3817 = vunpack.c.l.b16 %v3440
      %v3818 = vunpack.c.h.b16 %v3440
      %v3819 = vunpack.c.l.b16 %v3441
      %v3820 = vunpack.c.h.b16 %v3441
      %v3821 = vunpack.c.l.b16 %v3442
      %v3822 = vunpack.c.h.b16 %v3442
      %v3823 = vunpack.c.l.b16 %v3443
      %v3824 = vunpack.c.h.b16 %v3443
      %v3825 = vunpack.c.l.b16 %v3444
      %v3826 = vunpack.c.h.b16 %v3444
      %v3827 = vunpack.c.l.b16 %v3445
      %v3828 = vunpack.c.h.b16 %v3445
      %v3829 = vunpack.c.l.b16 %v3446
      %v3830 = vunpack.c.h.b16 %v3446
      %v3831 = vunpack.c.l.b16 %v3447
      %v3832 = vunpack.c.h.b16 %v3447
      %v3833 = vunpack.c.l.b16 %v3448
      %v3834 = vunpack.c.h.b16 %v3448
      %v3835 = vunpack.c.l.b16 %v3449
      %v3836 = vunpack.c.h.b16 %v3449
      %v3837 = vunpack.c.l.b16 %v3450
      %v3838 = vunpack.c.h.b16 %v3450
      %v3839 = vunpack.c.l.b16 %v3451
      %v3840 = vunpack.c.h.b16 %v3451
      %v3841 = vunpack.c.l.b16 %v3452
      %v3842 = vunpack.c.h.b16 %v3452
      %v3843 = vunpack.c.l.b16 %v3453
      %v3844 = vunpack.c.h.b16 %v3453
      %v3845 = vunpack.c.l.b16 %v3454
      %v3846 = vunpack.c.h.b16 %v3454
      %v3847 = vunpack.c.l.b16 %v3455
      %v3848 = vunpack.c.h.b16 %v3455
      %v3849 = vunpack.c.l.b16 %v3456
      %v3850 = vunpack.c.h.b16 %v3456
      %v3851 = vunpack.c.l.b16 %v3457
      %v3852 = vunpack.c.h.b16 %v3457
      %v3853 = vunpack.c.l.b16 %v3458
      %v3854 = vunpack.c.h.b16 %v3458
      %v3855 = vunpack.c.l.b16 %v3459
      %v3856 = vunpack.c.h.b16 %v3459
      %v3857 = vunpack.c.l.b16 %v3460
      %v3858 = vunpack.c.h.b16 %v3460
      %v3859 = vunpack.c.l.b16 %v3461
      %v3860 = vunpack.c.h.b16 %v3461
      %v3861 = vunpack.c.l.b16 %v3462
      %v3862 = vunpack.c.h.b16 %v3462
      %v3863 = vunpack.c.l.b16 %v3463
      %v3864 = vunpack.c.h.b16 %v3463
      %v3865 = vunpack.c.l.b16 %v3464
      %v3866 = vunpack.c.h.b16 %v3464
      %v3867 = vunpack.c.l.b16 %v3465
      %v3868 = vunpack.c.h.b16 %v3465
      %v3869 = vpack.c.b16 %v3621, %v3613
      %v3870 = vpack.c.b16 %v3622, %v3614
      %v3871 = vpack.c.b16 %v3623, %v3615
      %v3872 = vpack.c.b16 %v3624, %v3616
      %v3873 = vpack.c.b16 %v3625, %v3617
      %v3874 = vpack.c.b16 %v3626, %v3618
      %v3875 = vpack.c.b16 %v3627, %v3619
      %v3876 = vpack.c.b16 %v3628, %v3620
      %v3877 = vpack.c.b16 %v3637, %v3629
      %v3878 = vpack.c.b16 %v3638, %v3630
      %v3879 = vpack.c.b16 %v3639, %v3631
      %v3880 = vpack.c.b16 %v3640, %v3632
      %v3881 = vpack.c.b16 %v3641, %v3633
      %v3882 = vpack.c.b16 %v3642, %v3634
      %v3883 = vpack.c.b16 %v3643, %v3635
      %v3884 = vpack.c.b16 %v3644, %v3636
      %v3885 = vpack.c.b16 %v3653, %v3645
      %v3886 = vpack.c.b16 %v3654, %v3646
      %v3887 = vpack.c.b16 %v3655, %v3647
      %v3888 = vpack.c.b16 %v3656, %v3648
      %v3889 = vpack.c.b16 %v3657, %v3649
      %v3890 = vpack.c.b16 %v3658, %v3650
      %v3891 = vpack.c.b16 %v3659, %v3651
      %v3892 = vpack.c.b16 %v3660, %v3652
      %v3893 = vpack.c.b16 %v3669, %v3661
      %v3894 = vpack.c.b16 %v3670, %v3662
      %v3895 = vpack.c.b16 %v3671, %v3663
      %v3896 = vpack.c.b16 %v3672, %v3664
      %v3897 = vpack.c.b16 %v3673, %v3665
      %v3898 = vpack.c.b16 %v3674, %v3666
      %v3899 = vpack.c.b16 %v3675, %v3667
      %v3900 = vpack.c.b16 %v3676, %v3668
      %v3901 = vpack.c.b16 %v3685, %v3677
      %v3902 = vpack.c.b16 %v3686, %v3678
      %v3903 = vpack.c.b16 %v3687, %v3679
      %v3904 = vpack.c.b16 %v3688, %v3680
      %v3905 = vpack.c.b16 %v3689, %v3681
      %v3906 = vpack.c.b16 %v3690, %v3682
      %v3907 = vpack.c.b16 %v3691, %v3683
      %v3908 = vpack.c.b16 %v3692, %v3684
      %v3909 = vpack.c.b16 %v3701, %v3693
      %v3910 = vpack.c.b16 %v3702, %v3694
      %v3911 = vpack.c.b16 %v3703, %v3695
      %v3912 = vpack.c.b16 %v3704, %v3696
      %v3913 = vpack.c.b16 %v3705, %v3697
      %v3914 = vpack.c.b16 %v3706, %v3698
      %v3915 = vpack.c.b16 %v3707, %v3699
      %v3916 = vpack.c.b16 %v3708, %v3700
      %v3917 = vpack.c.b16 %v3717, %v3709
      %v3918 = vpack.c.b16 %v3718, %v3710
      %v3919 = vpack.c.b16 %v3719, %v3711
      %v3920 = vpack.c.b16 %v3720, %v3712
      %v3921 = vpack.c.b16 %v3721, %v3713
      %v3922 = vpack.c.b16 %v3722, %v3714
      %v3923 = vpack.c.b16 %v3723, %v3715
      %v3924 = vpack.c.b16 %v3724, %v3716
      %v3925 = vpack.c.b16 %v3733, %v3725
      %v3926 = vpack.c.b16 %v3734, %v3726
      %v3927 = vpack.c.b16 %v3735, %v3727
      %v3928 = vpack.c.b16 %v3736, %v3728
      %v3929 = vpack.c.b16 %v3737, %v3729
      %v3930 = vpack.c.b16 %v3738, %v3730
      %v3931 = vpack.c.b16 %v3739, %v3731
      %v3932 = vpack.c.b16 %v3740, %v3732
      %v3933 = vpack.c.b16 %v3749, %v3741
      %v3934 = vpack.c.b16 %v3750, %v3742
      %v3935 = vpack.c.b16 %v3751, %v3743
      %v3936 = vpack.c.b16 %v3752, %v3744
      %v3937 = vpack.c.b16 %v3753, %v3745
      %v3938 = vpack.c.b16 %v3754, %v3746
      %v3939 = vpack.c.b16 %v3755, %v3747
      %v3940 = vpack.c.b16 %v3756, %v3748
      %v3941 = vpack.c.b16 %v3765, %v3757
      %v3942 = vpack.c.b16 %v3766, %v3758
      %v3943 = vpack.c.b16 %v3767, %v3759
      %v3944 = vpack.c.b16 %v3768, %v3760
      %v3945 = vpack.c.b16 %v3769, %v3761
      %v3946 = vpack.c.b16 %v3770, %v3762
      %v3947 = vpack.c.b16 %v3771, %v3763
      %v3948 = vpack.c.b16 %v3772, %v3764
      %v3949 = vpack.c.b16 %v3781, %v3773
      %v3950 = vpack.c.b16 %v3782, %v3774
      %v3951 = vpack.c.b16 %v3783, %v3775
      %v3952 = vpack.c.b16 %v3784, %v3776
      %v3953 = vpack.c.b16 %v3785, %v3777
      %v3954 = vpack.c.b16 %v3786, %v3778
      %v3955 = vpack.c.b16 %v3787, %v3779
      %v3956 = vpack.c.b16 %v3788, %v3780
      %v3957 = vpack.c.b16 %v3797, %v3789
      %v3958 = vpack.c.b16 %v3798, %v3790
      %v3959 = vpack.c.b16 %v3799, %v3791
      %v3960 = vpack.c.b16 %v3800, %v3792
      %v3961 = vpack.c.b16 %v3801, %v3793
      %v3962 = vpack.c.b16 %v3802, %v3794
      %v3963 = vpack.c.b16 %v3803, %v3795
      %v3964 = vpack.c.b16 %v3804, %v3796
      %v3965 = vpack.c.b16 %v3813, %v3805
      %v3966 = vpack.c.b16 %v3814, %v3806
      %v3967 = vpack.c.b16 %v3815, %v3807
      %v3968 = vpack.c.b16 %v3816, %v3808
      %v3969 = vpack.c.b16 %v3817, %v3809
      %v3970 = vpack.c.b16 %v3818, %v3810
      %v3971 = vpack.c.b16 %v3819, %v3811
      %v3972 = vpack.c.b16 %v3820, %v3812
      %v3973 = vpack.c.b16 %v3829, %v3821
      %v3974 = vpack.c.b16 %v3830, %v3822
      %v3975 = vpack.c.b16 %v3831, %v3823
      %v3976 = vpack.c.b16 %v3832, %v3824
      %v3977 = vpack.c.b16 %v3833, %v3825
      %v3978 = vpack.c.b16 %v3834, %v3826
      %v3979 = vpack.c.b16 %v3835, %v3827
      %v3980 = vpack.c.b16 %v3836, %v3828
      %v3981 = vpack.c.b16 %v3845, %v3837
      %v3982 = vpack.c.b16 %v3846, %v3838
      %v3983 = vpack.c.b16 %v3847, %v3839
      %v3984 = vpack.c.b16 %v3848, %v3840
      %v3985 = vpack.c.b16 %v3849, %v3841
      %v3986 = vpack.c.b16 %v3850, %v3842
      %v3987 = vpack.c.b16 %v3851, %v3843
      %v3988 = vpack.c.b16 %v3852, %v3844
      %v3989 = vpack.c.b16 %v3861, %v3853
      %v3990 = vpack.c.b16 %v3862, %v3854
      %v3991 = vpack.c.b16 %v3863, %v3855
      %v3992 = vpack.c.b16 %v3864, %v3856
      %v3993 = vpack.c.b16 %v3865, %v3857
      %v3994 = vpack.c.b16 %v3866, %v3858
      %v3995 = vpack.c.b16 %v3867, %v3859
      %v3996 = vpack.c.b16 %v3868, %v3860
      %4125 = vmatprep.subr.bf16.mxu0 %v3870
      %4126 = vmatpush1.bf16.msra.mxu0 %v3869
      %4127 = vmatprep.subr.bf16.mxu0 %v3878
      %4128 = vmatpush1.bf16.msra.mxu0 %v3877
      %4129 = vmatprep.subr.bf16.mxu0 %v3886
      %4130 = vmatpush1.bf16.msra.mxu0 %v3885
      %4131 = vmatprep.subr.bf16.mxu0 %v3894
      %4132 = vmatpush1.bf16.msra.mxu0 %v3893
      %4133 = vmatprep.subr.bf16.mxu0 %v3902
      %4134 = vmatpush1.bf16.msra.mxu0 %v3901
      %4135 = vmatprep.subr.bf16.mxu0 %v3910
      %4136 = vmatpush1.bf16.msra.mxu0 %v3909
      %4137 = vmatprep.subr.bf16.mxu0 %v3918
      %4138 = vmatpush1.bf16.msra.mxu0 %v3917
      %4139 = vmatprep.subr.bf16.mxu0 %v3926
      %4140 = vmatpush1.bf16.msra.mxu0 %v3925
      %4141 = vmatprep.subr.bf16.mxu0 %v3934
      %4142 = vmatpush1.bf16.msra.mxu0 %v3933
      %4143 = vmatprep.subr.bf16.mxu0 %v3942
      %4144 = vmatpush1.bf16.msra.mxu0 %v3941
      %4145 = vmatprep.subr.bf16.mxu0 %v3950
      %4146 = vmatpush1.bf16.msra.mxu0 %v3949
      %4147 = vmatprep.subr.bf16.mxu0 %v3958
      %4148 = vmatpush1.bf16.msra.mxu0 %v3957
      %4149 = vmatprep.subr.bf16.mxu0 %v3966
      %4150 = vmatpush1.bf16.msra.mxu0 %v3965
      %4151 = vmatprep.subr.bf16.mxu0 %v3974
      %4152 = vmatpush1.bf16.msra.mxu0 %v3973
      %4153 = vmatprep.subr.bf16.mxu0 %v3982
      %4154 = vmatpush1.bf16.msra.mxu0 %v3981
      %4155 = vmatprep.subr.bf16.mxu0 %v3990
      %4156 = vmatpush1.bf16.msra.mxu0 %v3989
      %4157 = vmatprep.mubr.bf16.mxu0 %v3480
      %4158 = vmatmul.mubr.bf16.gmra.mrb[0].mxu0 %v3473
      %v4159 = vpop.f32.mrb[0].mxu0
      %v4160 = vadd.f32 0.0, %v4159
      %v4161 = vpop.f32.mrb[0].mxu0
      %v4162 = vadd.f32 0.0, %v4161
      %v4163 = vpop.f32.mrb[0].mxu0
      %v4164 = vadd.f32 0.0, %v4163
      %v4165 = vpop.f32.mrb[0].mxu0
      %v4166 = vadd.f32 0.0, %v4165
      %4167 = vmatprep.mubr.bf16.mxu0 %v3479
      %4168 = vmatmul.mubr.bf16.gmra.mrb[0].mxu0 %v3472
      %v4169 = vpop.f32.mrb[0].mxu0
      %v4170 = vadd.f32 0.0, %v4169
      %v4171 = vpop.f32.mrb[0].mxu0
      %v4172 = vadd.f32 0.0, %v4171
      %v4173 = vpop.f32.mrb[0].mxu0
      %v4174 = vpop.f32.mrb[0].mxu0
      %4175 = vdwg.mxu0
      %4176 = vmatprep.subr.bf16.mxu0 %v3872
      %4177 = vmatpush1.bf16.msra.mxu0 %v3871
      %4178 = vmatprep.subr.bf16.mxu0 %v3880
      %4179 = vmatpush1.bf16.msra.mxu0 %v3879
      %4180 = vmatprep.subr.bf16.mxu0 %v3888
      %4181 = vmatpush1.bf16.msra.mxu0 %v3887
      %4182 = vmatprep.subr.bf16.mxu0 %v3896
      %4183 = vmatpush1.bf16.msra.mxu0 %v3895
      %4184 = vmatprep.subr.bf16.mxu0 %v3904
      %4185 = vmatpush1.bf16.msra.mxu0 %v3903
      %4186 = vmatprep.subr.bf16.mxu0 %v3912
      %4187 = vmatpush1.bf16.msra.mxu0 %v3911
      %4188 = vmatprep.subr.bf16.mxu0 %v3920
      %4189 = vmatpush1.bf16.msra.mxu0 %v3919
      %4190 = vmatprep.subr.bf16.mxu0 %v3928
      %4191 = vmatpush1.bf16.msra.mxu0 %v3927
      %4192 = vmatprep.subr.bf16.mxu0 %v3936
      %4193 = vmatpush1.bf16.msra.mxu0 %v3935
      %4194 = vmatprep.subr.bf16.mxu0 %v3944
      %4195 = vmatpush1.bf16.msra.mxu0 %v3943
      %4196 = vmatprep.subr.bf16.mxu0 %v3952
      %4197 = vmatpush1.bf16.msra.mxu0 %v3951
      %4198 = vmatprep.subr.bf16.mxu0 %v3960
      %4199 = vmatpush1.bf16.msra.mxu0 %v3959
      %4200 = vmatprep.subr.bf16.mxu0 %v3968
      %4201 = vmatpush1.bf16.msra.mxu0 %v3967
      %4202 = vmatprep.subr.bf16.mxu0 %v3976
      %4203 = vmatpush1.bf16.msra.mxu0 %v3975
      %4204 = vmatprep.subr.bf16.mxu0 %v3984
      %4205 = vmatpush1.bf16.msra.mxu0 %v3983
      %4206 = vmatprep.subr.bf16.mxu0 %v3992
      %4207 = vmatpush1.bf16.msra.mxu0 %v3991
      %4208 = vmatprep.mubr.bf16.mxu0 %v3480
      %4209 = vmatmul.mubr.bf16.gmra.mrb[0].mxu0 %v3473
      %v4210 = vpop.f32.mrb[0].mxu0
      %v4211 = vadd.f32 0.0, %v4210
      %v4212 = vpop.f32.mrb[0].mxu0
      %v4213 = vadd.f32 0.0, %v4212
      %v4214 = vpop.f32.mrb[0].mxu0
      %v4215 = vadd.f32 0.0, %v4214
      %v4216 = vpop.f32.mrb[0].mxu0
      %v4217 = vadd.f32 0.0, %v4216
      %4218 = vmatprep.mubr.bf16.mxu0 %v3479
      %4219 = vmatmul.mubr.bf16.gmra.mrb[0].mxu0 %v3472
      %v4220 = vpop.f32.mrb[0].mxu0
      %v4221 = vadd.f32 0.0, %v4220
      %v4222 = vpop.f32.mrb[0].mxu0
      %v4223 = vadd.f32 0.0, %v4222
      %v4224 = vpop.f32.mrb[0].mxu0
      %v4225 = vpop.f32.mrb[0].mxu0
      %4226 = vdwg.mxu0
      %4227 = vmatprep.subr.bf16.mxu0 %v3874
      %4228 = vmatpush1.bf16.msra.mxu0 %v3873
      %4229 = vmatprep.subr.bf16.mxu0 %v3882
      %4230 = vmatpush1.bf16.msra.mxu0 %v3881
      %4231 = vmatprep.subr.bf16.mxu0 %v3890
      %4232 = vmatpush1.bf16.msra.mxu0 %v3889
      %4233 = vmatprep.subr.bf16.mxu0 %v3898
      %4234 = vmatpush1.bf16.msra.mxu0 %v3897
      %4235 = vmatprep.subr.bf16.mxu0 %v3906
      %4236 = vmatpush1.bf16.msra.mxu0 %v3905
      %4237 = vmatprep.subr.bf16.mxu0 %v3914
      %4238 = vmatpush1.bf16.msra.mxu0 %v3913
      %4239 = vmatprep.subr.bf16.mxu0 %v3922
      %4240 = vmatpush1.bf16.msra.mxu0 %v3921
      %4241 = vmatprep.subr.bf16.mxu0 %v3930
      %4242 = vmatpush1.bf16.msra.mxu0 %v3929
      %4243 = vmatprep.subr.bf16.mxu0 %v3938
      %4244 = vmatpush1.bf16.msra.mxu0 %v3937
      %4245 = vmatprep.subr.bf16.mxu0 %v3946
      %4246 = vmatpush1.bf16.msra.mxu0 %v3945
      %4247 = vmatprep.subr.bf16.mxu0 %v3954
      %4248 = vmatpush1.bf16.msra.mxu0 %v3953
      %4249 = vmatprep.subr.bf16.mxu0 %v3962
      %4250 = vmatpush1.bf16.msra.mxu0 %v3961
      %4251 = vmatprep.subr.bf16.mxu0 %v3970
      %4252 = vmatpush1.bf16.msra.mxu0 %v3969
      %4253 = vmatprep.subr.bf16.mxu0 %v3978
      %4254 = vmatpush1.bf16.msra.mxu0 %v3977
      %4255 = vmatprep.subr.bf16.mxu0 %v3986
      %4256 = vmatpush1.bf16.msra.mxu0 %v3985
      %4257 = vmatprep.subr.bf16.mxu0 %v3994
      %4258 = vmatpush1.bf16.msra.mxu0 %v3993
      %4259 = vmatprep.mubr.bf16.mxu0 %v3480
      %4260 = vmatmul.mubr.bf16.gmra.mrb[0].mxu0 %v3473
      %v4261 = vpop.f32.mrb[0].mxu0
      %v4262 = vadd.f32 0.0, %v4261
      %v4263 = vpop.f32.mrb[0].mxu0
      %v4264 = vadd.f32 0.0, %v4263
      %v4265 = vpop.f32.mrb[0].mxu0
      %v4266 = vadd.f32 0.0, %v4265
      %v4267 = vpop.f32.mrb[0].mxu0
      %v4268 = vadd.f32 0.0, %v4267
      %4269 = vmatprep.mubr.bf16.mxu0 %v3479
      %4270 = vmatmul.mubr.bf16.gmra.mrb[0].mxu0 %v3472
      %v4271 = vpop.f32.mrb[0].mxu0
      %v4272 = vadd.f32 0.0, %v4271
      %v4273 = vpop.f32.mrb[0].mxu0
      %v4274 = vadd.f32 0.0, %v4273
      %v4275 = vpop.f32.mrb[0].mxu0
      %v4276 = vpop.f32.mrb[0].mxu0
      %4277 = vdwg.mxu0
      %4278 = vmatprep.subr.bf16.mxu0 %v3876
      %4279 = vmatpush1.bf16.msra.mxu0 %v3875
      %4280 = vmatprep.subr.bf16.mxu0 %v3884
      %4281 = vmatpush1.bf16.msra.mxu0 %v3883
      %4282 = vmatprep.subr.bf16.mxu0 %v3892
      %4283 = vmatpush1.bf16.msra.mxu0 %v3891
      %4284 = vmatprep.subr.bf16.mxu0 %v3900
      %4285 = vmatpush1.bf16.msra.mxu0 %v3899
      %4286 = vmatprep.subr.bf16.mxu0 %v3908
      %4287 = vmatpush1.bf16.msra.mxu0 %v3907
      %4288 = vmatprep.subr.bf16.mxu0 %v3916
      %4289 = vmatpush1.bf16.msra.mxu0 %v3915
      %4290 = vmatprep.subr.bf16.mxu0 %v3924
      %4291 = vmatpush1.bf16.msra.mxu0 %v3923
      %4292 = vmatprep.subr.bf16.mxu0 %v3932
      %4293 = vmatpush1.bf16.msra.mxu0 %v3931
      %4294 = vmatprep.subr.bf16.mxu0 %v3940
      %4295 = vmatpush1.bf16.msra.mxu0 %v3939
      %4296 = vmatprep.subr.bf16.mxu0 %v3948
      %4297 = vmatpush1.bf16.msra.mxu0 %v3947
      %4298 = vmatprep.subr.bf16.mxu0 %v3956
      %4299 = vmatpush1.bf16.msra.mxu0 %v3955
      %4300 = vmatprep.subr.bf16.mxu0 %v3964
      %4301 = vmatpush1.bf16.msra.mxu0 %v3963
      %4302 = vmatprep.subr.bf16.mxu0 %v3972
      %4303 = vmatpush1.bf16.msra.mxu0 %v3971
      %4304 = vmatprep.subr.bf16.mxu0 %v3980
      %4305 = vmatpush1.bf16.msra.mxu0 %v3979
      %4306 = vmatprep.subr.bf16.mxu0 %v3988
      %4307 = vmatpush1.bf16.msra.mxu0 %v3987
      %4308 = vmatprep.subr.bf16.mxu0 %v3996
      %4309 = vmatpush1.bf16.msra.mxu0 %v3995
      %4310 = vmatprep.mubr.bf16.mxu0 %v3480
      %4311 = vmatmul.mubr.bf16.gmra.mrb[0].mxu0 %v3473
      %v4312 = vpop.f32.mrb[0].mxu0
      %v4313 = vadd.f32 0.0, %v4312
      %v4314 = vpop.f32.mrb[0].mxu0
      %v4315 = vadd.f32 0.0, %v4314
      %v4316 = vpop.f32.mrb[0].mxu0
      %v4317 = vadd.f32 0.0, %v4316
      %v4318 = vpop.f32.mrb[0].mxu0
      %v4319 = vadd.f32 0.0, %v4318
      %4320 = vmatprep.mubr.bf16.mxu0 %v3479
      %4321 = vmatmul.mubr.bf16.gmra.mrb[0].mxu0 %v3472
      %v4322 = vpop.f32.mrb[0].mxu0
      %v4323 = vadd.f32 0.0, %v4322
      %v4324 = vpop.f32.mrb[0].mxu0
      %v4325 = vadd.f32 0.0, %v4324
      %v4326 = vpop.f32.mrb[0].mxu0
      %v4327 = vpop.f32.mrb[0].mxu0
      %4328 = vdwg.mxu0
      %v4329 = vadd.f32 %v3314, %v4160
      %v4330 = vadd.f32 %v3315, %v4162
      %v4331 = vadd.f32 %v3316, %v4211
      %v4332 = vadd.f32 %v3317, %v4213
      %v4333 = vadd.f32 %v3318, %v4262
      %v4334 = vadd.f32 %v3319, %v4264
      %v4335 = vadd.f32 %v3320, %v4313
      %v4336 = vadd.f32 %v3321, %v4315
      %v4337 = vadd.f32 %v3322, %v4164
      %v4338 = vadd.f32 %v3323, %v4166
      %v4339 = vadd.f32 %v3324, %v4215
      %v4340 = vadd.f32 %v3325, %v4217
      %v4341 = vadd.f32 %v3326, %v4266
      %v4342 = vadd.f32 %v3327, %v4268
      %v4343 = vadd.f32 %v3328, %v4317
      %v4344 = vadd.f32 %v3329, %v4319
      %v4345 = vadd.f32 %v3330, %v4170
      %v4346 = vadd.f32 %v3331, %v4172
      %v4347 = vadd.f32 %v3332, %v4221
      %v4348 = vadd.f32 %v3333, %v4223
      %v4349 = vadd.f32 %v3334, %v4272
      %v4350 = vadd.f32 %v3335, %v4274
      %v4351 = vadd.f32 %v3336, %v4323
      %v4352 = vadd.f32 %v3337, %v4325
      %v4353 = vlaneseq
      %v4354 = vshrl.u32 %v4353, 7
      %v4355 = vadd.s32 %v4354, 8
      %v4356 = vadd.s32 %v4354, 16
      %s4357 = smul.u32 %s19, 24
      %v4358 = vstv %s4357
      %v4359 = vadd.s32 %v4354, %v4358
      %v4360 = vadd.s32 %v4355, %v4358
      %v4361 = vadd.s32 %v4356, %v4358
      %vm4362 = vcmp.lt.s32.totalorder %v4359, 17
      %vm4363 = vcmp.lt.s32.totalorder %v4360, 17
      %vm4364 = vcmp.lt.s32.totalorder %v4361, 17
      %v4365 = vsel %vm4362, 1, 0
      %v4366 = vsel %vm4363, 1, 0
      %v4367 = vsel %vm4364, 1, 0
      %vm4368 = vcmp.eq.s32.totalorder %v4365, 1
      %vm4369 = vcmp.eq.s32.totalorder %v4366, 1
      %vm4370 = vcmp.eq.s32.totalorder %v4367, 1
      %v4371 = vsel %vm4368, %v4329, 0.0
      %v4372 = vsel %vm4368, %v4330, 0.0
      %v4373 = vsel %vm4368, %v4331, 0.0
      %v4374 = vsel %vm4368, %v4332, 0.0
      %v4375 = vsel %vm4368, %v4333, 0.0
      %v4376 = vsel %vm4368, %v4334, 0.0
      %v4377 = vsel %vm4368, %v4335, 0.0
      %v4378 = vsel %vm4368, %v4336, 0.0
      %v4379 = vsel %vm4369, %v4337, 0.0
      %v4380 = vsel %vm4369, %v4338, 0.0
      %v4381 = vsel %vm4369, %v4339, 0.0
      %v4382 = vsel %vm4369, %v4340, 0.0
      %v4383 = vsel %vm4369, %v4341, 0.0
      %v4384 = vsel %vm4369, %v4342, 0.0
      %v4385 = vsel %vm4369, %v4343, 0.0
      %v4386 = vsel %vm4369, %v4344, 0.0
      %v4387 = vsel %vm4370, %v4345, 0.0
      %v4388 = vsel %vm4370, %v4346, 0.0
      %v4389 = vsel %vm4370, %v4347, 0.0
      %v4390 = vsel %vm4370, %v4348, 0.0
      %v4391 = vsel %vm4370, %v4349, 0.0
      %v4392 = vsel %vm4370, %v4350, 0.0
      %v4393 = vsel %vm4370, %v4351, 0.0
      %v4394 = vsel %vm4370, %v4352, 0.0
      %vm4402 = vcmask 1040384
      %v4403 = vrot.slane 0.0, 7
      %v4404 = vrot.slane %v4373, 7
      %v4405 = vsel %vm4402, %v4403, %v4404
      %v4406 = vrot.slane %v4374, 7
      %v4407 = vsel %vm4402, %v4403, %v4406
      %v4408 = vrot.slane %v4381, 7
      %v4409 = vsel %vm4402, %v4404, %v4408
      %v4410 = vrot.slane %v4382, 7
      %v4411 = vsel %vm4402, %v4406, %v4410
      %v4412 = vrot.slane %v4389, 7
      %v4413 = vsel %vm4402, %v4408, %v4412
      %v4414 = vrot.slane %v4390, 7
      %v4415 = vsel %vm4402, %v4410, %v4414
      %v4416 = vsel %vm4402, %v4412, %v4403
      %v4417 = vsel %vm4402, %v4414, %v4403
      %v4426 = vadd.f32 %v4371, %v4405
      %v4427 = vadd.f32 %v4372, %v4407
      %v4428 = vadd.f32 %v4379, %v4409
      %v4429 = vadd.f32 %v4380, %v4411
      %v4430 = vadd.f32 %v4387, %v4413
      %v4431 = vadd.f32 %v4388, %v4415
      %v4432 = vadd.f32 %v4416, 0.0
      %v4433 = vadd.f32 %v4417, 0.0
      %vm4440 = vcmask 1041408
      %v4441 = vrot.slane 0.0, 6
      %v4442 = vrot.slane %v4375, 6
      %v4443 = vsel %vm4440, %v4441, %v4442
      %v4444 = vrot.slane %v4376, 6
      %v4445 = vsel %vm4440, %v4441, %v4444
      %v4446 = vrot.slane %v4383, 6
      %v4447 = vsel %vm4440, %v4442, %v4446
      %v4448 = vrot.slane %v4384, 6
      %v4449 = vsel %vm4440, %v4444, %v4448
      %v4450 = vrot.slane %v4391, 6
      %v4451 = vsel %vm4440, %v4446, %v4450
      %v4452 = vrot.slane %v4392, 6
      %v4453 = vsel %vm4440, %v4448, %v4452
      %v4454 = vsel %vm4440, %v4450, %v4441
      %v4455 = vsel %vm4440, %v4452, %v4441
      %v4464 = vadd.f32 %v4426, %v4443
      %v4465 = vadd.f32 %v4427, %v4445
      %v4466 = vadd.f32 %v4428, %v4447
      %v4467 = vadd.f32 %v4429, %v4449
      %v4468 = vadd.f32 %v4430, %v4451
      %v4469 = vadd.f32 %v4431, %v4453
      %v4470 = vadd.f32 %v4432, %v4454
      %v4471 = vadd.f32 %v4433, %v4455
      %vm4478 = vcmask 1042432
      %v4479 = vrot.slane 0.0, 5
      %v4480 = vrot.slane %v4377, 5
      %v4481 = vsel %vm4478, %v4479, %v4480
      %v4482 = vrot.slane %v4378, 5
      %v4483 = vsel %vm4478, %v4479, %v4482
      %v4484 = vrot.slane %v4385, 5
      %v4485 = vsel %vm4478, %v4480, %v4484
      %v4486 = vrot.slane %v4386, 5
      %v4487 = vsel %vm4478, %v4482, %v4486
      %v4488 = vrot.slane %v4393, 5
      %v4489 = vsel %vm4478, %v4484, %v4488
      %v4490 = vrot.slane %v4394, 5
      %v4491 = vsel %vm4478, %v4486, %v4490
      %v4492 = vsel %vm4478, %v4488, %v4479
      %v4493 = vsel %vm4478, %v4490, %v4479
      %v4502 = vadd.f32 %v4464, %v4481
      %v4503 = vadd.f32 %v4465, %v4483
      %v4504 = vadd.f32 %v4466, %v4485
      %v4505 = vadd.f32 %v4467, %v4487
      %v4506 = vadd.f32 %v4468, %v4489
      %v4507 = vadd.f32 %v4469, %v4491
      %v4508 = vadd.f32 %v4470, %v4492
      %v4509 = vadd.f32 %v4471, %v4493
      %v4510 = vld [vmem:[#allocation2] sm:$0xff]
      %v4511 = vld [vmem:[#allocation2 + $0x8] sm:$0xff]
      %v4512 = vld [vmem:[#allocation2 + $0x10] sm:$0xff]
      %v4513 = vld [vmem:[#allocation2 + $0x18] sm:$0xff]
      %v4514 = vld [vmem:[#allocation2 + $0x20] sm:$0xff]
      %v4515 = vld [vmem:[#allocation2 + $0x28] sm:$0xff]
      %v4516 = vld [vmem:[#allocation2 + $0x30] sm:$0xff]
      %v4517 = vld [vmem:[#allocation2 + $0x38] sm:$0xff]
      %v4518 = vadd.f32 %v4510, %v4502
      %v4519 = vadd.f32 %v4511, %v4503
      %v4520 = vadd.f32 %v4512, %v4504
      %v4521 = vadd.f32 %v4513, %v4505
      %v4522 = vadd.f32 %v4514, %v4506
      %v4523 = vadd.f32 %v4515, %v4507
      %v4524 = vadd.f32 %v4516, %v4508
      %v4525 = vadd.f32 %v4517, %v4509
      %4526 = vst [vmem:[#allocation2] sm:$0xff] %v4518
      %4527 = vst [vmem:[#allocation2 + $0x8] sm:$0xff] %v4519
      %4528 = vst [vmem:[#allocation2 + $0x10] sm:$0xff] %v4520
      %4529 = vst [vmem:[#allocation2 + $0x18] sm:$0xff] %v4521
      %4530 = vst [vmem:[#allocation2 + $0x20] sm:$0xff] %v4522
      %4531 = vst [vmem:[#allocation2 + $0x28] sm:$0xff] %v4523
      %4532 = vst [vmem:[#allocation2 + $0x30] sm:$0xff] %v4524
      %4533 = vst [vmem:[#allocation2 + $0x38] sm:$0xff] %v4525
      %v4534 = vld [vmem:[#allocation2] sm:$0xff]
      %v4535 = vld [vmem:[#allocation2 + $0x8] sm:$0xff]
      %v4536 = vld [vmem:[#allocation2 + $0x10] sm:$0xff]
      %v4537 = vld [vmem:[#allocation2 + $0x18] sm:$0xff]
      %v4538 = vld [vmem:[#allocation2 + $0x20] sm:$0xff]
      %v4539 = vld [vmem:[#allocation2 + $0x28] sm:$0xff]
      %4540 = vst [vmem:[%s306] sm:$0xff] %v4534
      %4541 = vst [vmem:[%s306 + $0x8] sm:$0xff] %v4535
      %4542 = vst [vmem:[%s306 + $0x10] sm:$0xff] %v4536
      %4543 = vst [vmem:[%s306 + $0x18] sm:$0xff] %v4537
      %4544 = vst [vmem:[%s306 + $0x20] sm:$0xff] %v4538
      %4545 = vst [vmem:[%s306 + $0x28] sm:$0xff] %v4539
      %s4546 = smul.u32 3, %s19
      %p4547 = scmp.lt.s32.totalorder %s18, 1
      %s4548 = scalar_select %p4547, %s18, 1
      %p4549 = scmp.lt.s32.totalorder %s4546, 2
      %s4550 = scalar_select %p4549, %s4546, 2
      %s4551 = smul.addr %s4550, 2
      %s4552 = smul.addr %s4548, 6
      %s4553 = sadd.s32 %s4551, %s4552
      %s4554 = smul.addr %s4553, 8
      %s4555 = scalar_lea.vmem %s3, %s4554
      // Predicated region
      $region41: #{_lambda_.1} parent=31 // pred_check
        %p4556 = pneg %p132
      $region42: #{_lambda_.1} parent=31 // pred_check_branch
        %4558 = sbr.rel (%p4556) target = $region44
      $region43: #{_lambda_.1} parent=31 // pred_region
        %s4559 = smul.u32 3, %s19
      $region44: #{_lambda_.1} parent=31 // pred_fallthru
        _
    $region32: #{_lambda_.1} parent=5 // pred_fallthru
      _
    %p4560 = scmp.le.s32.totalorder 2, %s9
    // Predicated region
    $region45: #{_lambda_.1} parent=5 // pred_check
      %p4561 = pneg %p4560
    $region46: #{_lambda_.1} parent=5 // pred_check_branch
      %4563 = sbr.rel (%p4561) target = $region48
    $region47: #{_lambda_.1} parent=5 // pred_region
      %s4564 = ssub.s32 %s9, 2
      // Predicated region
      $region49: #{_lambda_.1} parent=47 // pred_check
        %p4565 = pneg %p138
      $region50: #{_lambda_.1} parent=47 // pred_check_branch
        %4567 = sbr.rel (%p4565) target = $region52
      $region51: #{_lambda_.1} parent=47 // pred_region
        %s4568 = smul.u32 3, %s21
        %p4569 = scmp.lt.s32.totalorder %s20, 1
        %s4570 = scalar_select %p4569, %s20, 1
        %p4571 = scmp.lt.s32.totalorder %s4568, 2
        %s4572 = scalar_select %p4571, %s4568, 2
        %s4573 = smul.addr %s4572, 2
        %s4574 = smul.addr %s4570, 6
        %s4575 = sadd.s32 %s4573, %s4574
        %s4576 = smul.addr %s4575, 8
        %s4577 = scalar_lea.vmem %s3, %s4576
      $region52: #{_lambda_.1} parent=47 // pred_fallthru
        _
    $region48: #{_lambda_.1} parent=5 // pred_fallthru
      _
  $region6: #{_lambda_.1} parent=0 // loop_footer
    %s13 = sadd.s32 1, %s9
  $region7: #{_lambda_.1} parent=0 // loop_footer_branch
    %8 = sbr.rel target = $region3
  $region8: #{_lambda_.1} parent=0 // loop_exit
    _

</llo_original>
